<compile_context>
chip_gen: v5e
topology: v5e:2x2
jax: 0.10.0
libtpu: 0.0.40
codegen_flags: <defaults>
</compile_context>

<pallas_src>
import functools

import jax
import jax.numpy as jnp
from jax import lax
from jax.experimental import pallas as pl
from jax.experimental.pallas import tpu as pltpu

LANE = 128                      # pad Cout up to a multiple of this (lane-dense stores)
TARGET_ROWS = 512               # target output rows (TRH * Wo) per grid step
VMEM_LIMIT = 48 * 1024 * 1024   # scoped VMEM budget (headroom for v7x's 64 MiB)


def _round_up(x, m):
    return ((x + m - 1) // m) * m


# ---------------- Pallas kernel ----------------
#
# One grid step computes a (TRH, Wo, Cp) output tile of one image:
#   out = [ReLU]( sum_t x_tile[oy_t:oy_t+TRH, ox_t:ox_t+Wo, :] @ W_t + bias ) [+ res]
# `taps` is the static tuple of (oy, ox) offsets: 9 for a stride-1 3x3 conv, 4 for the
# space-to-depth form of a stride-2 3x3 conv.  Matmuls run on the MXU in bf16 with
# f32 accumulation; the epilogue runs in f32 on the VPU.

def _conv_taps_kernel(*refs, taps, relu, with_res):
    if with_res:
        x_ref, w_ref, b_ref, r_ref, o_ref = refs
    else:
        x_ref, w_ref, b_ref, o_ref = refs
        r_ref = None
    _, trh, wo, cp = o_ref.shape
    cy = x_ref.shape[-1]

    acc = jnp.zeros((trh * wo, cp), jnp.float32)
    for t, (oy, ox) in enumerate(taps):            # static unroll over taps
        xt = x_ref[0, oy:oy + trh, ox:ox + wo, :].reshape(trh * wo, cy)
        acc = acc + jnp.dot(xt, w_ref[t], preferred_element_type=jnp.float32)

    out = acc + b_ref[...]                         # (1, cp) broadcast, f32
    if relu:
        out = jnp.maximum(out, 0.0)
    if r_ref is not None:
        out = out + r_ref[0].reshape(trh * wo, cp)
    o_ref[...] = out.reshape(1, trh, wo, cp).astype(o_ref.dtype)


# ---------------- conv wrapper ----------------

def conv3x3_bn_act(x_nhwc, w_hwio, bias, *, scale=None, stride=1, relu=True,
                   residual=None):
    """3x3 conv (pad=1, stride in {1,2}) with BN folded into the weight via `scale`,
    plus bias, optional ReLU and optional residual add, fused in one Pallas kernel."""
    N, H, W, Cin = x_nhwc.shape
    Cout = w_hwio.shape[-1]
    Ho = (H + 2 - 3) // stride + 1
    Wo = (W + 2 - 3) // stride + 1
    Cp = _round_up(Cout, LANE)

    # ---- fold BN scale into the weight, pad Cout -> Cp (lane-dense), f32 bias ----
    w = w_hwio.astype(jnp.float32)
    if scale is not None:
        w = w * scale.reshape(1, 1, 1, Cout).astype(jnp.float32)
    w = jnp.pad(w, ((0, 0), (0, 0), (0, 0), (0, Cp - Cout)))
    b = jnp.pad(bias.astype(jnp.float32), (0, Cp - Cout)).reshape(1, Cp)

    # ---- prepare the activation (bf16): pad; stride 2 -> space-to-depth so the
    #      kernel only needs unit-stride slices with offsets in {0, 1} ----
    xb = x_nhwc.astype(jnp.bfloat16)
    xp = jnp.pad(xb, ((0, 0), (1, 1), (1, 1), (0, 0)))
    if stride == 1:
        y = xp
        wt = w.reshape(9, Cin, Cp)
        taps = tuple((dy, dx) for dy in range(3) for dx in range(3))
        max_o = 2
    elif stride == 2:
        ph, pw = (H + 2) % 2, (W + 2) % 2          # make padded dims even
        xp = jnp.pad(xp, ((0, 0), (0, ph), (0, pw), (0, 0)))
        Hp, Wp = H + 2 + ph, W + 2 + pw
        y = xp.reshape(N, Hp // 2, 2, Wp // 2, 2, Cin)
        y = y.transpose(0, 1, 3, 2, 4, 5).reshape(N, Hp // 2, Wp // 2, 4 * Cin)
        # stride-2 3x3 conv == stride-1 2x2 conv on the space-to-depth input
        w4 = jnp.zeros((2, 2, 2, 2, Cin, Cp), jnp.float32)
        for dy in range(3):
            for dx in range(3):
                oy, py = divmod(dy, 2)
                ox, px = divmod(dx, 2)
                w4 = w4.at[oy, ox, py, px].set(w[dy, dx])
        wt = w4.reshape(4, 4 * Cin, Cp)
        taps = ((0, 0), (0, 1), (1, 0), (1, 1))
        max_o = 1
    else:
        raise NotImplementedError("stride must be 1 or 2")

    Hy, Wy, Cy = y.shape[1], y.shape[2], y.shape[3]

    # ---- row tiling: ~TARGET_ROWS output rows per grid step, >= 2 parallel steps ----
    Wo_pad = _round_up(Wo, 8)                      # keep in-kernel reshapes layout-clean
    R = max(1, pl.cdiv(Ho * Wo, TARGET_ROWS))
    R = min(R, Ho)
    if N * R < 2:
        R = min(2, Ho)
    TRH = pl.cdiv(Ho, R)
    R = pl.cdiv(Ho, TRH)
    Ho_pad = R * TRH

    pad_h = max(0, Ho_pad + max_o - Hy)
    pad_w = max(0, Wo_pad + max_o - Wy)
    if pad_h or pad_w:
        y = jnp.pad(y, ((0, 0), (0, pad_h), (0, pad_w), (0, 0)))
    Wy = y.shape[2]

    # halo'd row tiles: (N*R, TRH + max_o, Wy, Cy)  (tiny duplication: halo rows only)
    if R == 1:
        yt = y
    else:
        yt = jnp.stack([y[:, r * TRH: r * TRH + TRH + max_o] for r in range(R)],
                       axis=1).reshape(N * R, TRH + max_o, Wy, Cy)
    NR = N * R

    in_specs = [
        pl.BlockSpec((1, TRH + max_o, Wy, Cy), lambda i: (i, 0, 0, 0)),
        pl.BlockSpec((len(taps), Cy, Cp), lambda i: (0, 0, 0)),
        pl.BlockSpec((1, Cp), lambda i: (0, 0)),
    ]
    args = [yt, wt.astype(jnp.bfloat16), b]
    if residual is not None:
        res = jnp.pad(residual.astype(jnp.float32),
                      ((0, 0), (0, Ho_pad - Ho), (0, Wo_pad - Wo), (0, Cp - Cout)))
        res = res.reshape(NR, TRH, Wo_pad, Cp)
        in_specs.append(pl.BlockSpec((1, TRH, Wo_pad, Cp), lambda i: (i, 0, 0, 0)))
        args.append(res)

    out = pl.pallas_call(
        functools.partial(_conv_taps_kernel, taps=taps, relu=relu,
                          with_res=residual is not None),
        out_shape=jax.ShapeDtypeStruct((NR, TRH, Wo_pad, Cp), jnp.float32),
        grid=(NR,),
        in_specs=in_specs,
        out_specs=pl.BlockSpec((1, TRH, Wo_pad, Cp), lambda i: (i, 0, 0, 0)),
        compiler_params=pltpu.CompilerParams(
            dimension_semantics=("parallel",),
            vmem_limit_bytes=VMEM_LIMIT,
        ),
    )(*args)

    return out.reshape(N, Ho_pad, Wo_pad, Cp)[:, :Ho, :Wo, :Cout]


# ---------------- parameter init (deterministic, synthetic) ----------------

def _fold_bn(gamma, beta, mean, var, eps=1e-5):
    s = gamma / jnp.sqrt(var + eps)
    return s, beta - mean * s


def _init_conv(key, cin, cout, std=0.1):
    return std * jax.random.normal(key, (3, 3, cin, cout), jnp.float32)  # HWIO


def _init_bn(key, c):
    k1, k2, k3, k4 = jax.random.split(key, 4)
    gamma = 1.0 + 0.1 * jax.random.normal(k1, (c,), jnp.float32)
    beta = 0.1 * jax.random.normal(k2, (c,), jnp.float32)
    mean = 0.1 * jax.random.normal(k3, (c,), jnp.float32)
    var = jnp.abs(jax.random.normal(k4, (c,), jnp.float32)) + 0.5
    return gamma, beta, mean, var


def init_block_layer(key, in_ch, out_ch, stride):
    Hc = out_ch // 4
    keys = jax.random.split(key, 8)
    p = {'stride': stride}
    p['w1'] = _init_conv(keys[0], in_ch, Hc)
    p['s1'], p['b1'] = _fold_bn(*_init_bn(keys[1], Hc))
    p['w2'] = _init_conv(keys[2], Hc, Hc)
    p['s2'], p['b2'] = _fold_bn(*_init_bn(keys[3], Hc))
    p['w3'] = _init_conv(keys[4], Hc, out_ch)
    p['s3'], p['b3'] = _fold_bn(*_init_bn(keys[5], out_ch))
    if in_ch == out_ch and stride == 1:
        p['shortcut'] = None  # nn.Identity()
    else:
        p['shortcut'] = (_init_conv(keys[6], in_ch, out_ch),
                         0.1 * jax.random.normal(keys[7], (out_ch,), jnp.float32))
    return p


def init_group_layer(key, in_ch, out_ch, count):
    keys = jax.random.split(key, count)
    blocks = [init_block_layer(keys[0], in_ch, out_ch, 2)]
    for i in range(1, count):
        blocks.append(init_block_layer(keys[i], out_ch, out_ch, 1))
    return blocks


# ---------------- forward (Pallas) ----------------

def block_layer_fwd(x_nhwc, p):
    s = p['stride']
    h = conv3x3_bn_act(x_nhwc, p['w1'], p['b1'], scale=p['s1'], stride=1, relu=True)
    h = conv3x3_bn_act(h, p['w2'], p['b2'], scale=p['s2'], stride=s, relu=True)
    if p['shortcut'] is None:
        res = x_nhwc
    else:
        w_sc, b_sc = p['shortcut']
        res = conv3x3_bn_act(x_nhwc, w_sc, b_sc, scale=None, stride=s, relu=False)
    # relu3 is applied to the conv branch, THEN the shortcut is added (as in PyTorch)
    return conv3x3_bn_act(h, p['w3'], p['b3'], scale=p['s3'], stride=1, relu=True,
                          residual=res)


def group_layer_fwd(x_nchw, blocks):
    x = jnp.transpose(x_nchw, (0, 2, 3, 1))  # NCHW -> NHWC
    for p in blocks:
        x = block_layer_fwd(x, p)
    return jnp.transpose(x, (0, 3, 1, 2))    # NHWC -> NCHW


# ---------------- pure-JAX references (for correctness check) ----------------

def _ref_conv(x, w, bias, scale, stride, relu, residual=None, cast_bf16=False):
    wf = w.astype(jnp.float32)
    if scale is not None:
        wf = wf * scale.reshape(1, 1, 1, -1)
    if cast_bf16:                      # emulate the kernel's bf16 operands / f32 accum
        x = x.astype(jnp.bfloat16)
        wf = wf.astype(jnp.bfloat16)
    out = lax.conv_general_dilated(x, wf, (stride, stride), ((1, 1), (1, 1)),
                                   dimension_numbers=('NHWC', 'HWIO', 'NHWC'),
                                   preferred_element_type=jnp.float32)
    out = out + bias.reshape(1, 1, 1, -1)
    if relu:
        out = jnp.maximum(out, 0.0)
    if residual is not None:
        out = out + residual
    return out


def ref_group_layer(x_nchw, blocks, cast_bf16=False):
    x = jnp.transpose(x_nchw, (0, 2, 3, 1))
    for p in blocks:
        s = p['stride']
        h = _ref_conv(x, p['w1'], p['b1'], p['s1'], 1, True, cast_bf16=cast_bf16)
        h = _ref_conv(h, p['w2'], p['b2'], p['s2'], s, True, cast_bf16=cast_bf16)
        if p['shortcut'] is None:
            res = x
        else:
            w_sc, b_sc = p['shortcut']
            res = _ref_conv(x, w_sc, b_sc, None, s, False, cast_bf16=cast_bf16)
        x = _ref_conv(h, p['w3'], p['b3'], p['s3'], 1, True, residual=res,
                      cast_bf16=cast_bf16)
    return jnp.transpose(x, (0, 3, 1, 2))


if __name__ == "__main__":
    key = jax.random.PRNGKey(0)
    kx, kp = jax.random.split(key)

    in_ch, out_ch, count = 4, 8, 2
    x = jax.random.normal(kx, (2, in_ch, 16, 16), jnp.float32)  # NCHW like PyTorch

    blocks = init_group_layer(kp, in_ch, out_ch, count)

    out = jax.block_until_ready(group_layer_fwd(x, blocks))

    # tight check vs a bf16-operand / f32-accumulation reference (isolates kernel bugs)
    ref_bf16 = jax.block_until_ready(ref_group_layer(x, blocks, cast_bf16=True))
    # loose check vs the full-f32 reference (delta is only bf16 operand quantization)
    ref_f32 = jax.block_until_ready(ref_group_layer(x, blocks, cast_bf16=False))

    assert out.shape == (2, out_ch, 8, 8), out.shape  # first block has stride 2
    assert jnp.allclose(out, ref_bf16, rtol=2e-3, atol=2e-3), \
        float(jnp.max(jnp.abs(out - ref_bf16)))
    assert jnp.allclose(out, ref_f32, rtol=5e-2, atol=5e-2), \
        float(jnp.max(jnp.abs(out - ref_f32)))

    print("KERNEL_OK")
</pallas_src>

<mosaic_0001>
module attributes {stable_mosaic.version = 11 : i64} {
  func.func @_conv_taps_kernel(%arg0: i32, %arg1: memref<1x18x18x4xbf16, #tpu.memory_space<vmem>>, %arg2: memref<9x4x128xbf16, #tpu.memory_space<vmem>>, %arg3: memref<1x128xf32, #tpu.memory_space<vmem>>, %arg4: memref<1x16x16x128xf32, #tpu.memory_space<vmem>>) attributes {dimension_semantics = [#tpu.dimension_semantics<parallel>], iteration_bounds = array<i64: 2>, scalar_prefetch = 0 : i64, scratch_operands = 0 : i64, tpu.core_type = #tpu.core_type<tc>, window_params = [{transform_indices = @transform_0, window_bounds = array<i64: 1, 18, 18, 4>}, {pipeline_mode = #tpu.pipeline_mode<synchronous>, transform_indices = @transform_1, window_bounds = array<i64: 9, 4, 128>}, {pipeline_mode = #tpu.pipeline_mode<synchronous>, transform_indices = @transform_2, window_bounds = array<i64: 1, 128>}, {transform_indices = @transform_3, window_bounds = array<i64: 1, 16, 16, 128>}]} {
    %cst = arith.constant 0.000000e+00 : f32
    %0 = vector.broadcast %cst : f32 to vector<256x128xf32>
    %c0 = arith.constant 0 : index
    %c0_0 = arith.constant 0 : index
    %c0_1 = arith.constant 0 : index
    %c0_2 = arith.constant 0 : index
    %1 = vector.load %arg1[%c0, %c0_0, %c0_1, %c0_2] : memref<1x18x18x4xbf16, #tpu.memory_space<vmem>>, vector<1x16x16x4xbf16>
    %2 = vector.shape_cast %1 : vector<1x16x16x4xbf16> to vector<16x16x4xbf16>
    %3 = vector.shape_cast %2 : vector<16x16x4xbf16> to vector<256x4xbf16>
    %c0_3 = arith.constant 0 : index
    %c0_4 = arith.constant 0 : index
    %c0_5 = arith.constant 0 : index
    %4 = vector.load %arg2[%c0_3, %c0_4, %c0_5] : memref<9x4x128xbf16, #tpu.memory_space<vmem>>, vector<1x4x128xbf16>
    %5 = vector.shape_cast %4 : vector<1x4x128xbf16> to vector<4x128xbf16>
    %cst_6 = arith.constant dense<0.000000e+00> : vector<256x128xf32>
    %6 = tpu.matmul %3, %5, %cst_6 {dimension_numbers = #tpu.dot_dimension_numbers<[1], [0], [0], [1], [0, 0, 1, 1], [], []>} : vector<256x4xbf16>, vector<4x128xbf16>, vector<256x128xf32> -> vector<256x128xf32>
    %7 = arith.addf %0, %6 : vector<256x128xf32>
    %c0_7 = arith.constant 0 : index
    %c0_8 = arith.constant 0 : index
    %c1 = arith.constant 1 : index
    %c0_9 = arith.constant 0 : index
    %8 = vector.load %arg1[%c0_7, %c0_8, %c1, %c0_9] : memref<1x18x18x4xbf16, #tpu.memory_space<vmem>>, vector<1x16x16x4xbf16>
    %9 = vector.shape_cast %8 : vector<1x16x16x4xbf16> to vector<16x16x4xbf16>
    %10 = vector.shape_cast %9 : vector<16x16x4xbf16> to vector<256x4xbf16>
    %c1_10 = arith.constant 1 : index
    %c0_11 = arith.constant 0 : index
    %c0_12 = arith.constant 0 : index
    %11 = vector.load %arg2[%c1_10, %c0_11, %c0_12] : memref<9x4x128xbf16, #tpu.memory_space<vmem>>, vector<1x4x128xbf16>
    %12 = vector.shape_cast %11 : vector<1x4x128xbf16> to vector<4x128xbf16>
    %cst_13 = arith.constant dense<0.000000e+00> : vector<256x128xf32>
    %13 = tpu.matmul %10, %12, %cst_13 {dimension_numbers = #tpu.dot_dimension_numbers<[1], [0], [0], [1], [0, 0, 1, 1], [], []>} : vector<256x4xbf16>, vector<4x128xbf16>, vector<256x128xf32> -> vector<256x128xf32>
    %14 = arith.addf %7, %13 : vector<256x128xf32>
    %c0_14 = arith.constant 0 : index
    %c0_15 = arith.constant 0 : index
    %c2 = arith.constant 2 : index
    %c0_16 = arith.constant 0 : index
    %15 = vector.load %arg1[%c0_14, %c0_15, %c2, %c0_16] : memref<1x18x18x4xbf16, #tpu.memory_space<vmem>>, vector<1x16x16x4xbf16>
    %16 = vector.shape_cast %15 : vector<1x16x16x4xbf16> to vector<16x16x4xbf16>
    %17 = vector.shape_cast %16 : vector<16x16x4xbf16> to vector<256x4xbf16>
    %c2_17 = arith.constant 2 : index
    %c0_18 = arith.constant 0 : index
    %c0_19 = arith.constant 0 : index
    %18 = vector.load %arg2[%c2_17, %c0_18, %c0_19] : memref<9x4x128xbf16, #tpu.memory_space<vmem>>, vector<1x4x128xbf16>
    %19 = vector.shape_cast %18 : vector<1x4x128xbf16> to vector<4x128xbf16>
    %cst_20 = arith.constant dense<0.000000e+00> : vector<256x128xf32>
    %20 = tpu.matmul %17, %19, %cst_20 {dimension_numbers = #tpu.dot_dimension_numbers<[1], [0], [0], [1], [0, 0, 1, 1], [], []>} : vector<256x4xbf16>, vector<4x128xbf16>, vector<256x128xf32> -> vector<256x128xf32>
    %21 = arith.addf %14, %20 : vector<256x128xf32>
    %c0_21 = arith.constant 0 : index
    %c1_22 = arith.constant 1 : index
    %c0_23 = arith.constant 0 : index
    %c0_24 = arith.constant 0 : index
    %22 = vector.load %arg1[%c0_21, %c1_22, %c0_23, %c0_24] : memref<1x18x18x4xbf16, #tpu.memory_space<vmem>>, vector<1x16x16x4xbf16>
    %23 = vector.shape_cast %22 : vector<1x16x16x4xbf16> to vector<16x16x4xbf16>
    %24 = vector.shape_cast %23 : vector<16x16x4xbf16> to vector<256x4xbf16>
    %c3 = arith.constant 3 : index
    %c0_25 = arith.constant 0 : index
    %c0_26 = arith.constant 0 : index
    %25 = vector.load %arg2[%c3, %c0_25, %c0_26] : memref<9x4x128xbf16, #tpu.memory_space<vmem>>, vector<1x4x128xbf16>
    %26 = vector.shape_cast %25 : vector<1x4x128xbf16> to vector<4x128xbf16>
    %cst_27 = arith.constant dense<0.000000e+00> : vector<256x128xf32>
    %27 = tpu.matmul %24, %26, %cst_27 {dimension_numbers = #tpu.dot_dimension_numbers<[1], [0], [0], [1], [0, 0, 1, 1], [], []>} : vector<256x4xbf16>, vector<4x128xbf16>, vector<256x128xf32> -> vector<256x128xf32>
    %28 = arith.addf %21, %27 : vector<256x128xf32>
    %c0_28 = arith.constant 0 : index
    %c1_29 = arith.constant 1 : index
    %c1_30 = arith.constant 1 : index
    %c0_31 = arith.constant 0 : index
    %29 = vector.load %arg1[%c0_28, %c1_29, %c1_30, %c0_31] : memref<1x18x18x4xbf16, #tpu.memory_space<vmem>>, vector<1x16x16x4xbf16>
    %30 = vector.shape_cast %29 : vector<1x16x16x4xbf16> to vector<16x16x4xbf16>
    %31 = vector.shape_cast %30 : vector<16x16x4xbf16> to vector<256x4xbf16>
    %c4 = arith.constant 4 : index
    %c0_32 = arith.constant 0 : index
    %c0_33 = arith.constant 0 : index
    %32 = vector.load %arg2[%c4, %c0_32, %c0_33] : memref<9x4x128xbf16, #tpu.memory_space<vmem>>, vector<1x4x128xbf16>
    %33 = vector.shape_cast %32 : vector<1x4x128xbf16> to vector<4x128xbf16>
    %cst_34 = arith.constant dense<0.000000e+00> : vector<256x128xf32>
    %34 = tpu.matmul %31, %33, %cst_34 {dimension_numbers = #tpu.dot_dimension_numbers<[1], [0], [0], [1], [0, 0, 1, 1], [], []>} : vector<256x4xbf16>, vector<4x128xbf16>, vector<256x128xf32> -> vector<256x128xf32>
    %35 = arith.addf %28, %34 : vector<256x128xf32>
    %c0_35 = arith.constant 0 : index
    %c1_36 = arith.constant 1 : index
    %c2_37 = arith.constant 2 : index
    %c0_38 = arith.constant 0 : index
    %36 = vector.load %arg1[%c0_35, %c1_36, %c2_37, %c0_38] : memref<1x18x18x4xbf16, #tpu.memory_space<vmem>>, vector<1x16x16x4xbf16>
    %37 = vector.shape_cast %36 : vector<1x16x16x4xbf16> to vector<16x16x4xbf16>
    %38 = vector.shape_cast %37 : vector<16x16x4xbf16> to vector<256x4xbf16>
    %c5 = arith.constant 5 : index
    %c0_39 = arith.constant 0 : index
    %c0_40 = arith.constant 0 : index
    %39 = vector.load %arg2[%c5, %c0_39, %c0_40] : memref<9x4x128xbf16, #tpu.memory_space<vmem>>, vector<1x4x128xbf16>
    %40 = vector.shape_cast %39 : vector<1x4x128xbf16> to vector<4x128xbf16>
    %cst_41 = arith.constant dense<0.000000e+00> : vector<256x128xf32>
    %41 = tpu.matmul %38, %40, %cst_41 {dimension_numbers = #tpu.dot_dimension_numbers<[1], [0], [0], [1], [0, 0, 1, 1], [], []>} : vector<256x4xbf16>, vector<4x128xbf16>, vector<256x128xf32> -> vector<256x128xf32>
    %42 = arith.addf %35, %41 : vector<256x128xf32>
    %c0_42 = arith.constant 0 : index
    %c2_43 = arith.constant 2 : index
    %c0_44 = arith.constant 0 : index
    %c0_45 = arith.constant 0 : index
    %43 = vector.load %arg1[%c0_42, %c2_43, %c0_44, %c0_45] : memref<1x18x18x4xbf16, #tpu.memory_space<vmem>>, vector<1x16x16x4xbf16>
    %44 = vector.shape_cast %43 : vector<1x16x16x4xbf16> to vector<16x16x4xbf16>
    %45 = vector.shape_cast %44 : vector<16x16x4xbf16> to vector<256x4xbf16>
    %c6 = arith.constant 6 : index
    %c0_46 = arith.constant 0 : index
    %c0_47 = arith.constant 0 : index
    %46 = vector.load %arg2[%c6, %c0_46, %c0_47] : memref<9x4x128xbf16, #tpu.memory_space<vmem>>, vector<1x4x128xbf16>
    %47 = vector.shape_cast %46 : vector<1x4x128xbf16> to vector<4x128xbf16>
    %cst_48 = arith.constant dense<0.000000e+00> : vector<256x128xf32>
    %48 = tpu.matmul %45, %47, %cst_48 {dimension_numbers = #tpu.dot_dimension_numbers<[1], [0], [0], [1], [0, 0, 1, 1], [], []>} : vector<256x4xbf16>, vector<4x128xbf16>, vector<256x128xf32> -> vector<256x128xf32>
    %49 = arith.addf %42, %48 : vector<256x128xf32>
    %c0_49 = arith.constant 0 : index
    %c2_50 = arith.constant 2 : index
    %c1_51 = arith.constant 1 : index
    %c0_52 = arith.constant 0 : index
    %50 = vector.load %arg1[%c0_49, %c2_50, %c1_51, %c0_52] : memref<1x18x18x4xbf16, #tpu.memory_space<vmem>>, vector<1x16x16x4xbf16>
    %51 = vector.shape_cast %50 : vector<1x16x16x4xbf16> to vector<16x16x4xbf16>
    %52 = vector.shape_cast %51 : vector<16x16x4xbf16> to vector<256x4xbf16>
    %c7 = arith.constant 7 : index
    %c0_53 = arith.constant 0 : index
    %c0_54 = arith.constant 0 : index
    %53 = vector.load %arg2[%c7, %c0_53, %c0_54] : memref<9x4x128xbf16, #tpu.memory_space<vmem>>, vector<1x4x128xbf16>
    %54 = vector.shape_cast %53 : vector<1x4x128xbf16> to vector<4x128xbf16>
    %cst_55 = arith.constant dense<0.000000e+00> : vector<256x128xf32>
    %55 = tpu.matmul %52, %54, %cst_55 {dimension_numbers = #tpu.dot_dimension_numbers<[1], [0], [0], [1], [0, 0, 1, 1], [], []>} : vector<256x4xbf16>, vector<4x128xbf16>, vector<256x128xf32> -> vector<256x128xf32>
    %56 = arith.addf %49, %55 : vector<256x128xf32>
    %c0_56 = arith.constant 0 : index
    %c2_57 = arith.constant 2 : index
    %c2_58 = arith.constant 2 : index
    %c0_59 = arith.constant 0 : index
    %57 = vector.load %arg1[%c0_56, %c2_57, %c2_58, %c0_59] : memref<1x18x18x4xbf16, #tpu.memory_space<vmem>>, vector<1x16x16x4xbf16>
    %58 = vector.shape_cast %57 : vector<1x16x16x4xbf16> to vector<16x16x4xbf16>
    %59 = vector.shape_cast %58 : vector<16x16x4xbf16> to vector<256x4xbf16>
    %c8 = arith.constant 8 : index
    %c0_60 = arith.constant 0 : index
    %c0_61 = arith.constant 0 : index
    %60 = vector.load %arg2[%c8, %c0_60, %c0_61] : memref<9x4x128xbf16, #tpu.memory_space<vmem>>, vector<1x4x128xbf16>
    %61 = vector.shape_cast %60 : vector<1x4x128xbf16> to vector<4x128xbf16>
    %cst_62 = arith.constant dense<0.000000e+00> : vector<256x128xf32>
    %62 = tpu.matmul %59, %61, %cst_62 {dimension_numbers = #tpu.dot_dimension_numbers<[1], [0], [0], [1], [0, 0, 1, 1], [], []>} : vector<256x4xbf16>, vector<4x128xbf16>, vector<256x128xf32> -> vector<256x128xf32>
    %63 = arith.addf %56, %62 : vector<256x128xf32>
    %c0_63 = arith.constant 0 : index
    %c0_64 = arith.constant 0 : index
    %64 = vector.load %arg3[%c0_63, %c0_64] : memref<1x128xf32, #tpu.memory_space<vmem>>, vector<1x128xf32>
    %65 = vector.broadcast %64 : vector<1x128xf32> to vector<256x128xf32>
    %66 = arith.addf %63, %65 : vector<256x128xf32>
    %cst_65 = arith.constant 0.000000e+00 : f32
    %67 = vector.broadcast %cst_65 : f32 to vector<256x128xf32>
    %68 = arith.maximumf %66, %67 : vector<256x128xf32>
    %69 = vector.shape_cast %68 : vector<256x128xf32> to vector<1x16x16x128xf32>
    %c0_66 = arith.constant 0 : index
    %c0_67 = arith.constant 0 : index
    %c0_68 = arith.constant 0 : index
    %c0_69 = arith.constant 0 : index
    %70 = vector.load %arg4[%c0_66, %c0_67, %c0_68, %c0_69] : memref<1x16x16x128xf32, #tpu.memory_space<vmem>>, vector<1x16x16x128xf32>
    tpu.vector_store %arg4[%c0_66, %c0_67, %c0_68, %c0_69], %69 {strides = array<i32>} : memref<1x16x16x128xf32, #tpu.memory_space<vmem>>, vector<1x16x16x128xf32>,
    return
  }
  func.func @transform_0(%arg0: i32) -> (i32, i32, i32, i32) {
    %c0_i32 = arith.constant 0 : i32
    %c0_i32_0 = arith.constant 0 : i32
    %c0_i32_1 = arith.constant 0 : i32
    %c0_i32_2 = arith.constant 0 : i32
    return %arg0, %c0_i32, %c0_i32_0, %c0_i32_1 : i32, i32, i32, i32
  }
  func.func @transform_1(%arg0: i32) -> (i32, i32, i32) {
    %c0_i32 = arith.constant 0 : i32
    %c0_i32_0 = arith.constant 0 : i32
    %c0_i32_1 = arith.constant 0 : i32
    %c0_i32_2 = arith.constant 0 : i32
    return %c0_i32, %c0_i32_0, %c0_i32_1 : i32, i32, i32
  }
  func.func @transform_2(%arg0: i32) -> (i32, i32) {
    %c0_i32 = arith.constant 0 : i32
    %c0_i32_0 = arith.constant 0 : i32
    %c0_i32_1 = arith.constant 0 : i32
    return %c0_i32, %c0_i32_0 : i32, i32
  }
  func.func @transform_3(%arg0: i32) -> (i32, i32, i32, i32) {
    %c0_i32 = arith.constant 0 : i32
    %c0_i32_0 = arith.constant 0 : i32
    %c0_i32_1 = arith.constant 0 : i32
    %c0_i32_2 = arith.constant 0 : i32
    return %arg0, %c0_i32, %c0_i32_0, %c0_i32_1 : i32, i32, i32, i32
  }
}

</mosaic_0001>

<llo_original>
// kernel: tpu_custom_call.1
$region0: #{tpu_custom_call.1}
  #allocation0 [shape = 'u32[]', space=smem, size = 0x4, offset = 0x4, fixed_abs, tag = 'smem constant byte address 0x4 - core index']
  #allocation1 [shape = 'u32[72,128]{1,0:T(1,128)}', space=vmem, size = 0x9000, scoped, tag = 'internal scratch']
  %s0 = inlined_call_operand.vmem [shape: bf16[2,18,18,4], index: 0, kind: input, shape index: {}]
  %s1 = inlined_call_operand.vmem [shape: bf16[9,4,128], index: 1, kind: input, shape index: {}]
  %s2 = inlined_call_operand.vmem [shape: f32[1,128], index: 2, kind: input, shape index: {}]
  %s3 = inlined_call_operand.hbm [shape: f32[2,16,16,128], index: 3, kind: output, shape index: {}]
  %s4 = sld [smem:[#allocation0]]
  $region45: #{tpu_custom_call.1} parent=0
    _
  %s6 = ssub.s32 1, %s4
  %s7 = scalar_select 0, %s6, %s4
  $region1: #{tpu_custom_call.1} parent=0
    #allocation2 [shape = 'u8[262144]{0}', space=vmem, size = 0x40000, scoped, tag = 'output window, operand 0']
    #allocation3 [shape = 's32[2]{0}', space=sflag, size = 0x8, scoped, tag = 'scoped memory for tpu_custom_call.1']
    %8 = vsyncpa [#allocation3], 0
    %s9 = scalar_lea.sflag [#allocation3], 1
    %10 = vsyncpa %s9, 0
    loop: start=0, step=1, limit=4
    $region2: #{tpu_custom_call.1} parent=1 // loop_pre_header
      _
    $region3: #{tpu_custom_call.1} parent=1 // loop_header
      %s12 = sphi 0, %s16
      %p13 = scmp.ge.s32.totalorder %s12, 4
      %s22 = sphi 0, %s24
      %s25 = sphi 0, %s22
      %s26 = sphi 0, %s25
      %s42 = sphi 0, %s26
      %s46 = sphi 0, %s46
      %s48 = sphi 0, %s46
      %s49 = sphi 0, %s48
      %s63 = sphi 0, %s49
      %s67 = sphi 0, %s67
      %s69 = sphi 0, %s67
      %s70 = sphi 0, %s69
      %s84 = sphi 0, %s70
      %s90 = sphi 0, %s92
      %s93 = sphi 0, %s90
      %s94 = sphi 0, %s93
      %s110 = sphi 0, %s94
    $region4: #{tpu_custom_call.1} parent=1 // loop_header_branch
      %15 = sbr.rel (%p13) target = $region8
    $region5: #{tpu_custom_call.1} parent=1 // loop_body
      %s17 = ssub.s32 %s12, 1
      %s18 = ssub.s32 %s12, 2
      %s19 = sadd.s32 %s12, 1
      %s20 = ssub.s32 %s12, %s19
      %p21 = scmp.eq.s32.totalorder %s20, 0
      %s23 = sadd.s32 %s22, 1
      %s24 = scalar_select %p21, %s22, %s23
      %p27 = pneg %p21
      %p28 = scmp.eq.s32.totalorder %s12, 1
      %p29 = por %p27, %p28
      %p30 = scmp.ne.s32.totalorder %s22, %s25
      %p31 = scmp.eq.s32.totalorder %s12, 0
      %p32 = por %p30, %p31
      %p33 = scmp.ne.s32.totalorder %s22, %s25
      %p34 = scmp.eq.s32.totalorder %s17, 1
      %p35 = por %p33, %p34
      %p36 = scmp.ne.s32.totalorder %s25, %s26
      %p37 = scmp.eq.s32.totalorder %s17, 0
      %p38 = por %p36, %p37
      %p39 = scmp.ne.s32.totalorder %s25, %s26
      %p40 = scmp.eq.s32.totalorder %s18, 1
      %p41 = por %p39, %p40
      %p43 = scmp.ne.s32.totalorder %s26, %s42
      %p44 = scmp.eq.s32.totalorder %s18, 0
      %p45 = por %p43, %p44
      %s47 = sadd.s32 %s46, 1
      %p50 = scmp.eq.s32.totalorder %s12, 1
      %p51 = scmp.ne.s32.totalorder %s46, %s48
      %p52 = scmp.eq.s32.totalorder %s12, 0
      %p53 = por %p51, %p52
      %p54 = scmp.ne.s32.totalorder %s46, %s48
      %p55 = scmp.eq.s32.totalorder %s17, 1
      %p56 = por %p54, %p55
      %p57 = scmp.ne.s32.totalorder %s48, %s49
      %p58 = scmp.eq.s32.totalorder %s17, 0
      %p59 = por %p57, %p58
      %p60 = scmp.ne.s32.totalorder %s48, %s49
      %p61 = scmp.eq.s32.totalorder %s18, 1
      %p62 = por %p60, %p61
      %p64 = scmp.ne.s32.totalorder %s49, %s63
      %p65 = scmp.eq.s32.totalorder %s18, 0
      %p66 = por %p64, %p65
      %s68 = sadd.s32 %s67, 1
      %p71 = scmp.eq.s32.totalorder %s12, 1
      %p72 = scmp.ne.s32.totalorder %s67, %s69
      %p73 = scmp.eq.s32.totalorder %s12, 0
      %p74 = por %p72, %p73
      %p75 = scmp.ne.s32.totalorder %s67, %s69
      %p76 = scmp.eq.s32.totalorder %s17, 1
      %p77 = por %p75, %p76
      %p78 = scmp.ne.s32.totalorder %s69, %s70
      %p79 = scmp.eq.s32.totalorder %s17, 0
      %p80 = por %p78, %p79
      %p81 = scmp.ne.s32.totalorder %s69, %s70
      %p82 = scmp.eq.s32.totalorder %s18, 1
      %p83 = por %p81, %p82
      %p85 = scmp.ne.s32.totalorder %s70, %s84
      %p86 = scmp.eq.s32.totalorder %s18, 0
      %p87 = por %p85, %p86
      %s88 = ssub.s32 %s12, %s19
      %p89 = scmp.eq.s32.totalorder %s88, 0
      %s91 = sadd.s32 %s90, 1
      %s92 = scalar_select %p89, %s90, %s91
      %p95 = pneg %p89
      %p96 = scmp.eq.s32.totalorder %s12, 1
      %p97 = por %p95, %p96
      %p98 = scmp.ne.s32.totalorder %s90, %s93
      %p99 = scmp.eq.s32.totalorder %s12, 0
      %p100 = por %p98, %p99
      %p101 = scmp.ne.s32.totalorder %s90, %s93
      %p102 = scmp.eq.s32.totalorder %s17, 1
      %p103 = por %p101, %p102
      %p104 = scmp.ne.s32.totalorder %s93, %s94
      %p105 = scmp.eq.s32.totalorder %s17, 0
      %p106 = por %p104, %p105
      %p107 = scmp.ne.s32.totalorder %s93, %s94
      %p108 = scmp.eq.s32.totalorder %s18, 1
      %p109 = por %p107, %p108
      %p111 = scmp.ne.s32.totalorder %s94, %s110
      %p112 = scmp.eq.s32.totalorder %s18, 0
      %p113 = por %p111, %p112
      %p114 = scmp.le.s32.totalorder 1, %s12
      %p115 = scmp.lt.s32.totalorder %s12, 3
      %p116 = pnand %p114, %p115
      %p117 = pneg %p116
      // Predicated region
      $region9: #{tpu_custom_call.1} parent=5 // pred_check
        _
      $region10: #{tpu_custom_call.1} parent=5 // pred_check_branch
        %119 = sbr.rel (%p116) target = $region12
      $region11: #{tpu_custom_call.1} parent=5 // pred_region
        %s120 = ssub.s32 %s12, 1
        // Predicated region
        $region13: #{tpu_custom_call.1} parent=11 // pred_check
          %p121 = pneg %p59
        $region14: #{tpu_custom_call.1} parent=11 // pred_check_branch
          %123 = sbr.rel (%p121) target = $region16
        $region15: #{tpu_custom_call.1} parent=11 // pred_region
          _
        $region16: #{tpu_custom_call.1} parent=11 // pred_fallthru
          _
        // Predicated region
        $region17: #{tpu_custom_call.1} parent=11 // pred_check
          %p124 = pneg %p80
        $region18: #{tpu_custom_call.1} parent=11 // pred_check_branch
          %126 = sbr.rel (%p124) target = $region20
        $region19: #{tpu_custom_call.1} parent=11 // pred_region
          _
        $region20: #{tpu_custom_call.1} parent=11 // pred_fallthru
          _
      $region12: #{tpu_custom_call.1} parent=5 // pred_fallthru
        _
      %p127 = scmp.lt.s32.totalorder %s12, 2
      // Predicated region
      $region21: #{tpu_custom_call.1} parent=5 // pred_check
        %p128 = pneg %p127
      $region22: #{tpu_custom_call.1} parent=5 // pred_check_branch
        %130 = sbr.rel (%p128) target = $region24
      $region23: #{tpu_custom_call.1} parent=5 // pred_region
        // Predicated region
        $region25: #{tpu_custom_call.1} parent=23 // pred_check
          %p131 = pneg %p32
        $region26: #{tpu_custom_call.1} parent=23 // pred_check_branch
          %133 = sbr.rel (%p131) target = $region28
        $region27: #{tpu_custom_call.1} parent=23 // pred_region
          %p134 = scmp.lt.s32.totalorder %s12, 1
          %s135 = scalar_select %p134, %s12, 1
          %s136 = smul.addr %s135, 54
          %s137 = smul.addr %s136, 4
          %s138 = scalar_lea.vmem %s0, %s137
        $region28: #{tpu_custom_call.1} parent=23 // pred_fallthru
          _
      $region24: #{tpu_custom_call.1} parent=5 // pred_fallthru
        _
      %p139 = scmp.le.s32.totalorder 1, %s12
      %p140 = scmp.lt.s32.totalorder %s12, 3
      %p141 = pnand %p139, %p140
      %p142 = pneg %p141
      // Predicated region
      $region29: #{tpu_custom_call.1} parent=5 // pred_check
        _
      $region30: #{tpu_custom_call.1} parent=5 // pred_check_branch
        %144 = sbr.rel (%p141) target = $region32
      $region31: #{tpu_custom_call.1} parent=5 // pred_region
        %s145 = ssub.s32 %s12, 1
        %p146 = scmp.lt.s32.totalorder %s17, 1
        %s147 = scalar_select %p146, %s17, 1
        %s148 = smul.addr %s147, 54
        %s149 = smul.addr %s148, 4
        %s150 = scalar_lea.vmem %s0, %s149
        %p151 = pneg %p38
        %p152 = pneg %p35
        %p153 = pneg %p59
        %p154 = pneg %p56
        %p155 = pneg %p80
        %p156 = pneg %p77
        %p157 = pneg %p106
        %p158 = pneg %p103
        %s159 = sand.u32 %s93, 1
        %s160 = scalar_lea.sflag [#allocation3], %s159
        %s161 = sand.u32 %s93, 1
        %s162 = smul.addr %s161, 256
        %s163 = scalar_lea.vmem [#allocation2], %s162
        %p164 = scmp.lt.s32.totalorder %s17, 1
        %s165 = scalar_select %p164, %s17, 1
        %s166 = smul.addr %s165, 54
        %s167 = smul.addr %s166, 4
        %s168 = scalar_lea.vmem %s0, %s167
        %v170 = vld [vmem:[%s168] sm:$0xf]
        %v171 = vld [vmem:[%s168 + $0x4] sm:$0xf]
        %v172 = vld [vmem:[%s168 + $0xc] sm:$0xf]
        %v173 = vld [vmem:[%s168 + $0x10] sm:$0xf]
        %v174 = vld [vmem:[%s168 + $0x18] sm:$0xf]
        %v175 = vld [vmem:[%s168 + $0x1c] sm:$0xf]
        %v176 = vld [vmem:[%s168 + $0x24] sm:$0xf]
        %v177 = vld [vmem:[%s168 + $0x28] sm:$0xf]
        %v178 = vld [vmem:[%s168 + $0x30] sm:$0xf]
        %v179 = vld [vmem:[%s168 + $0x34] sm:$0xf]
        %v180 = vld [vmem:[%s168 + $0x3c] sm:$0xf]
        %v181 = vld [vmem:[%s168 + $0x40] sm:$0xf]
        %v182 = vld [vmem:[%s168 + $0x48] sm:$0xf]
        %v183 = vld [vmem:[%s168 + $0x4c] sm:$0xf]
        %v184 = vld [vmem:[%s168 + $0x54] sm:$0xf]
        %v185 = vld [vmem:[%s168 + $0x58] sm:$0xf]
        %v186 = vld [vmem:[%s168 + $0x60] sm:$0xf]
        %v187 = vld [vmem:[%s168 + $0x64] sm:$0xf]
        %v188 = vld [vmem:[%s168 + $0x6c] sm:$0xf]
        %v189 = vld [vmem:[%s168 + $0x70] sm:$0xf]
        %v190 = vld [vmem:[%s168 + $0x78] sm:$0xf]
        %v191 = vld [vmem:[%s168 + $0x7c] sm:$0xf]
        %v192 = vld [vmem:[%s168 + $0x84] sm:$0xf]
        %v193 = vld [vmem:[%s168 + $0x88] sm:$0xf]
        %v194 = vld [vmem:[%s168 + $0x90] sm:$0xf]
        %v195 = vld [vmem:[%s168 + $0x94] sm:$0xf]
        %v196 = vld [vmem:[%s168 + $0x9c] sm:$0xf]
        %v197 = vld [vmem:[%s168 + $0xa0] sm:$0xf]
        %v198 = vld [vmem:[%s168 + $0xa8] sm:$0xf]
        %v199 = vld [vmem:[%s168 + $0xac] sm:$0xf]
        %v200 = vld [vmem:[%s168 + $0xb4] sm:$0xf]
        %v201 = vld [vmem:[%s168 + $0xb8] sm:$0xf]
        %v202 = vld [vmem:[%s1] sm:$0x3]
        %v203 = vld [vmem:[%s168 + $0x8] sm:$0x1]
        %v204 = vld [vmem:[%s168 + $0x14] sm:$0x1]
        %v205 = vld [vmem:[%s168 + $0x20] sm:$0x1]
        %v206 = vld [vmem:[%s168 + $0x2c] sm:$0x1]
        %v207 = vld [vmem:[%s168 + $0x38] sm:$0x1]
        %v208 = vld [vmem:[%s168 + $0x44] sm:$0x1]
        %v209 = vld [vmem:[%s168 + $0x50] sm:$0x1]
        %v210 = vld [vmem:[%s168 + $0x5c] sm:$0x1]
        %v211 = vld [vmem:[%s168 + $0x68] sm:$0x1]
        %v212 = vld [vmem:[%s168 + $0x74] sm:$0x1]
        %v213 = vld [vmem:[%s168 + $0x80] sm:$0x1]
        %v214 = vld [vmem:[%s168 + $0x8c] sm:$0x1]
        %v215 = vld [vmem:[%s168 + $0x98] sm:$0x1]
        %v216 = vld [vmem:[%s168 + $0xa4] sm:$0x1]
        %v217 = vld [vmem:[%s168 + $0xb0] sm:$0x1]
        %v218 = vld [vmem:[%s168 + $0xbc] sm:$0x1]
        %vm219 = vsmask.f32 3328
        %vm220 = vsmask.f32 7440
        %vm221 = vmor %vm219, %vm220
        %v223 = vshrl.u32 %v170, 16
        %v225 = vrot.slane %v223, 4
        %v226 = vshll.u32 %v170, 16
        %v228 = vrot.slane %v226, 5
        %v229 = vor.u32 %v225, %v228
        %v230 = vrot.slane %v229, 4
        %v232 = vshll.u32 %v171, 16
        %v234 = vrot.slane %v232, 5
        %v235 = vsel %vm221, %v230, %v234
        %v236 = vshrl.u32 %v171, 16
        %v238 = vrot.slane %v236, 4
        %v239 = vor.u32 %v238, %v234
        %v240 = vrot.slane %v239, 4
        %v242 = vshll.u32 %v203, 16
        %v244 = vrot.slane %v242, 5
        %v245 = vsel %vm221, %v240, %v244
        %v247 = vshrl.u32 %v172, 16
        %v249 = vrot.slane %v247, 4
        %v250 = vshll.u32 %v172, 16
        %v252 = vrot.slane %v250, 5
        %v253 = vor.u32 %v249, %v252
        %v254 = vrot.slane %v253, 4
        %v256 = vshll.u32 %v173, 16
        %v258 = vrot.slane %v256, 5
        %v259 = vsel %vm221, %v254, %v258
        %v260 = vshrl.u32 %v173, 16
        %v262 = vrot.slane %v260, 4
        %v263 = vor.u32 %v262, %v258
        %v264 = vrot.slane %v263, 4
        %v266 = vshll.u32 %v204, 16
        %v268 = vrot.slane %v266, 5
        %v269 = vsel %vm221, %v264, %v268
        %v271 = vshrl.u32 %v174, 16
        %v273 = vrot.slane %v271, 4
        %v274 = vshll.u32 %v174, 16
        %v276 = vrot.slane %v274, 5
        %v277 = vor.u32 %v273, %v276
        %v278 = vrot.slane %v277, 4
        %v280 = vshll.u32 %v175, 16
        %v282 = vrot.slane %v280, 5
        %v283 = vsel %vm221, %v278, %v282
        %v284 = vshrl.u32 %v175, 16
        %v286 = vrot.slane %v284, 4
        %v287 = vor.u32 %v286, %v282
        %v288 = vrot.slane %v287, 4
        %v290 = vshll.u32 %v205, 16
        %v292 = vrot.slane %v290, 5
        %v293 = vsel %vm221, %v288, %v292
        %v295 = vshrl.u32 %v176, 16
        %v297 = vrot.slane %v295, 4
        %v298 = vshll.u32 %v176, 16
        %v300 = vrot.slane %v298, 5
        %v301 = vor.u32 %v297, %v300
        %v302 = vrot.slane %v301, 4
        %v304 = vshll.u32 %v177, 16
        %v306 = vrot.slane %v304, 5
        %v307 = vsel %vm221, %v302, %v306
        %v308 = vshrl.u32 %v177, 16
        %v310 = vrot.slane %v308, 4
        %v311 = vor.u32 %v310, %v306
        %v312 = vrot.slane %v311, 4
        %v314 = vshll.u32 %v206, 16
        %v316 = vrot.slane %v314, 5
        %v317 = vsel %vm221, %v312, %v316
        %v319 = vshrl.u32 %v178, 16
        %v321 = vrot.slane %v319, 4
        %v322 = vshll.u32 %v178, 16
        %v324 = vrot.slane %v322, 5
        %v325 = vor.u32 %v321, %v324
        %v326 = vrot.slane %v325, 4
        %v328 = vshll.u32 %v179, 16
        %v330 = vrot.slane %v328, 5
        %v331 = vsel %vm221, %v326, %v330
        %v332 = vshrl.u32 %v179, 16
        %v334 = vrot.slane %v332, 4
        %v335 = vor.u32 %v334, %v330
        %v336 = vrot.slane %v335, 4
        %v338 = vshll.u32 %v207, 16
        %v340 = vrot.slane %v338, 5
        %v341 = vsel %vm221, %v336, %v340
        %v343 = vshrl.u32 %v180, 16
        %v345 = vrot.slane %v343, 4
        %v346 = vshll.u32 %v180, 16
        %v348 = vrot.slane %v346, 5
        %v349 = vor.u32 %v345, %v348
        %v350 = vrot.slane %v349, 4
        %v352 = vshll.u32 %v181, 16
        %v354 = vrot.slane %v352, 5
        %v355 = vsel %vm221, %v350, %v354
        %v356 = vshrl.u32 %v181, 16
        %v358 = vrot.slane %v356, 4
        %v359 = vor.u32 %v358, %v354
        %v360 = vrot.slane %v359, 4
        %v362 = vshll.u32 %v208, 16
        %v364 = vrot.slane %v362, 5
        %v365 = vsel %vm221, %v360, %v364
        %v367 = vshrl.u32 %v182, 16
        %v369 = vrot.slane %v367, 4
        %v370 = vshll.u32 %v182, 16
        %v372 = vrot.slane %v370, 5
        %v373 = vor.u32 %v369, %v372
        %v374 = vrot.slane %v373, 4
        %v376 = vshll.u32 %v183, 16
        %v378 = vrot.slane %v376, 5
        %v379 = vsel %vm221, %v374, %v378
        %v380 = vshrl.u32 %v183, 16
        %v382 = vrot.slane %v380, 4
        %v383 = vor.u32 %v382, %v378
        %v384 = vrot.slane %v383, 4
        %v386 = vshll.u32 %v209, 16
        %v388 = vrot.slane %v386, 5
        %v389 = vsel %vm221, %v384, %v388
        %v391 = vshrl.u32 %v184, 16
        %v393 = vrot.slane %v391, 4
        %v394 = vshll.u32 %v184, 16
        %v396 = vrot.slane %v394, 5
        %v397 = vor.u32 %v393, %v396
        %v398 = vrot.slane %v397, 4
        %v400 = vshll.u32 %v185, 16
        %v402 = vrot.slane %v400, 5
        %v403 = vsel %vm221, %v398, %v402
        %v404 = vshrl.u32 %v185, 16
        %v406 = vrot.slane %v404, 4
        %v407 = vor.u32 %v406, %v402
        %v408 = vrot.slane %v407, 4
        %v410 = vshll.u32 %v210, 16
        %v412 = vrot.slane %v410, 5
        %v413 = vsel %vm221, %v408, %v412
        %v415 = vshrl.u32 %v186, 16
        %v417 = vrot.slane %v415, 4
        %v418 = vshll.u32 %v186, 16
        %v420 = vrot.slane %v418, 5
        %v421 = vor.u32 %v417, %v420
        %v422 = vrot.slane %v421, 4
        %v424 = vshll.u32 %v187, 16
        %v426 = vrot.slane %v424, 5
        %v427 = vsel %vm221, %v422, %v426
        %v428 = vshrl.u32 %v187, 16
        %v430 = vrot.slane %v428, 4
        %v431 = vor.u32 %v430, %v426
        %v432 = vrot.slane %v431, 4
        %v434 = vshll.u32 %v211, 16
        %v436 = vrot.slane %v434, 5
        %v437 = vsel %vm221, %v432, %v436
        %v439 = vshrl.u32 %v188, 16
        %v441 = vrot.slane %v439, 4
        %v442 = vshll.u32 %v188, 16
        %v444 = vrot.slane %v442, 5
        %v445 = vor.u32 %v441, %v444
        %v446 = vrot.slane %v445, 4
        %v448 = vshll.u32 %v189, 16
        %v450 = vrot.slane %v448, 5
        %v451 = vsel %vm221, %v446, %v450
        %v452 = vshrl.u32 %v189, 16
        %v454 = vrot.slane %v452, 4
        %v455 = vor.u32 %v454, %v450
        %v456 = vrot.slane %v455, 4
        %v458 = vshll.u32 %v212, 16
        %v460 = vrot.slane %v458, 5
        %v461 = vsel %vm221, %v456, %v460
        %v463 = vshrl.u32 %v190, 16
        %v465 = vrot.slane %v463, 4
        %v466 = vshll.u32 %v190, 16
        %v468 = vrot.slane %v466, 5
        %v469 = vor.u32 %v465, %v468
        %v470 = vrot.slane %v469, 4
        %v472 = vshll.u32 %v191, 16
        %v474 = vrot.slane %v472, 5
        %v475 = vsel %vm221, %v470, %v474
        %v476 = vshrl.u32 %v191, 16
        %v478 = vrot.slane %v476, 4
        %v479 = vor.u32 %v478, %v474
        %v480 = vrot.slane %v479, 4
        %v482 = vshll.u32 %v213, 16
        %v484 = vrot.slane %v482, 5
        %v485 = vsel %vm221, %v480, %v484
        %v487 = vshrl.u32 %v192, 16
        %v489 = vrot.slane %v487, 4
        %v490 = vshll.u32 %v192, 16
        %v492 = vrot.slane %v490, 5
        %v493 = vor.u32 %v489, %v492
        %v494 = vrot.slane %v493, 4
        %v496 = vshll.u32 %v193, 16
        %v498 = vrot.slane %v496, 5
        %v499 = vsel %vm221, %v494, %v498
        %v500 = vshrl.u32 %v193, 16
        %v502 = vrot.slane %v500, 4
        %v503 = vor.u32 %v502, %v498
        %v504 = vrot.slane %v503, 4
        %v506 = vshll.u32 %v214, 16
        %v508 = vrot.slane %v506, 5
        %v509 = vsel %vm221, %v504, %v508
        %v511 = vshrl.u32 %v194, 16
        %v513 = vrot.slane %v511, 4
        %v514 = vshll.u32 %v194, 16
        %v516 = vrot.slane %v514, 5
        %v517 = vor.u32 %v513, %v516
        %v518 = vrot.slane %v517, 4
        %v520 = vshll.u32 %v195, 16
        %v522 = vrot.slane %v520, 5
        %v523 = vsel %vm221, %v518, %v522
        %v524 = vshrl.u32 %v195, 16
        %v526 = vrot.slane %v524, 4
        %v527 = vor.u32 %v526, %v522
        %v528 = vrot.slane %v527, 4
        %v530 = vshll.u32 %v215, 16
        %v532 = vrot.slane %v530, 5
        %v533 = vsel %vm221, %v528, %v532
        %v535 = vshrl.u32 %v196, 16
        %v537 = vrot.slane %v535, 4
        %v538 = vshll.u32 %v196, 16
        %v540 = vrot.slane %v538, 5
        %v541 = vor.u32 %v537, %v540
        %v542 = vrot.slane %v541, 4
        %v544 = vshll.u32 %v197, 16
        %v546 = vrot.slane %v544, 5
        %v547 = vsel %vm221, %v542, %v546
        %v548 = vshrl.u32 %v197, 16
        %v550 = vrot.slane %v548, 4
        %v551 = vor.u32 %v550, %v546
        %v552 = vrot.slane %v551, 4
        %v554 = vshll.u32 %v216, 16
        %v556 = vrot.slane %v554, 5
        %v557 = vsel %vm221, %v552, %v556
        %v559 = vshrl.u32 %v198, 16
        %v561 = vrot.slane %v559, 4
        %v562 = vshll.u32 %v198, 16
        %v564 = vrot.slane %v562, 5
        %v565 = vor.u32 %v561, %v564
        %v566 = vrot.slane %v565, 4
        %v568 = vshll.u32 %v199, 16
        %v570 = vrot.slane %v568, 5
        %v571 = vsel %vm221, %v566, %v570
        %v572 = vshrl.u32 %v199, 16
        %v574 = vrot.slane %v572, 4
        %v575 = vor.u32 %v574, %v570
        %v576 = vrot.slane %v575, 4
        %v578 = vshll.u32 %v217, 16
        %v580 = vrot.slane %v578, 5
        %v581 = vsel %vm221, %v576, %v580
        %v583 = vshrl.u32 %v200, 16
        %v585 = vrot.slane %v583, 4
        %v586 = vshll.u32 %v200, 16
        %v588 = vrot.slane %v586, 5
        %v589 = vor.u32 %v585, %v588
        %v590 = vrot.slane %v589, 4
        %v592 = vshll.u32 %v201, 16
        %v594 = vrot.slane %v592, 5
        %v595 = vsel %vm221, %v590, %v594
        %v596 = vshrl.u32 %v201, 16
        %v598 = vrot.slane %v596, 4
        %v599 = vor.u32 %v598, %v594
        %v600 = vrot.slane %v599, 4
        %v602 = vshll.u32 %v218, 16
        %v604 = vrot.slane %v602, 5
        %v605 = vsel %vm221, %v600, %v604
        %s606 = scalar_lea.vmem %s1, 2
        %v607 = vld [vmem:[%s606] sm:$0x3]
        %v608 = vunpack.c.l.b16 %v235
        %v609 = vunpack.c.l.b16 %v245
        %v610 = vunpack.c.l.b16 %v259
        %v611 = vunpack.c.l.b16 %v269
        %v612 = vunpack.c.l.b16 %v283
        %v613 = vunpack.c.l.b16 %v293
        %v614 = vunpack.c.l.b16 %v307
        %v615 = vunpack.c.l.b16 %v317
        %v616 = vunpack.c.l.b16 %v331
        %v617 = vunpack.c.l.b16 %v341
        %v618 = vunpack.c.l.b16 %v355
        %v619 = vunpack.c.l.b16 %v365
        %v620 = vunpack.c.l.b16 %v379
        %v621 = vunpack.c.l.b16 %v389
        %v622 = vunpack.c.l.b16 %v403
        %v623 = vunpack.c.l.b16 %v413
        %v624 = vunpack.c.l.b16 %v427
        %v625 = vunpack.c.l.b16 %v437
        %v626 = vunpack.c.l.b16 %v451
        %v627 = vunpack.c.l.b16 %v461
        %v628 = vunpack.c.l.b16 %v475
        %v629 = vunpack.c.l.b16 %v485
        %v630 = vunpack.c.l.b16 %v499
        %v631 = vunpack.c.l.b16 %v509
        %v632 = vunpack.c.l.b16 %v523
        %v633 = vunpack.c.l.b16 %v533
        %v634 = vunpack.c.l.b16 %v547
        %v635 = vunpack.c.l.b16 %v557
        %v636 = vunpack.c.l.b16 %v571
        %v637 = vunpack.c.l.b16 %v581
        %v638 = vunpack.c.l.b16 %v595
        %v639 = vunpack.c.l.b16 %v605
        %v640 = vpack.c.b16 %v609, %v608
        %v641 = vpack.c.b16 %v611, %v610
        %v642 = vpack.c.b16 %v613, %v612
        %v643 = vpack.c.b16 %v615, %v614
        %v644 = vpack.c.b16 %v617, %v616
        %v645 = vpack.c.b16 %v619, %v618
        %v646 = vpack.c.b16 %v621, %v620
        %v647 = vpack.c.b16 %v623, %v622
        %v648 = vpack.c.b16 %v625, %v624
        %v649 = vpack.c.b16 %v627, %v626
        %v650 = vpack.c.b16 %v629, %v628
        %v651 = vpack.c.b16 %v631, %v630
        %v652 = vpack.c.b16 %v633, %v632
        %v653 = vpack.c.b16 %v635, %v634
        %v654 = vpack.c.b16 %v637, %v636
        %v655 = vpack.c.b16 %v639, %v638
        %vm656 = vcmask 31744
        %v658 = vsel %vm656, %v640, 0
        %v661 = vsel %vm656, %v641, 0
        %v664 = vsel %vm656, %v642, 0
        %v667 = vsel %vm656, %v643, 0
        %v670 = vsel %vm656, %v644, 0
        %v673 = vsel %vm656, %v645, 0
        %v676 = vsel %vm656, %v646, 0
        %v679 = vsel %vm656, %v647, 0
        %v682 = vsel %vm656, %v648, 0
        %v685 = vsel %vm656, %v649, 0
        %v688 = vsel %vm656, %v650, 0
        %v691 = vsel %vm656, %v651, 0
        %v694 = vsel %vm656, %v652, 0
        %v697 = vsel %vm656, %v653, 0
        %v700 = vsel %vm656, %v654, 0
        %v703 = vsel %vm656, %v655, 0
        %vm705 = vcmask 1041408
        %v707 = vsel %vm705, %v607, 0
        %709 = vmatpush.bf16.msra.mxu0 0
        %710 = vmatpush.bf16.msra.mxu0 0
        %711 = vmatpush.bf16.msra.mxu0 0
        %712 = vmatpush.bf16.msra.mxu0 0
        %713 = vmatpush.bf16.msra.mxu0 0
        %714 = vmatpush.bf16.msra.mxu0 0
        %715 = vmatpush.bf16.msra.mxu0 0
        %716 = vmatpush.bf16.msra.mxu0 %v707
        %717 = vmatmul.bf16.gmra.mxu0 %v658
        %v718 = vpop.f32.mrf.mxu0
        %v719 = vadd.f32 0.0, %v718
        %v720 = vpop.f32.mrf.mxu0
        %v721 = vadd.f32 0.0, %v720
        %722 = vmatmul.bf16.gmra.mxu0 %v661
        %v723 = vpop.f32.mrf.mxu0
        %v724 = vadd.f32 0.0, %v723
        %v725 = vpop.f32.mrf.mxu0
        %v726 = vadd.f32 0.0, %v725
        %727 = vmatmul.bf16.gmra.mxu0 %v664
        %v728 = vpop.f32.mrf.mxu0
        %v729 = vadd.f32 0.0, %v728
        %v730 = vpop.f32.mrf.mxu0
        %v731 = vadd.f32 0.0, %v730
        %732 = vmatmul.bf16.gmra.mxu0 %v667
        %v733 = vpop.f32.mrf.mxu0
        %v734 = vadd.f32 0.0, %v733
        %v735 = vpop.f32.mrf.mxu0
        %v736 = vadd.f32 0.0, %v735
        %737 = vmatmul.bf16.gmra.mxu0 %v670
        %v738 = vpop.f32.mrf.mxu0
        %v739 = vadd.f32 0.0, %v738
        %v740 = vpop.f32.mrf.mxu0
        %v741 = vadd.f32 0.0, %v740
        %742 = vmatmul.bf16.gmra.mxu0 %v673
        %v743 = vpop.f32.mrf.mxu0
        %v744 = vadd.f32 0.0, %v743
        %v745 = vpop.f32.mrf.mxu0
        %v746 = vadd.f32 0.0, %v745
        %747 = vmatmul.bf16.gmra.mxu0 %v676
        %v748 = vpop.f32.mrf.mxu0
        %v749 = vadd.f32 0.0, %v748
        %v750 = vpop.f32.mrf.mxu0
        %v751 = vadd.f32 0.0, %v750
        %752 = vmatmul.bf16.gmra.mxu0 %v679
        %v753 = vpop.f32.mrf.mxu0
        %v754 = vadd.f32 0.0, %v753
        %v755 = vpop.f32.mrf.mxu0
        %v756 = vadd.f32 0.0, %v755
        %757 = vmatmul.bf16.gmra.mxu0 %v682
        %v758 = vpop.f32.mrf.mxu0
        %v759 = vadd.f32 0.0, %v758
        %v760 = vpop.f32.mrf.mxu0
        %v761 = vadd.f32 0.0, %v760
        %762 = vmatmul.bf16.gmra.mxu0 %v685
        %v763 = vpop.f32.mrf.mxu0
        %v764 = vadd.f32 0.0, %v763
        %v765 = vpop.f32.mrf.mxu0
        %v766 = vadd.f32 0.0, %v765
        %767 = vmatmul.bf16.gmra.mxu0 %v688
        %v768 = vpop.f32.mrf.mxu0
        %v769 = vadd.f32 0.0, %v768
        %v770 = vpop.f32.mrf.mxu0
        %v771 = vadd.f32 0.0, %v770
        %772 = vmatmul.bf16.gmra.mxu0 %v691
        %v773 = vpop.f32.mrf.mxu0
        %v774 = vadd.f32 0.0, %v773
        %v775 = vpop.f32.mrf.mxu0
        %v776 = vadd.f32 0.0, %v775
        %777 = vmatmul.bf16.gmra.mxu0 %v694
        %v778 = vpop.f32.mrf.mxu0
        %v779 = vadd.f32 0.0, %v778
        %v780 = vpop.f32.mrf.mxu0
        %v781 = vadd.f32 0.0, %v780
        %782 = vmatmul.bf16.gmra.mxu0 %v697
        %v783 = vpop.f32.mrf.mxu0
        %v784 = vadd.f32 0.0, %v783
        %v785 = vpop.f32.mrf.mxu0
        %v786 = vadd.f32 0.0, %v785
        %787 = vmatmul.bf16.gmra.mxu0 %v700
        %v788 = vpop.f32.mrf.mxu0
        %v789 = vadd.f32 0.0, %v788
        %v790 = vpop.f32.mrf.mxu0
        %v791 = vadd.f32 0.0, %v790
        %792 = vmatmul.bf16.gmra.mxu0 %v703
        %v793 = vpop.f32.mrf.mxu0
        %v794 = vadd.f32 0.0, %v793
        %v795 = vpop.f32.mrf.mxu0
        %v796 = vadd.f32 0.0, %v795
        %797 = vdwg.mxu0
        %v830 = vunpack.c.l.b16 %v170
        %v831 = vunpack.c.l.b16 %v171
        %v832 = vunpack.c.l.b16 %v172
        %v833 = vunpack.c.l.b16 %v173
        %v834 = vunpack.c.l.b16 %v174
        %v835 = vunpack.c.l.b16 %v175
        %v836 = vunpack.c.l.b16 %v176
        %v837 = vunpack.c.l.b16 %v177
        %v838 = vunpack.c.l.b16 %v178
        %v839 = vunpack.c.l.b16 %v179
        %v840 = vunpack.c.l.b16 %v180
        %v841 = vunpack.c.l.b16 %v181
        %v842 = vunpack.c.l.b16 %v182
        %v843 = vunpack.c.l.b16 %v183
        %v844 = vunpack.c.l.b16 %v184
        %v845 = vunpack.c.l.b16 %v185
        %v846 = vunpack.c.l.b16 %v186
        %v847 = vunpack.c.l.b16 %v187
        %v848 = vunpack.c.l.b16 %v188
        %v849 = vunpack.c.l.b16 %v189
        %v850 = vunpack.c.l.b16 %v190
        %v851 = vunpack.c.l.b16 %v191
        %v852 = vunpack.c.l.b16 %v192
        %v853 = vunpack.c.l.b16 %v193
        %v854 = vunpack.c.l.b16 %v194
        %v855 = vunpack.c.l.b16 %v195
        %v856 = vunpack.c.l.b16 %v196
        %v857 = vunpack.c.l.b16 %v197
        %v858 = vunpack.c.l.b16 %v198
        %v859 = vunpack.c.l.b16 %v199
        %v860 = vunpack.c.l.b16 %v200
        %v861 = vunpack.c.l.b16 %v201
        %v862 = vpack.c.b16 %v831, %v830
        %v863 = vpack.c.b16 %v833, %v832
        %v864 = vpack.c.b16 %v835, %v834
        %v865 = vpack.c.b16 %v837, %v836
        %v866 = vpack.c.b16 %v839, %v838
        %v867 = vpack.c.b16 %v841, %v840
        %v868 = vpack.c.b16 %v843, %v842
        %v869 = vpack.c.b16 %v845, %v844
        %v870 = vpack.c.b16 %v847, %v846
        %v871 = vpack.c.b16 %v849, %v848
        %v872 = vpack.c.b16 %v851, %v850
        %v873 = vpack.c.b16 %v853, %v852
        %v874 = vpack.c.b16 %v855, %v854
        %v875 = vpack.c.b16 %v857, %v856
        %v876 = vpack.c.b16 %v859, %v858
        %v877 = vpack.c.b16 %v861, %v860
        %v879 = vsel %vm656, %v862, 0
        %v882 = vsel %vm656, %v863, 0
        %v885 = vsel %vm656, %v864, 0
        %v888 = vsel %vm656, %v865, 0
        %v891 = vsel %vm656, %v866, 0
        %v894 = vsel %vm656, %v867, 0
        %v897 = vsel %vm656, %v868, 0
        %v900 = vsel %vm656, %v869, 0
        %v903 = vsel %vm656, %v870, 0
        %v906 = vsel %vm656, %v871, 0
        %v909 = vsel %vm656, %v872, 0
        %v912 = vsel %vm656, %v873, 0
        %v915 = vsel %vm656, %v874, 0
        %v918 = vsel %vm656, %v875, 0
        %v921 = vsel %vm656, %v876, 0
        %v924 = vsel %vm656, %v877, 0
        %v927 = vsel %vm705, %v202, 0
        %929 = vmatpush.bf16.msra.mxu0 0
        %930 = vmatpush.bf16.msra.mxu0 0
        %931 = vmatpush.bf16.msra.mxu0 0
        %932 = vmatpush.bf16.msra.mxu0 0
        %933 = vmatpush.bf16.msra.mxu0 0
        %934 = vmatpush.bf16.msra.mxu0 0
        %935 = vmatpush.bf16.msra.mxu0 0
        %936 = vmatpush.bf16.msra.mxu0 %v927
        %937 = vmatmul.bf16.gmra.mxu0 %v879
        %v938 = vpop.f32.mrf.mxu0
        %v939 = vadd.f32 %v719, %v938
        %v940 = vpop.f32.mrf.mxu0
        %v941 = vadd.f32 %v721, %v940
        %942 = vmatmul.bf16.gmra.mxu0 %v882
        %v943 = vpop.f32.mrf.mxu0
        %v944 = vadd.f32 %v724, %v943
        %v945 = vpop.f32.mrf.mxu0
        %v946 = vadd.f32 %v726, %v945
        %947 = vmatmul.bf16.gmra.mxu0 %v885
        %v948 = vpop.f32.mrf.mxu0
        %v949 = vadd.f32 %v729, %v948
        %v950 = vpop.f32.mrf.mxu0
        %v951 = vadd.f32 %v731, %v950
        %952 = vmatmul.bf16.gmra.mxu0 %v888
        %v953 = vpop.f32.mrf.mxu0
        %v954 = vadd.f32 %v734, %v953
        %v955 = vpop.f32.mrf.mxu0
        %v956 = vadd.f32 %v736, %v955
        %957 = vmatmul.bf16.gmra.mxu0 %v891
        %v958 = vpop.f32.mrf.mxu0
        %v959 = vadd.f32 %v739, %v958
        %v960 = vpop.f32.mrf.mxu0
        %v961 = vadd.f32 %v741, %v960
        %962 = vmatmul.bf16.gmra.mxu0 %v894
        %v963 = vpop.f32.mrf.mxu0
        %v964 = vadd.f32 %v744, %v963
        %v965 = vpop.f32.mrf.mxu0
        %v966 = vadd.f32 %v746, %v965
        %967 = vmatmul.bf16.gmra.mxu0 %v897
        %v968 = vpop.f32.mrf.mxu0
        %v969 = vadd.f32 %v749, %v968
        %v970 = vpop.f32.mrf.mxu0
        %v971 = vadd.f32 %v751, %v970
        %972 = vmatmul.bf16.gmra.mxu0 %v900
        %v973 = vpop.f32.mrf.mxu0
        %v974 = vadd.f32 %v754, %v973
        %v975 = vpop.f32.mrf.mxu0
        %v976 = vadd.f32 %v756, %v975
        %977 = vmatmul.bf16.gmra.mxu0 %v903
        %v978 = vpop.f32.mrf.mxu0
        %v979 = vadd.f32 %v759, %v978
        %v980 = vpop.f32.mrf.mxu0
        %v981 = vadd.f32 %v761, %v980
        %982 = vmatmul.bf16.gmra.mxu0 %v906
        %v983 = vpop.f32.mrf.mxu0
        %v984 = vadd.f32 %v764, %v983
        %v985 = vpop.f32.mrf.mxu0
        %v986 = vadd.f32 %v766, %v985
        %987 = vmatmul.bf16.gmra.mxu0 %v909
        %v988 = vpop.f32.mrf.mxu0
        %v989 = vadd.f32 %v769, %v988
        %v990 = vpop.f32.mrf.mxu0
        %v991 = vadd.f32 %v771, %v990
        %992 = vmatmul.bf16.gmra.mxu0 %v912
        %v993 = vpop.f32.mrf.mxu0
        %v994 = vadd.f32 %v774, %v993
        %v995 = vpop.f32.mrf.mxu0
        %v996 = vadd.f32 %v776, %v995
        %997 = vmatmul.bf16.gmra.mxu0 %v915
        %v998 = vpop.f32.mrf.mxu0
        %v999 = vadd.f32 %v779, %v998
        %v1000 = vpop.f32.mrf.mxu0
        %v1001 = vadd.f32 %v781, %v1000
        %1002 = vmatmul.bf16.gmra.mxu0 %v918
        %v1003 = vpop.f32.mrf.mxu0
        %v1004 = vadd.f32 %v784, %v1003
        %v1005 = vpop.f32.mrf.mxu0
        %v1006 = vadd.f32 %v786, %v1005
        %1007 = vmatmul.bf16.gmra.mxu0 %v921
        %v1008 = vpop.f32.mrf.mxu0
        %v1009 = vadd.f32 %v789, %v1008
        %v1010 = vpop.f32.mrf.mxu0
        %v1011 = vadd.f32 %v791, %v1010
        %1012 = vmatmul.bf16.gmra.mxu0 %v924
        %v1013 = vpop.f32.mrf.mxu0
        %v1014 = vadd.f32 %v794, %v1013
        %v1015 = vpop.f32.mrf.mxu0
        %v1016 = vadd.f32 %v796, %v1015
        %1017 = vdwg.mxu0
        %v1018 = vld [vmem:[%s168] sm:$0xe]
        %v1019 = vld [vmem:[%s168 + $0xc] sm:$0xe]
        %v1020 = vld [vmem:[%s168 + $0x18] sm:$0xe]
        %v1021 = vld [vmem:[%s168 + $0x24] sm:$0xe]
        %v1022 = vld [vmem:[%s168 + $0x30] sm:$0xe]
        %v1023 = vld [vmem:[%s168 + $0x3c] sm:$0xe]
        %v1024 = vld [vmem:[%s168 + $0x48] sm:$0xe]
        %v1025 = vld [vmem:[%s168 + $0x54] sm:$0xe]
        %v1026 = vld [vmem:[%s168 + $0x60] sm:$0xe]
        %v1027 = vld [vmem:[%s168 + $0x6c] sm:$0xe]
        %v1028 = vld [vmem:[%s168 + $0x78] sm:$0xe]
        %v1029 = vld [vmem:[%s168 + $0x84] sm:$0xe]
        %v1030 = vld [vmem:[%s168 + $0x90] sm:$0xe]
        %v1031 = vld [vmem:[%s168 + $0x9c] sm:$0xe]
        %v1032 = vld [vmem:[%s168 + $0xa8] sm:$0xe]
        %v1033 = vld [vmem:[%s168 + $0xb4] sm:$0xe]
        %vm1066 = vcmask 1042432
        %vm1067 = vcmask 1046532
        %vm1068 = vmor %vm1066, %vm1067
        %v1069 = vrot.slane %v1018, 5
        %v1070 = vrot.slane %v1069, 4
        %v1071 = vrot.slane %v171, 5
        %v1072 = vsel %vm1068, %v1070, %v1071
        %v1073 = vrot.slane %v1071, 4
        %v1074 = vrot.slane %v203, 5
        %v1075 = vsel %vm1068, %v1073, %v1074
        %v1076 = vrot.slane %v1019, 5
        %v1077 = vrot.slane %v1076, 4
        %v1078 = vrot.slane %v173, 5
        %v1079 = vsel %vm1068, %v1077, %v1078
        %v1080 = vrot.slane %v1078, 4
        %v1081 = vrot.slane %v204, 5
        %v1082 = vsel %vm1068, %v1080, %v1081
        %v1083 = vrot.slane %v1020, 5
        %v1084 = vrot.slane %v1083, 4
        %v1085 = vrot.slane %v175, 5
        %v1086 = vsel %vm1068, %v1084, %v1085
        %v1087 = vrot.slane %v1085, 4
        %v1088 = vrot.slane %v205, 5
        %v1089 = vsel %vm1068, %v1087, %v1088
        %v1090 = vrot.slane %v1021, 5
        %v1091 = vrot.slane %v1090, 4
        %v1092 = vrot.slane %v177, 5
        %v1093 = vsel %vm1068, %v1091, %v1092
        %v1094 = vrot.slane %v1092, 4
        %v1095 = vrot.slane %v206, 5
        %v1096 = vsel %vm1068, %v1094, %v1095
        %v1097 = vrot.slane %v1022, 5
        %v1098 = vrot.slane %v1097, 4
        %v1099 = vrot.slane %v179, 5
        %v1100 = vsel %vm1068, %v1098, %v1099
        %v1101 = vrot.slane %v1099, 4
        %v1102 = vrot.slane %v207, 5
        %v1103 = vsel %vm1068, %v1101, %v1102
        %v1104 = vrot.slane %v1023, 5
        %v1105 = vrot.slane %v1104, 4
        %v1106 = vrot.slane %v181, 5
        %v1107 = vsel %vm1068, %v1105, %v1106
        %v1108 = vrot.slane %v1106, 4
        %v1109 = vrot.slane %v208, 5
        %v1110 = vsel %vm1068, %v1108, %v1109
        %v1111 = vrot.slane %v1024, 5
        %v1112 = vrot.slane %v1111, 4
        %v1113 = vrot.slane %v183, 5
        %v1114 = vsel %vm1068, %v1112, %v1113
        %v1115 = vrot.slane %v1113, 4
        %v1116 = vrot.slane %v209, 5
        %v1117 = vsel %vm1068, %v1115, %v1116
        %v1118 = vrot.slane %v1025, 5
        %v1119 = vrot.slane %v1118, 4
        %v1120 = vrot.slane %v185, 5
        %v1121 = vsel %vm1068, %v1119, %v1120
        %v1122 = vrot.slane %v1120, 4
        %v1123 = vrot.slane %v210, 5
        %v1124 = vsel %vm1068, %v1122, %v1123
        %v1125 = vrot.slane %v1026, 5
        %v1126 = vrot.slane %v1125, 4
        %v1127 = vrot.slane %v187, 5
        %v1128 = vsel %vm1068, %v1126, %v1127
        %v1129 = vrot.slane %v1127, 4
        %v1130 = vrot.slane %v211, 5
        %v1131 = vsel %vm1068, %v1129, %v1130
        %v1132 = vrot.slane %v1027, 5
        %v1133 = vrot.slane %v1132, 4
        %v1134 = vrot.slane %v189, 5
        %v1135 = vsel %vm1068, %v1133, %v1134
        %v1136 = vrot.slane %v1134, 4
        %v1137 = vrot.slane %v212, 5
        %v1138 = vsel %vm1068, %v1136, %v1137
        %v1139 = vrot.slane %v1028, 5
        %v1140 = vrot.slane %v1139, 4
        %v1141 = vrot.slane %v191, 5
        %v1142 = vsel %vm1068, %v1140, %v1141
        %v1143 = vrot.slane %v1141, 4
        %v1144 = vrot.slane %v213, 5
        %v1145 = vsel %vm1068, %v1143, %v1144
        %v1146 = vrot.slane %v1029, 5
        %v1147 = vrot.slane %v1146, 4
        %v1148 = vrot.slane %v193, 5
        %v1149 = vsel %vm1068, %v1147, %v1148
        %v1150 = vrot.slane %v1148, 4
        %v1151 = vrot.slane %v214, 5
        %v1152 = vsel %vm1068, %v1150, %v1151
        %v1153 = vrot.slane %v1030, 5
        %v1154 = vrot.slane %v1153, 4
        %v1155 = vrot.slane %v195, 5
        %v1156 = vsel %vm1068, %v1154, %v1155
        %v1157 = vrot.slane %v1155, 4
        %v1158 = vrot.slane %v215, 5
        %v1159 = vsel %vm1068, %v1157, %v1158
        %v1160 = vrot.slane %v1031, 5
        %v1161 = vrot.slane %v1160, 4
        %v1162 = vrot.slane %v197, 5
        %v1163 = vsel %vm1068, %v1161, %v1162
        %v1164 = vrot.slane %v1162, 4
        %v1165 = vrot.slane %v216, 5
        %v1166 = vsel %vm1068, %v1164, %v1165
        %v1167 = vrot.slane %v1032, 5
        %v1168 = vrot.slane %v1167, 4
        %v1169 = vrot.slane %v199, 5
        %v1170 = vsel %vm1068, %v1168, %v1169
        %v1171 = vrot.slane %v1169, 4
        %v1172 = vrot.slane %v217, 5
        %v1173 = vsel %vm1068, %v1171, %v1172
        %v1174 = vrot.slane %v1033, 5
        %v1175 = vrot.slane %v1174, 4
        %v1176 = vrot.slane %v201, 5
        %v1177 = vsel %vm1068, %v1175, %v1176
        %v1178 = vrot.slane %v1176, 4
        %v1179 = vrot.slane %v218, 5
        %v1180 = vsel %vm1068, %v1178, %v1179
        %s1181 = scalar_lea.vmem %s1, 4
        %v1182 = vld [vmem:[%s1181] sm:$0x3]
        %v1183 = vunpack.c.l.b16 %v1072
        %v1184 = vunpack.c.l.b16 %v1075
        %v1185 = vunpack.c.l.b16 %v1079
        %v1186 = vunpack.c.l.b16 %v1082
        %v1187 = vunpack.c.l.b16 %v1086
        %v1188 = vunpack.c.l.b16 %v1089
        %v1189 = vunpack.c.l.b16 %v1093
        %v1190 = vunpack.c.l.b16 %v1096
        %v1191 = vunpack.c.l.b16 %v1100
        %v1192 = vunpack.c.l.b16 %v1103
        %v1193 = vunpack.c.l.b16 %v1107
        %v1194 = vunpack.c.l.b16 %v1110
        %v1195 = vunpack.c.l.b16 %v1114
        %v1196 = vunpack.c.l.b16 %v1117
        %v1197 = vunpack.c.l.b16 %v1121
        %v1198 = vunpack.c.l.b16 %v1124
        %v1199 = vunpack.c.l.b16 %v1128
        %v1200 = vunpack.c.l.b16 %v1131
        %v1201 = vunpack.c.l.b16 %v1135
        %v1202 = vunpack.c.l.b16 %v1138
        %v1203 = vunpack.c.l.b16 %v1142
        %v1204 = vunpack.c.l.b16 %v1145
        %v1205 = vunpack.c.l.b16 %v1149
        %v1206 = vunpack.c.l.b16 %v1152
        %v1207 = vunpack.c.l.b16 %v1156
        %v1208 = vunpack.c.l.b16 %v1159
        %v1209 = vunpack.c.l.b16 %v1163
        %v1210 = vunpack.c.l.b16 %v1166
        %v1211 = vunpack.c.l.b16 %v1170
        %v1212 = vunpack.c.l.b16 %v1173
        %v1213 = vunpack.c.l.b16 %v1177
        %v1214 = vunpack.c.l.b16 %v1180
        %v1215 = vpack.c.b16 %v1184, %v1183
        %v1216 = vpack.c.b16 %v1186, %v1185
        %v1217 = vpack.c.b16 %v1188, %v1187
        %v1218 = vpack.c.b16 %v1190, %v1189
        %v1219 = vpack.c.b16 %v1192, %v1191
        %v1220 = vpack.c.b16 %v1194, %v1193
        %v1221 = vpack.c.b16 %v1196, %v1195
        %v1222 = vpack.c.b16 %v1198, %v1197
        %v1223 = vpack.c.b16 %v1200, %v1199
        %v1224 = vpack.c.b16 %v1202, %v1201
        %v1225 = vpack.c.b16 %v1204, %v1203
        %v1226 = vpack.c.b16 %v1206, %v1205
        %v1227 = vpack.c.b16 %v1208, %v1207
        %v1228 = vpack.c.b16 %v1210, %v1209
        %v1229 = vpack.c.b16 %v1212, %v1211
        %v1230 = vpack.c.b16 %v1214, %v1213
        %v1232 = vsel %vm656, %v1215, 0
        %v1235 = vsel %vm656, %v1216, 0
        %v1238 = vsel %vm656, %v1217, 0
        %v1241 = vsel %vm656, %v1218, 0
        %v1244 = vsel %vm656, %v1219, 0
        %v1247 = vsel %vm656, %v1220, 0
        %v1250 = vsel %vm656, %v1221, 0
        %v1253 = vsel %vm656, %v1222, 0
        %v1256 = vsel %vm656, %v1223, 0
        %v1259 = vsel %vm656, %v1224, 0
        %v1262 = vsel %vm656, %v1225, 0
        %v1265 = vsel %vm656, %v1226, 0
        %v1268 = vsel %vm656, %v1227, 0
        %v1271 = vsel %vm656, %v1228, 0
        %v1274 = vsel %vm656, %v1229, 0
        %v1277 = vsel %vm656, %v1230, 0
        %v1280 = vsel %vm705, %v1182, 0
        %1282 = vmatpush.bf16.msra.mxu0 0
        %1283 = vmatpush.bf16.msra.mxu0 0
        %1284 = vmatpush.bf16.msra.mxu0 0
        %1285 = vmatpush.bf16.msra.mxu0 0
        %1286 = vmatpush.bf16.msra.mxu0 0
        %1287 = vmatpush.bf16.msra.mxu0 0
        %1288 = vmatpush.bf16.msra.mxu0 0
        %1289 = vmatpush.bf16.msra.mxu0 %v1280
        %1290 = vmatmul.bf16.gmra.mxu0 %v1232
        %v1291 = vpop.f32.mrf.mxu0
        %v1292 = vadd.f32 0.0, %v1291
        %v1293 = vpop.f32.mrf.mxu0
        %v1294 = vadd.f32 0.0, %v1293
        %1295 = vmatmul.bf16.gmra.mxu0 %v1235
        %v1296 = vpop.f32.mrf.mxu0
        %v1297 = vadd.f32 0.0, %v1296
        %v1298 = vpop.f32.mrf.mxu0
        %v1299 = vadd.f32 0.0, %v1298
        %1300 = vmatmul.bf16.gmra.mxu0 %v1238
        %v1301 = vpop.f32.mrf.mxu0
        %v1302 = vadd.f32 0.0, %v1301
        %v1303 = vpop.f32.mrf.mxu0
        %v1304 = vadd.f32 0.0, %v1303
        %1305 = vmatmul.bf16.gmra.mxu0 %v1241
        %v1306 = vpop.f32.mrf.mxu0
        %v1307 = vadd.f32 0.0, %v1306
        %v1308 = vpop.f32.mrf.mxu0
        %v1309 = vadd.f32 0.0, %v1308
        %1310 = vmatmul.bf16.gmra.mxu0 %v1244
        %v1311 = vpop.f32.mrf.mxu0
        %v1312 = vadd.f32 0.0, %v1311
        %v1313 = vpop.f32.mrf.mxu0
        %v1314 = vadd.f32 0.0, %v1313
        %1315 = vmatmul.bf16.gmra.mxu0 %v1247
        %v1316 = vpop.f32.mrf.mxu0
        %v1317 = vadd.f32 0.0, %v1316
        %v1318 = vpop.f32.mrf.mxu0
        %v1319 = vadd.f32 0.0, %v1318
        %1320 = vmatmul.bf16.gmra.mxu0 %v1250
        %v1321 = vpop.f32.mrf.mxu0
        %v1322 = vadd.f32 0.0, %v1321
        %v1323 = vpop.f32.mrf.mxu0
        %v1324 = vadd.f32 0.0, %v1323
        %1325 = vmatmul.bf16.gmra.mxu0 %v1253
        %v1326 = vpop.f32.mrf.mxu0
        %v1327 = vadd.f32 0.0, %v1326
        %v1328 = vpop.f32.mrf.mxu0
        %v1329 = vadd.f32 0.0, %v1328
        %1330 = vmatmul.bf16.gmra.mxu0 %v1256
        %v1331 = vpop.f32.mrf.mxu0
        %v1332 = vadd.f32 0.0, %v1331
        %v1333 = vpop.f32.mrf.mxu0
        %v1334 = vadd.f32 0.0, %v1333
        %1335 = vmatmul.bf16.gmra.mxu0 %v1259
        %v1336 = vpop.f32.mrf.mxu0
        %v1337 = vadd.f32 0.0, %v1336
        %v1338 = vpop.f32.mrf.mxu0
        %v1339 = vadd.f32 0.0, %v1338
        %1340 = vmatmul.bf16.gmra.mxu0 %v1262
        %v1341 = vpop.f32.mrf.mxu0
        %v1342 = vadd.f32 0.0, %v1341
        %v1343 = vpop.f32.mrf.mxu0
        %v1344 = vadd.f32 0.0, %v1343
        %1345 = vmatmul.bf16.gmra.mxu0 %v1265
        %v1346 = vpop.f32.mrf.mxu0
        %v1347 = vadd.f32 0.0, %v1346
        %v1348 = vpop.f32.mrf.mxu0
        %v1349 = vadd.f32 0.0, %v1348
        %1350 = vmatmul.bf16.gmra.mxu0 %v1268
        %v1351 = vpop.f32.mrf.mxu0
        %v1352 = vadd.f32 0.0, %v1351
        %v1353 = vpop.f32.mrf.mxu0
        %v1354 = vadd.f32 0.0, %v1353
        %1355 = vmatmul.bf16.gmra.mxu0 %v1271
        %v1356 = vpop.f32.mrf.mxu0
        %v1357 = vadd.f32 0.0, %v1356
        %v1358 = vpop.f32.mrf.mxu0
        %v1359 = vadd.f32 0.0, %v1358
        %1360 = vmatmul.bf16.gmra.mxu0 %v1274
        %v1361 = vpop.f32.mrf.mxu0
        %v1362 = vadd.f32 0.0, %v1361
        %v1363 = vpop.f32.mrf.mxu0
        %v1364 = vadd.f32 0.0, %v1363
        %1365 = vmatmul.bf16.gmra.mxu0 %v1277
        %v1366 = vpop.f32.mrf.mxu0
        %v1367 = vadd.f32 0.0, %v1366
        %v1368 = vpop.f32.mrf.mxu0
        %v1369 = vadd.f32 0.0, %v1368
        %1370 = vdwg.mxu0
        %v1371 = vadd.f32 %v939, %v1292
        %v1372 = vadd.f32 %v941, %v1294
        %v1373 = vadd.f32 %v944, %v1297
        %v1374 = vadd.f32 %v946, %v1299
        %v1375 = vadd.f32 %v949, %v1302
        %v1376 = vadd.f32 %v951, %v1304
        %v1377 = vadd.f32 %v954, %v1307
        %v1378 = vadd.f32 %v956, %v1309
        %v1379 = vadd.f32 %v959, %v1312
        %v1380 = vadd.f32 %v961, %v1314
        %v1381 = vadd.f32 %v964, %v1317
        %v1382 = vadd.f32 %v966, %v1319
        %v1383 = vadd.f32 %v969, %v1322
        %v1384 = vadd.f32 %v971, %v1324
        %v1385 = vadd.f32 %v974, %v1327
        %v1386 = vadd.f32 %v976, %v1329
        %v1387 = vadd.f32 %v979, %v1332
        %v1388 = vadd.f32 %v981, %v1334
        %v1389 = vadd.f32 %v984, %v1337
        %v1390 = vadd.f32 %v986, %v1339
        %v1391 = vadd.f32 %v989, %v1342
        %v1392 = vadd.f32 %v991, %v1344
        %v1393 = vadd.f32 %v994, %v1347
        %v1394 = vadd.f32 %v996, %v1349
        %v1395 = vadd.f32 %v999, %v1352
        %v1396 = vadd.f32 %v1001, %v1354
        %v1397 = vadd.f32 %v1004, %v1357
        %v1398 = vadd.f32 %v1006, %v1359
        %v1399 = vadd.f32 %v1009, %v1362
        %v1400 = vadd.f32 %v1011, %v1364
        %v1401 = vadd.f32 %v1014, %v1367
        %v1402 = vadd.f32 %v1016, %v1369
        %s1403 = scalar_lea.vmem %s168, 12
        %v1404 = vld [vmem:[%s1403] sm:$0xf]
        %v1405 = vld [vmem:[%s1403 + $0x4] sm:$0xf]
        %v1406 = vld [vmem:[%s1403 + $0xc] sm:$0xf]
        %v1407 = vld [vmem:[%s1403 + $0x10] sm:$0xf]
        %v1408 = vld [vmem:[%s1403 + $0x18] sm:$0xf]
        %v1409 = vld [vmem:[%s1403 + $0x1c] sm:$0xf]
        %v1410 = vld [vmem:[%s1403 + $0x24] sm:$0xf]
        %v1411 = vld [vmem:[%s1403 + $0x28] sm:$0xf]
        %v1412 = vld [vmem:[%s1403 + $0x30] sm:$0xf]
        %v1413 = vld [vmem:[%s1403 + $0x34] sm:$0xf]
        %v1414 = vld [vmem:[%s1403 + $0x3c] sm:$0xf]
        %v1415 = vld [vmem:[%s1403 + $0x40] sm:$0xf]
        %v1416 = vld [vmem:[%s1403 + $0x48] sm:$0xf]
        %v1417 = vld [vmem:[%s1403 + $0x4c] sm:$0xf]
        %v1418 = vld [vmem:[%s1403 + $0x54] sm:$0xf]
        %v1419 = vld [vmem:[%s1403 + $0x58] sm:$0xf]
        %v1420 = vld [vmem:[%s1403 + $0x60] sm:$0xf]
        %v1421 = vld [vmem:[%s1403 + $0x64] sm:$0xf]
        %v1422 = vld [vmem:[%s1403 + $0x6c] sm:$0xf]
        %v1423 = vld [vmem:[%s1403 + $0x70] sm:$0xf]
        %v1424 = vld [vmem:[%s1403 + $0x78] sm:$0xf]
        %v1425 = vld [vmem:[%s1403 + $0x7c] sm:$0xf]
        %v1426 = vld [vmem:[%s1403 + $0x84] sm:$0xf]
        %v1427 = vld [vmem:[%s1403 + $0x88] sm:$0xf]
        %v1428 = vld [vmem:[%s1403 + $0x90] sm:$0xf]
        %v1429 = vld [vmem:[%s1403 + $0x94] sm:$0xf]
        %v1430 = vld [vmem:[%s1403 + $0x9c] sm:$0xf]
        %v1431 = vld [vmem:[%s1403 + $0xa0] sm:$0xf]
        %v1432 = vld [vmem:[%s1403 + $0xa8] sm:$0xf]
        %v1433 = vld [vmem:[%s1403 + $0xac] sm:$0xf]
        %v1434 = vld [vmem:[%s1403 + $0xb4] sm:$0xf]
        %v1435 = vld [vmem:[%s1403 + $0xb8] sm:$0xf]
        %s1436 = scalar_lea.vmem %s1, 6
        %v1437 = vld [vmem:[%s1436] sm:$0x3]
        %v1470 = vunpack.c.l.b16 %v1404
        %v1471 = vunpack.c.l.b16 %v1405
        %v1472 = vunpack.c.l.b16 %v1406
        %v1473 = vunpack.c.l.b16 %v1407
        %v1474 = vunpack.c.l.b16 %v1408
        %v1475 = vunpack.c.l.b16 %v1409
        %v1476 = vunpack.c.l.b16 %v1410
        %v1477 = vunpack.c.l.b16 %v1411
        %v1478 = vunpack.c.l.b16 %v1412
        %v1479 = vunpack.c.l.b16 %v1413
        %v1480 = vunpack.c.l.b16 %v1414
        %v1481 = vunpack.c.l.b16 %v1415
        %v1482 = vunpack.c.l.b16 %v1416
        %v1483 = vunpack.c.l.b16 %v1417
        %v1484 = vunpack.c.l.b16 %v1418
        %v1485 = vunpack.c.l.b16 %v1419
        %v1486 = vunpack.c.l.b16 %v1420
        %v1487 = vunpack.c.l.b16 %v1421
        %v1488 = vunpack.c.l.b16 %v1422
        %v1489 = vunpack.c.l.b16 %v1423
        %v1490 = vunpack.c.l.b16 %v1424
        %v1491 = vunpack.c.l.b16 %v1425
        %v1492 = vunpack.c.l.b16 %v1426
        %v1493 = vunpack.c.l.b16 %v1427
        %v1494 = vunpack.c.l.b16 %v1428
        %v1495 = vunpack.c.l.b16 %v1429
        %v1496 = vunpack.c.l.b16 %v1430
        %v1497 = vunpack.c.l.b16 %v1431
        %v1498 = vunpack.c.l.b16 %v1432
        %v1499 = vunpack.c.l.b16 %v1433
        %v1500 = vunpack.c.l.b16 %v1434
        %v1501 = vunpack.c.l.b16 %v1435
        %v1502 = vpack.c.b16 %v1471, %v1470
        %v1503 = vpack.c.b16 %v1473, %v1472
        %v1504 = vpack.c.b16 %v1475, %v1474
        %v1505 = vpack.c.b16 %v1477, %v1476
        %v1506 = vpack.c.b16 %v1479, %v1478
        %v1507 = vpack.c.b16 %v1481, %v1480
        %v1508 = vpack.c.b16 %v1483, %v1482
        %v1509 = vpack.c.b16 %v1485, %v1484
        %v1510 = vpack.c.b16 %v1487, %v1486
        %v1511 = vpack.c.b16 %v1489, %v1488
        %v1512 = vpack.c.b16 %v1491, %v1490
        %v1513 = vpack.c.b16 %v1493, %v1492
        %v1514 = vpack.c.b16 %v1495, %v1494
        %v1515 = vpack.c.b16 %v1497, %v1496
        %v1516 = vpack.c.b16 %v1499, %v1498
        %v1517 = vpack.c.b16 %v1501, %v1500
        %v1519 = vsel %vm656, %v1502, 0
        %v1522 = vsel %vm656, %v1503, 0
        %v1525 = vsel %vm656, %v1504, 0
        %v1528 = vsel %vm656, %v1505, 0
        %v1531 = vsel %vm656, %v1506, 0
        %v1534 = vsel %vm656, %v1507, 0
        %v1537 = vsel %vm656, %v1508, 0
        %v1540 = vsel %vm656, %v1509, 0
        %v1543 = vsel %vm656, %v1510, 0
        %v1546 = vsel %vm656, %v1511, 0
        %v1549 = vsel %vm656, %v1512, 0
        %v1552 = vsel %vm656, %v1513, 0
        %v1555 = vsel %vm656, %v1514, 0
        %v1558 = vsel %vm656, %v1515, 0
        %v1561 = vsel %vm656, %v1516, 0
        %v1564 = vsel %vm656, %v1517, 0
        %v1567 = vsel %vm705, %v1437, 0
        %1569 = vmatpush.bf16.msra.mxu0 0
        %1570 = vmatpush.bf16.msra.mxu0 0
        %1571 = vmatpush.bf16.msra.mxu0 0
        %1572 = vmatpush.bf16.msra.mxu0 0
        %1573 = vmatpush.bf16.msra.mxu0 0
        %1574 = vmatpush.bf16.msra.mxu0 0
        %1575 = vmatpush.bf16.msra.mxu0 0
        %1576 = vmatpush.bf16.msra.mxu0 %v1567
        %1577 = vmatmul.bf16.gmra.mxu0 %v1519
        %v1578 = vpop.f32.mrf.mxu0
        %v1579 = vadd.f32 0.0, %v1578
        %v1580 = vpop.f32.mrf.mxu0
        %v1581 = vadd.f32 0.0, %v1580
        %1582 = vmatmul.bf16.gmra.mxu0 %v1522
        %v1583 = vpop.f32.mrf.mxu0
        %v1584 = vadd.f32 0.0, %v1583
        %v1585 = vpop.f32.mrf.mxu0
        %v1586 = vadd.f32 0.0, %v1585
        %1587 = vmatmul.bf16.gmra.mxu0 %v1525
        %v1588 = vpop.f32.mrf.mxu0
        %v1589 = vadd.f32 0.0, %v1588
        %v1590 = vpop.f32.mrf.mxu0
        %v1591 = vadd.f32 0.0, %v1590
        %1592 = vmatmul.bf16.gmra.mxu0 %v1528
        %v1593 = vpop.f32.mrf.mxu0
        %v1594 = vadd.f32 0.0, %v1593
        %v1595 = vpop.f32.mrf.mxu0
        %v1596 = vadd.f32 0.0, %v1595
        %1597 = vmatmul.bf16.gmra.mxu0 %v1531
        %v1598 = vpop.f32.mrf.mxu0
        %v1599 = vadd.f32 0.0, %v1598
        %v1600 = vpop.f32.mrf.mxu0
        %v1601 = vadd.f32 0.0, %v1600
        %1602 = vmatmul.bf16.gmra.mxu0 %v1534
        %v1603 = vpop.f32.mrf.mxu0
        %v1604 = vadd.f32 0.0, %v1603
        %v1605 = vpop.f32.mrf.mxu0
        %v1606 = vadd.f32 0.0, %v1605
        %1607 = vmatmul.bf16.gmra.mxu0 %v1537
        %v1608 = vpop.f32.mrf.mxu0
        %v1609 = vadd.f32 0.0, %v1608
        %v1610 = vpop.f32.mrf.mxu0
        %v1611 = vadd.f32 0.0, %v1610
        %1612 = vmatmul.bf16.gmra.mxu0 %v1540
        %v1613 = vpop.f32.mrf.mxu0
        %v1614 = vadd.f32 0.0, %v1613
        %v1615 = vpop.f32.mrf.mxu0
        %v1616 = vadd.f32 0.0, %v1615
        %1617 = vmatmul.bf16.gmra.mxu0 %v1543
        %v1618 = vpop.f32.mrf.mxu0
        %v1619 = vadd.f32 0.0, %v1618
        %v1620 = vpop.f32.mrf.mxu0
        %v1621 = vadd.f32 0.0, %v1620
        %1622 = vmatmul.bf16.gmra.mxu0 %v1546
        %v1623 = vpop.f32.mrf.mxu0
        %v1624 = vadd.f32 0.0, %v1623
        %v1625 = vpop.f32.mrf.mxu0
        %v1626 = vadd.f32 0.0, %v1625
        %1627 = vmatmul.bf16.gmra.mxu0 %v1549
        %v1628 = vpop.f32.mrf.mxu0
        %v1629 = vadd.f32 0.0, %v1628
        %v1630 = vpop.f32.mrf.mxu0
        %v1631 = vadd.f32 0.0, %v1630
        %1632 = vmatmul.bf16.gmra.mxu0 %v1552
        %v1633 = vpop.f32.mrf.mxu0
        %v1634 = vadd.f32 0.0, %v1633
        %v1635 = vpop.f32.mrf.mxu0
        %v1636 = vadd.f32 0.0, %v1635
        %1637 = vmatmul.bf16.gmra.mxu0 %v1555
        %v1638 = vpop.f32.mrf.mxu0
        %v1639 = vadd.f32 0.0, %v1638
        %v1640 = vpop.f32.mrf.mxu0
        %v1641 = vadd.f32 0.0, %v1640
        %1642 = vmatmul.bf16.gmra.mxu0 %v1558
        %v1643 = vpop.f32.mrf.mxu0
        %v1644 = vadd.f32 0.0, %v1643
        %v1645 = vpop.f32.mrf.mxu0
        %v1646 = vadd.f32 0.0, %v1645
        %1647 = vmatmul.bf16.gmra.mxu0 %v1561
        %v1648 = vpop.f32.mrf.mxu0
        %v1649 = vadd.f32 0.0, %v1648
        %v1650 = vpop.f32.mrf.mxu0
        %v1651 = vadd.f32 0.0, %v1650
        %1652 = vmatmul.bf16.gmra.mxu0 %v1564
        %v1653 = vpop.f32.mrf.mxu0
        %v1654 = vadd.f32 0.0, %v1653
        %v1655 = vpop.f32.mrf.mxu0
        %v1656 = vadd.f32 0.0, %v1655
        %1657 = vdwg.mxu0
        %v1658 = vadd.f32 %v1371, %v1579
        %v1659 = vadd.f32 %v1372, %v1581
        %v1660 = vadd.f32 %v1373, %v1584
        %v1661 = vadd.f32 %v1374, %v1586
        %v1662 = vadd.f32 %v1375, %v1589
        %v1663 = vadd.f32 %v1376, %v1591
        %v1664 = vadd.f32 %v1377, %v1594
        %v1665 = vadd.f32 %v1378, %v1596
        %v1666 = vadd.f32 %v1379, %v1599
        %v1667 = vadd.f32 %v1380, %v1601
        %v1668 = vadd.f32 %v1381, %v1604
        %v1669 = vadd.f32 %v1382, %v1606
        %v1670 = vadd.f32 %v1383, %v1609
        %v1671 = vadd.f32 %v1384, %v1611
        %v1672 = vadd.f32 %v1385, %v1614
        %v1673 = vadd.f32 %v1386, %v1616
        %v1674 = vadd.f32 %v1387, %v1619
        %v1675 = vadd.f32 %v1388, %v1621
        %v1676 = vadd.f32 %v1389, %v1624
        %v1677 = vadd.f32 %v1390, %v1626
        %v1678 = vadd.f32 %v1391, %v1629
        %v1679 = vadd.f32 %v1392, %v1631
        %v1680 = vadd.f32 %v1393, %v1634
        %v1681 = vadd.f32 %v1394, %v1636
        %v1682 = vadd.f32 %v1395, %v1639
        %v1683 = vadd.f32 %v1396, %v1641
        %v1684 = vadd.f32 %v1397, %v1644
        %v1685 = vadd.f32 %v1398, %v1646
        %v1686 = vadd.f32 %v1399, %v1649
        %v1687 = vadd.f32 %v1400, %v1651
        %v1688 = vadd.f32 %v1401, %v1654
        %v1689 = vadd.f32 %v1402, %v1656
        %v1690 = vld [vmem:[%s1403] sm:$0xf]
        %v1691 = vld [vmem:[%s1403 + $0x4] sm:$0xf]
        %v1692 = vld [vmem:[%s1403 + $0x8] sm:$0x1]
        %v1693 = vld [vmem:[%s1403 + $0xc] sm:$0xf]
        %v1694 = vld [vmem:[%s1403 + $0x10] sm:$0xf]
        %v1695 = vld [vmem:[%s1403 + $0x14] sm:$0x1]
        %v1696 = vld [vmem:[%s1403 + $0x18] sm:$0xf]
        %v1697 = vld [vmem:[%s1403 + $0x1c] sm:$0xf]
        %v1698 = vld [vmem:[%s1403 + $0x20] sm:$0x1]
        %v1699 = vld [vmem:[%s1403 + $0x24] sm:$0xf]
        %v1700 = vld [vmem:[%s1403 + $0x28] sm:$0xf]
        %v1701 = vld [vmem:[%s1403 + $0x2c] sm:$0x1]
        %v1702 = vld [vmem:[%s1403 + $0x30] sm:$0xf]
        %v1703 = vld [vmem:[%s1403 + $0x34] sm:$0xf]
        %v1704 = vld [vmem:[%s1403 + $0x38] sm:$0x1]
        %v1705 = vld [vmem:[%s1403 + $0x3c] sm:$0xf]
        %v1706 = vld [vmem:[%s1403 + $0x40] sm:$0xf]
        %v1707 = vld [vmem:[%s1403 + $0x44] sm:$0x1]
        %v1708 = vld [vmem:[%s1403 + $0x48] sm:$0xf]
        %v1709 = vld [vmem:[%s1403 + $0x4c] sm:$0xf]
        %v1710 = vld [vmem:[%s1403 + $0x50] sm:$0x1]
        %v1711 = vld [vmem:[%s1403 + $0x54] sm:$0xf]
        %v1712 = vld [vmem:[%s1403 + $0x58] sm:$0xf]
        %v1713 = vld [vmem:[%s1403 + $0x5c] sm:$0x1]
        %v1714 = vld [vmem:[%s1403 + $0x60] sm:$0xf]
        %v1715 = vld [vmem:[%s1403 + $0x64] sm:$0xf]
        %v1716 = vld [vmem:[%s1403 + $0x68] sm:$0x1]
        %v1717 = vld [vmem:[%s1403 + $0x6c] sm:$0xf]
        %v1718 = vld [vmem:[%s1403 + $0x70] sm:$0xf]
        %v1719 = vld [vmem:[%s1403 + $0x74] sm:$0x1]
        %v1720 = vld [vmem:[%s1403 + $0x78] sm:$0xf]
        %v1721 = vld [vmem:[%s1403 + $0x7c] sm:$0xf]
        %v1722 = vld [vmem:[%s1403 + $0x80] sm:$0x1]
        %v1723 = vld [vmem:[%s1403 + $0x84] sm:$0xf]
        %v1724 = vld [vmem:[%s1403 + $0x88] sm:$0xf]
        %v1725 = vld [vmem:[%s1403 + $0x8c] sm:$0x1]
        %v1726 = vld [vmem:[%s1403 + $0x90] sm:$0xf]
        %v1727 = vld [vmem:[%s1403 + $0x94] sm:$0xf]
        %v1728 = vld [vmem:[%s1403 + $0x98] sm:$0x1]
        %v1729 = vld [vmem:[%s1403 + $0x9c] sm:$0xf]
        %v1730 = vld [vmem:[%s1403 + $0xa0] sm:$0xf]
        %v1731 = vld [vmem:[%s1403 + $0xa4] sm:$0x1]
        %v1732 = vld [vmem:[%s1403 + $0xa8] sm:$0xf]
        %v1733 = vld [vmem:[%s1403 + $0xac] sm:$0xf]
        %v1734 = vld [vmem:[%s1403 + $0xb0] sm:$0x1]
        %v1735 = vld [vmem:[%s1403 + $0xb4] sm:$0xf]
        %v1736 = vld [vmem:[%s1403 + $0xb8] sm:$0xf]
        %v1737 = vld [vmem:[%s1403 + $0xbc] sm:$0x1]
        %v1739 = vshrl.u32 %v1690, 16
        %v1741 = vrot.slane %v1739, 4
        %v1742 = vshll.u32 %v1690, 16
        %v1744 = vrot.slane %v1742, 5
        %v1745 = vor.u32 %v1741, %v1744
        %v1746 = vrot.slane %v1745, 4
        %v1748 = vshll.u32 %v1691, 16
        %v1750 = vrot.slane %v1748, 5
        %v1751 = vsel %vm221, %v1746, %v1750
        %v1752 = vshrl.u32 %v1691, 16
        %v1754 = vrot.slane %v1752, 4
        %v1755 = vor.u32 %v1754, %v1750
        %v1756 = vrot.slane %v1755, 4
        %v1758 = vshll.u32 %v1692, 16
        %v1760 = vrot.slane %v1758, 5
        %v1761 = vsel %vm221, %v1756, %v1760
        %v1763 = vshrl.u32 %v1693, 16
        %v1765 = vrot.slane %v1763, 4
        %v1766 = vshll.u32 %v1693, 16
        %v1768 = vrot.slane %v1766, 5
        %v1769 = vor.u32 %v1765, %v1768
        %v1770 = vrot.slane %v1769, 4
        %v1772 = vshll.u32 %v1694, 16
        %v1774 = vrot.slane %v1772, 5
        %v1775 = vsel %vm221, %v1770, %v1774
        %v1776 = vshrl.u32 %v1694, 16
        %v1778 = vrot.slane %v1776, 4
        %v1779 = vor.u32 %v1778, %v1774
        %v1780 = vrot.slane %v1779, 4
        %v1782 = vshll.u32 %v1695, 16
        %v1784 = vrot.slane %v1782, 5
        %v1785 = vsel %vm221, %v1780, %v1784
        %v1787 = vshrl.u32 %v1696, 16
        %v1789 = vrot.slane %v1787, 4
        %v1790 = vshll.u32 %v1696, 16
        %v1792 = vrot.slane %v1790, 5
        %v1793 = vor.u32 %v1789, %v1792
        %v1794 = vrot.slane %v1793, 4
        %v1796 = vshll.u32 %v1697, 16
        %v1798 = vrot.slane %v1796, 5
        %v1799 = vsel %vm221, %v1794, %v1798
        %v1800 = vshrl.u32 %v1697, 16
        %v1802 = vrot.slane %v1800, 4
        %v1803 = vor.u32 %v1802, %v1798
        %v1804 = vrot.slane %v1803, 4
        %v1806 = vshll.u32 %v1698, 16
        %v1808 = vrot.slane %v1806, 5
        %v1809 = vsel %vm221, %v1804, %v1808
        %v1811 = vshrl.u32 %v1699, 16
        %v1813 = vrot.slane %v1811, 4
        %v1814 = vshll.u32 %v1699, 16
        %v1816 = vrot.slane %v1814, 5
        %v1817 = vor.u32 %v1813, %v1816
        %v1818 = vrot.slane %v1817, 4
        %v1820 = vshll.u32 %v1700, 16
        %v1822 = vrot.slane %v1820, 5
        %v1823 = vsel %vm221, %v1818, %v1822
        %v1824 = vshrl.u32 %v1700, 16
        %v1826 = vrot.slane %v1824, 4
        %v1827 = vor.u32 %v1826, %v1822
        %v1828 = vrot.slane %v1827, 4
        %v1830 = vshll.u32 %v1701, 16
        %v1832 = vrot.slane %v1830, 5
        %v1833 = vsel %vm221, %v1828, %v1832
        %v1835 = vshrl.u32 %v1702, 16
        %v1837 = vrot.slane %v1835, 4
        %v1838 = vshll.u32 %v1702, 16
        %v1840 = vrot.slane %v1838, 5
        %v1841 = vor.u32 %v1837, %v1840
        %v1842 = vrot.slane %v1841, 4
        %v1844 = vshll.u32 %v1703, 16
        %v1846 = vrot.slane %v1844, 5
        %v1847 = vsel %vm221, %v1842, %v1846
        %v1848 = vshrl.u32 %v1703, 16
        %v1850 = vrot.slane %v1848, 4
        %v1851 = vor.u32 %v1850, %v1846
        %v1852 = vrot.slane %v1851, 4
        %v1854 = vshll.u32 %v1704, 16
        %v1856 = vrot.slane %v1854, 5
        %v1857 = vsel %vm221, %v1852, %v1856
        %v1859 = vshrl.u32 %v1705, 16
        %v1861 = vrot.slane %v1859, 4
        %v1862 = vshll.u32 %v1705, 16
        %v1864 = vrot.slane %v1862, 5
        %v1865 = vor.u32 %v1861, %v1864
        %v1866 = vrot.slane %v1865, 4
        %v1868 = vshll.u32 %v1706, 16
        %v1870 = vrot.slane %v1868, 5
        %v1871 = vsel %vm221, %v1866, %v1870
        %v1872 = vshrl.u32 %v1706, 16
        %v1874 = vrot.slane %v1872, 4
        %v1875 = vor.u32 %v1874, %v1870
        %v1876 = vrot.slane %v1875, 4
        %v1878 = vshll.u32 %v1707, 16
        %v1880 = vrot.slane %v1878, 5
        %v1881 = vsel %vm221, %v1876, %v1880
        %v1883 = vshrl.u32 %v1708, 16
        %v1885 = vrot.slane %v1883, 4
        %v1886 = vshll.u32 %v1708, 16
        %v1888 = vrot.slane %v1886, 5
        %v1889 = vor.u32 %v1885, %v1888
        %v1890 = vrot.slane %v1889, 4
        %v1892 = vshll.u32 %v1709, 16
        %v1894 = vrot.slane %v1892, 5
        %v1895 = vsel %vm221, %v1890, %v1894
        %v1896 = vshrl.u32 %v1709, 16
        %v1898 = vrot.slane %v1896, 4
        %v1899 = vor.u32 %v1898, %v1894
        %v1900 = vrot.slane %v1899, 4
        %v1902 = vshll.u32 %v1710, 16
        %v1904 = vrot.slane %v1902, 5
        %v1905 = vsel %vm221, %v1900, %v1904
        %v1907 = vshrl.u32 %v1711, 16
        %v1909 = vrot.slane %v1907, 4
        %v1910 = vshll.u32 %v1711, 16
        %v1912 = vrot.slane %v1910, 5
        %v1913 = vor.u32 %v1909, %v1912
        %v1914 = vrot.slane %v1913, 4
        %v1916 = vshll.u32 %v1712, 16
        %v1918 = vrot.slane %v1916, 5
        %v1919 = vsel %vm221, %v1914, %v1918
        %v1920 = vshrl.u32 %v1712, 16
        %v1922 = vrot.slane %v1920, 4
        %v1923 = vor.u32 %v1922, %v1918
        %v1924 = vrot.slane %v1923, 4
        %v1926 = vshll.u32 %v1713, 16
        %v1928 = vrot.slane %v1926, 5
        %v1929 = vsel %vm221, %v1924, %v1928
        %v1931 = vshrl.u32 %v1714, 16
        %v1933 = vrot.slane %v1931, 4
        %v1934 = vshll.u32 %v1714, 16
        %v1936 = vrot.slane %v1934, 5
        %v1937 = vor.u32 %v1933, %v1936
        %v1938 = vrot.slane %v1937, 4
        %v1940 = vshll.u32 %v1715, 16
        %v1942 = vrot.slane %v1940, 5
        %v1943 = vsel %vm221, %v1938, %v1942
        %v1944 = vshrl.u32 %v1715, 16
        %v1946 = vrot.slane %v1944, 4
        %v1947 = vor.u32 %v1946, %v1942
        %v1948 = vrot.slane %v1947, 4
        %v1950 = vshll.u32 %v1716, 16
        %v1952 = vrot.slane %v1950, 5
        %v1953 = vsel %vm221, %v1948, %v1952
        %v1955 = vshrl.u32 %v1717, 16
        %v1957 = vrot.slane %v1955, 4
        %v1958 = vshll.u32 %v1717, 16
        %v1960 = vrot.slane %v1958, 5
        %v1961 = vor.u32 %v1957, %v1960
        %v1962 = vrot.slane %v1961, 4
        %v1964 = vshll.u32 %v1718, 16
        %v1966 = vrot.slane %v1964, 5
        %v1967 = vsel %vm221, %v1962, %v1966
        %v1968 = vshrl.u32 %v1718, 16
        %v1970 = vrot.slane %v1968, 4
        %v1971 = vor.u32 %v1970, %v1966
        %v1972 = vrot.slane %v1971, 4
        %v1974 = vshll.u32 %v1719, 16
        %v1976 = vrot.slane %v1974, 5
        %v1977 = vsel %vm221, %v1972, %v1976
        %v1979 = vshrl.u32 %v1720, 16
        %v1981 = vrot.slane %v1979, 4
        %v1982 = vshll.u32 %v1720, 16
        %v1984 = vrot.slane %v1982, 5
        %v1985 = vor.u32 %v1981, %v1984
        %v1986 = vrot.slane %v1985, 4
        %v1988 = vshll.u32 %v1721, 16
        %v1990 = vrot.slane %v1988, 5
        %v1991 = vsel %vm221, %v1986, %v1990
        %v1992 = vshrl.u32 %v1721, 16
        %v1994 = vrot.slane %v1992, 4
        %v1995 = vor.u32 %v1994, %v1990
        %v1996 = vrot.slane %v1995, 4
        %v1998 = vshll.u32 %v1722, 16
        %v2000 = vrot.slane %v1998, 5
        %v2001 = vsel %vm221, %v1996, %v2000
        %v2003 = vshrl.u32 %v1723, 16
        %v2005 = vrot.slane %v2003, 4
        %v2006 = vshll.u32 %v1723, 16
        %v2008 = vrot.slane %v2006, 5
        %v2009 = vor.u32 %v2005, %v2008
        %v2010 = vrot.slane %v2009, 4
        %v2012 = vshll.u32 %v1724, 16
        %v2014 = vrot.slane %v2012, 5
        %v2015 = vsel %vm221, %v2010, %v2014
        %v2016 = vshrl.u32 %v1724, 16
        %v2018 = vrot.slane %v2016, 4
        %v2019 = vor.u32 %v2018, %v2014
        %v2020 = vrot.slane %v2019, 4
        %v2022 = vshll.u32 %v1725, 16
        %v2024 = vrot.slane %v2022, 5
        %v2025 = vsel %vm221, %v2020, %v2024
        %v2027 = vshrl.u32 %v1726, 16
        %v2029 = vrot.slane %v2027, 4
        %v2030 = vshll.u32 %v1726, 16
        %v2032 = vrot.slane %v2030, 5
        %v2033 = vor.u32 %v2029, %v2032
        %v2034 = vrot.slane %v2033, 4
        %v2036 = vshll.u32 %v1727, 16
        %v2038 = vrot.slane %v2036, 5
        %v2039 = vsel %vm221, %v2034, %v2038
        %v2040 = vshrl.u32 %v1727, 16
        %v2042 = vrot.slane %v2040, 4
        %v2043 = vor.u32 %v2042, %v2038
        %v2044 = vrot.slane %v2043, 4
        %v2046 = vshll.u32 %v1728, 16
        %v2048 = vrot.slane %v2046, 5
        %v2049 = vsel %vm221, %v2044, %v2048
        %v2051 = vshrl.u32 %v1729, 16
        %v2053 = vrot.slane %v2051, 4
        %v2054 = vshll.u32 %v1729, 16
        %v2056 = vrot.slane %v2054, 5
        %v2057 = vor.u32 %v2053, %v2056
        %v2058 = vrot.slane %v2057, 4
        %v2060 = vshll.u32 %v1730, 16
        %v2062 = vrot.slane %v2060, 5
        %v2063 = vsel %vm221, %v2058, %v2062
        %v2064 = vshrl.u32 %v1730, 16
        %v2066 = vrot.slane %v2064, 4
        %v2067 = vor.u32 %v2066, %v2062
        %v2068 = vrot.slane %v2067, 4
        %v2070 = vshll.u32 %v1731, 16
        %v2072 = vrot.slane %v2070, 5
        %v2073 = vsel %vm221, %v2068, %v2072
        %v2075 = vshrl.u32 %v1732, 16
        %v2077 = vrot.slane %v2075, 4
        %v2078 = vshll.u32 %v1732, 16
        %v2080 = vrot.slane %v2078, 5
        %v2081 = vor.u32 %v2077, %v2080
        %v2082 = vrot.slane %v2081, 4
        %v2084 = vshll.u32 %v1733, 16
        %v2086 = vrot.slane %v2084, 5
        %v2087 = vsel %vm221, %v2082, %v2086
        %v2088 = vshrl.u32 %v1733, 16
        %v2090 = vrot.slane %v2088, 4
        %v2091 = vor.u32 %v2090, %v2086
        %v2092 = vrot.slane %v2091, 4
        %v2094 = vshll.u32 %v1734, 16
        %v2096 = vrot.slane %v2094, 5
        %v2097 = vsel %vm221, %v2092, %v2096
        %v2099 = vshrl.u32 %v1735, 16
        %v2101 = vrot.slane %v2099, 4
        %v2102 = vshll.u32 %v1735, 16
        %v2104 = vrot.slane %v2102, 5
        %v2105 = vor.u32 %v2101, %v2104
        %v2106 = vrot.slane %v2105, 4
        %v2108 = vshll.u32 %v1736, 16
        %v2110 = vrot.slane %v2108, 5
        %v2111 = vsel %vm221, %v2106, %v2110
        %v2112 = vshrl.u32 %v1736, 16
        %v2114 = vrot.slane %v2112, 4
        %v2115 = vor.u32 %v2114, %v2110
        %v2116 = vrot.slane %v2115, 4
        %v2118 = vshll.u32 %v1737, 16
        %v2120 = vrot.slane %v2118, 5
        %v2121 = vsel %vm221, %v2116, %v2120
        %s2122 = scalar_lea.vmem %s1, 8
        %v2123 = vld [vmem:[%s2122] sm:$0x3]
        %v2124 = vunpack.c.l.b16 %v1751
        %v2125 = vunpack.c.l.b16 %v1761
        %v2126 = vunpack.c.l.b16 %v1775
        %v2127 = vunpack.c.l.b16 %v1785
        %v2128 = vunpack.c.l.b16 %v1799
        %v2129 = vunpack.c.l.b16 %v1809
        %v2130 = vunpack.c.l.b16 %v1823
        %v2131 = vunpack.c.l.b16 %v1833
        %v2132 = vunpack.c.l.b16 %v1847
        %v2133 = vunpack.c.l.b16 %v1857
        %v2134 = vunpack.c.l.b16 %v1871
        %v2135 = vunpack.c.l.b16 %v1881
        %v2136 = vunpack.c.l.b16 %v1895
        %v2137 = vunpack.c.l.b16 %v1905
        %v2138 = vunpack.c.l.b16 %v1919
        %v2139 = vunpack.c.l.b16 %v1929
        %v2140 = vunpack.c.l.b16 %v1943
        %v2141 = vunpack.c.l.b16 %v1953
        %v2142 = vunpack.c.l.b16 %v1967
        %v2143 = vunpack.c.l.b16 %v1977
        %v2144 = vunpack.c.l.b16 %v1991
        %v2145 = vunpack.c.l.b16 %v2001
        %v2146 = vunpack.c.l.b16 %v2015
        %v2147 = vunpack.c.l.b16 %v2025
        %v2148 = vunpack.c.l.b16 %v2039
        %v2149 = vunpack.c.l.b16 %v2049
        %v2150 = vunpack.c.l.b16 %v2063
        %v2151 = vunpack.c.l.b16 %v2073
        %v2152 = vunpack.c.l.b16 %v2087
        %v2153 = vunpack.c.l.b16 %v2097
        %v2154 = vunpack.c.l.b16 %v2111
        %v2155 = vunpack.c.l.b16 %v2121
        %v2156 = vpack.c.b16 %v2125, %v2124
        %v2157 = vpack.c.b16 %v2127, %v2126
        %v2158 = vpack.c.b16 %v2129, %v2128
        %v2159 = vpack.c.b16 %v2131, %v2130
        %v2160 = vpack.c.b16 %v2133, %v2132
        %v2161 = vpack.c.b16 %v2135, %v2134
        %v2162 = vpack.c.b16 %v2137, %v2136
        %v2163 = vpack.c.b16 %v2139, %v2138
        %v2164 = vpack.c.b16 %v2141, %v2140
        %v2165 = vpack.c.b16 %v2143, %v2142
        %v2166 = vpack.c.b16 %v2145, %v2144
        %v2167 = vpack.c.b16 %v2147, %v2146
        %v2168 = vpack.c.b16 %v2149, %v2148
        %v2169 = vpack.c.b16 %v2151, %v2150
        %v2170 = vpack.c.b16 %v2153, %v2152
        %v2171 = vpack.c.b16 %v2155, %v2154
        %v2173 = vsel %vm656, %v2156, 0
        %v2176 = vsel %vm656, %v2157, 0
        %v2179 = vsel %vm656, %v2158, 0
        %v2182 = vsel %vm656, %v2159, 0
        %v2185 = vsel %vm656, %v2160, 0
        %v2188 = vsel %vm656, %v2161, 0
        %v2191 = vsel %vm656, %v2162, 0
        %v2194 = vsel %vm656, %v2163, 0
        %v2197 = vsel %vm656, %v2164, 0
        %v2200 = vsel %vm656, %v2165, 0
        %v2203 = vsel %vm656, %v2166, 0
        %v2206 = vsel %vm656, %v2167, 0
        %v2209 = vsel %vm656, %v2168, 0
        %v2212 = vsel %vm656, %v2169, 0
        %v2215 = vsel %vm656, %v2170, 0
        %v2218 = vsel %vm656, %v2171, 0
        %v2221 = vsel %vm705, %v2123, 0
        %2223 = vmatpush.bf16.msra.mxu0 0
        %2224 = vmatpush.bf16.msra.mxu0 0
        %2225 = vmatpush.bf16.msra.mxu0 0
        %2226 = vmatpush.bf16.msra.mxu0 0
        %2227 = vmatpush.bf16.msra.mxu0 0
        %2228 = vmatpush.bf16.msra.mxu0 0
        %2229 = vmatpush.bf16.msra.mxu0 0
        %2230 = vmatpush.bf16.msra.mxu0 %v2221
        %2231 = vmatmul.bf16.gmra.mxu0 %v2173
        %v2232 = vpop.f32.mrf.mxu0
        %v2233 = vadd.f32 0.0, %v2232
        %v2234 = vpop.f32.mrf.mxu0
        %v2235 = vadd.f32 0.0, %v2234
        %2236 = vmatmul.bf16.gmra.mxu0 %v2176
        %v2237 = vpop.f32.mrf.mxu0
        %v2238 = vadd.f32 0.0, %v2237
        %v2239 = vpop.f32.mrf.mxu0
        %v2240 = vadd.f32 0.0, %v2239
        %2241 = vmatmul.bf16.gmra.mxu0 %v2179
        %v2242 = vpop.f32.mrf.mxu0
        %v2243 = vadd.f32 0.0, %v2242
        %v2244 = vpop.f32.mrf.mxu0
        %v2245 = vadd.f32 0.0, %v2244
        %2246 = vmatmul.bf16.gmra.mxu0 %v2182
        %v2247 = vpop.f32.mrf.mxu0
        %v2248 = vadd.f32 0.0, %v2247
        %v2249 = vpop.f32.mrf.mxu0
        %v2250 = vadd.f32 0.0, %v2249
        %2251 = vmatmul.bf16.gmra.mxu0 %v2185
        %v2252 = vpop.f32.mrf.mxu0
        %v2253 = vadd.f32 0.0, %v2252
        %v2254 = vpop.f32.mrf.mxu0
        %v2255 = vadd.f32 0.0, %v2254
        %2256 = vmatmul.bf16.gmra.mxu0 %v2188
        %v2257 = vpop.f32.mrf.mxu0
        %v2258 = vadd.f32 0.0, %v2257
        %v2259 = vpop.f32.mrf.mxu0
        %v2260 = vadd.f32 0.0, %v2259
        %2261 = vmatmul.bf16.gmra.mxu0 %v2191
        %v2262 = vpop.f32.mrf.mxu0
        %v2263 = vadd.f32 0.0, %v2262
        %v2264 = vpop.f32.mrf.mxu0
        %v2265 = vadd.f32 0.0, %v2264
        %2266 = vmatmul.bf16.gmra.mxu0 %v2194
        %v2267 = vpop.f32.mrf.mxu0
        %v2268 = vadd.f32 0.0, %v2267
        %v2269 = vpop.f32.mrf.mxu0
        %v2270 = vadd.f32 0.0, %v2269
        %2271 = vmatmul.bf16.gmra.mxu0 %v2197
        %v2272 = vpop.f32.mrf.mxu0
        %v2273 = vadd.f32 0.0, %v2272
        %v2274 = vpop.f32.mrf.mxu0
        %v2275 = vadd.f32 0.0, %v2274
        %2276 = vmatmul.bf16.gmra.mxu0 %v2200
        %v2277 = vpop.f32.mrf.mxu0
        %v2278 = vadd.f32 0.0, %v2277
        %v2279 = vpop.f32.mrf.mxu0
        %v2280 = vadd.f32 0.0, %v2279
        %2281 = vmatmul.bf16.gmra.mxu0 %v2203
        %v2282 = vpop.f32.mrf.mxu0
        %v2283 = vadd.f32 0.0, %v2282
        %v2284 = vpop.f32.mrf.mxu0
        %v2285 = vadd.f32 0.0, %v2284
        %2286 = vmatmul.bf16.gmra.mxu0 %v2206
        %v2287 = vpop.f32.mrf.mxu0
        %v2288 = vadd.f32 0.0, %v2287
        %v2289 = vpop.f32.mrf.mxu0
        %v2290 = vadd.f32 0.0, %v2289
        %2291 = vmatmul.bf16.gmra.mxu0 %v2209
        %v2292 = vpop.f32.mrf.mxu0
        %v2293 = vadd.f32 0.0, %v2292
        %v2294 = vpop.f32.mrf.mxu0
        %v2295 = vadd.f32 0.0, %v2294
        %2296 = vmatmul.bf16.gmra.mxu0 %v2212
        %v2297 = vpop.f32.mrf.mxu0
        %v2298 = vadd.f32 0.0, %v2297
        %v2299 = vpop.f32.mrf.mxu0
        %v2300 = vadd.f32 0.0, %v2299
        %2301 = vmatmul.bf16.gmra.mxu0 %v2215
        %v2302 = vpop.f32.mrf.mxu0
        %v2303 = vadd.f32 0.0, %v2302
        %v2304 = vpop.f32.mrf.mxu0
        %v2305 = vadd.f32 0.0, %v2304
        %2306 = vmatmul.bf16.gmra.mxu0 %v2218
        %v2307 = vpop.f32.mrf.mxu0
        %v2308 = vadd.f32 0.0, %v2307
        %v2309 = vpop.f32.mrf.mxu0
        %v2310 = vadd.f32 0.0, %v2309
        %2311 = vdwg.mxu0
        %v2312 = vadd.f32 %v1658, %v2233
        %v2313 = vadd.f32 %v1659, %v2235
        %v2314 = vadd.f32 %v1660, %v2238
        %v2315 = vadd.f32 %v1661, %v2240
        %v2316 = vadd.f32 %v1662, %v2243
        %v2317 = vadd.f32 %v1663, %v2245
        %v2318 = vadd.f32 %v1664, %v2248
        %v2319 = vadd.f32 %v1665, %v2250
        %v2320 = vadd.f32 %v1666, %v2253
        %v2321 = vadd.f32 %v1667, %v2255
        %v2322 = vadd.f32 %v1668, %v2258
        %v2323 = vadd.f32 %v1669, %v2260
        %v2324 = vadd.f32 %v1670, %v2263
        %v2325 = vadd.f32 %v1671, %v2265
        %v2326 = vadd.f32 %v1672, %v2268
        %v2327 = vadd.f32 %v1673, %v2270
        %v2328 = vadd.f32 %v1674, %v2273
        %v2329 = vadd.f32 %v1675, %v2275
        %v2330 = vadd.f32 %v1676, %v2278
        %v2331 = vadd.f32 %v1677, %v2280
        %v2332 = vadd.f32 %v1678, %v2283
        %v2333 = vadd.f32 %v1679, %v2285
        %v2334 = vadd.f32 %v1680, %v2288
        %v2335 = vadd.f32 %v1681, %v2290
        %v2336 = vadd.f32 %v1682, %v2293
        %v2337 = vadd.f32 %v1683, %v2295
        %v2338 = vadd.f32 %v1684, %v2298
        %v2339 = vadd.f32 %v1685, %v2300
        %v2340 = vadd.f32 %v1686, %v2303
        %v2341 = vadd.f32 %v1687, %v2305
        %v2342 = vadd.f32 %v1688, %v2308
        %v2343 = vadd.f32 %v1689, %v2310
        %v2344 = vld [vmem:[%s1403] sm:$0xe]
        %v2345 = vld [vmem:[%s1403 + $0xc] sm:$0xe]
        %v2346 = vld [vmem:[%s1403 + $0x18] sm:$0xe]
        %v2347 = vld [vmem:[%s1403 + $0x24] sm:$0xe]
        %v2348 = vld [vmem:[%s1403 + $0x30] sm:$0xe]
        %v2349 = vld [vmem:[%s1403 + $0x3c] sm:$0xe]
        %v2350 = vld [vmem:[%s1403 + $0x48] sm:$0xe]
        %v2351 = vld [vmem:[%s1403 + $0x54] sm:$0xe]
        %v2352 = vld [vmem:[%s1403 + $0x60] sm:$0xe]
        %v2353 = vld [vmem:[%s1403 + $0x6c] sm:$0xe]
        %v2354 = vld [vmem:[%s1403 + $0x78] sm:$0xe]
        %v2355 = vld [vmem:[%s1403 + $0x84] sm:$0xe]
        %v2356 = vld [vmem:[%s1403 + $0x90] sm:$0xe]
        %v2357 = vld [vmem:[%s1403 + $0x9c] sm:$0xe]
        %v2358 = vld [vmem:[%s1403 + $0xa8] sm:$0xe]
        %v2359 = vld [vmem:[%s1403 + $0xb4] sm:$0xe]
        %v2408 = vrot.slane %v2344, 5
        %v2409 = vrot.slane %v2408, 4
        %v2410 = vrot.slane %v1691, 5
        %v2411 = vsel %vm1068, %v2409, %v2410
        %v2412 = vrot.slane %v2410, 4
        %v2413 = vrot.slane %v1692, 5
        %v2414 = vsel %vm1068, %v2412, %v2413
        %v2415 = vrot.slane %v2345, 5
        %v2416 = vrot.slane %v2415, 4
        %v2417 = vrot.slane %v1694, 5
        %v2418 = vsel %vm1068, %v2416, %v2417
        %v2419 = vrot.slane %v2417, 4
        %v2420 = vrot.slane %v1695, 5
        %v2421 = vsel %vm1068, %v2419, %v2420
        %v2422 = vrot.slane %v2346, 5
        %v2423 = vrot.slane %v2422, 4
        %v2424 = vrot.slane %v1697, 5
        %v2425 = vsel %vm1068, %v2423, %v2424
        %v2426 = vrot.slane %v2424, 4
        %v2427 = vrot.slane %v1698, 5
        %v2428 = vsel %vm1068, %v2426, %v2427
        %v2429 = vrot.slane %v2347, 5
        %v2430 = vrot.slane %v2429, 4
        %v2431 = vrot.slane %v1700, 5
        %v2432 = vsel %vm1068, %v2430, %v2431
        %v2433 = vrot.slane %v2431, 4
        %v2434 = vrot.slane %v1701, 5
        %v2435 = vsel %vm1068, %v2433, %v2434
        %v2436 = vrot.slane %v2348, 5
        %v2437 = vrot.slane %v2436, 4
        %v2438 = vrot.slane %v1703, 5
        %v2439 = vsel %vm1068, %v2437, %v2438
        %v2440 = vrot.slane %v2438, 4
        %v2441 = vrot.slane %v1704, 5
        %v2442 = vsel %vm1068, %v2440, %v2441
        %v2443 = vrot.slane %v2349, 5
        %v2444 = vrot.slane %v2443, 4
        %v2445 = vrot.slane %v1706, 5
        %v2446 = vsel %vm1068, %v2444, %v2445
        %v2447 = vrot.slane %v2445, 4
        %v2448 = vrot.slane %v1707, 5
        %v2449 = vsel %vm1068, %v2447, %v2448
        %v2450 = vrot.slane %v2350, 5
        %v2451 = vrot.slane %v2450, 4
        %v2452 = vrot.slane %v1709, 5
        %v2453 = vsel %vm1068, %v2451, %v2452
        %v2454 = vrot.slane %v2452, 4
        %v2455 = vrot.slane %v1710, 5
        %v2456 = vsel %vm1068, %v2454, %v2455
        %v2457 = vrot.slane %v2351, 5
        %v2458 = vrot.slane %v2457, 4
        %v2459 = vrot.slane %v1712, 5
        %v2460 = vsel %vm1068, %v2458, %v2459
        %v2461 = vrot.slane %v2459, 4
        %v2462 = vrot.slane %v1713, 5
        %v2463 = vsel %vm1068, %v2461, %v2462
        %v2464 = vrot.slane %v2352, 5
        %v2465 = vrot.slane %v2464, 4
        %v2466 = vrot.slane %v1715, 5
        %v2467 = vsel %vm1068, %v2465, %v2466
        %v2468 = vrot.slane %v2466, 4
        %v2469 = vrot.slane %v1716, 5
        %v2470 = vsel %vm1068, %v2468, %v2469
        %v2471 = vrot.slane %v2353, 5
        %v2472 = vrot.slane %v2471, 4
        %v2473 = vrot.slane %v1718, 5
        %v2474 = vsel %vm1068, %v2472, %v2473
        %v2475 = vrot.slane %v2473, 4
        %v2476 = vrot.slane %v1719, 5
        %v2477 = vsel %vm1068, %v2475, %v2476
        %v2478 = vrot.slane %v2354, 5
        %v2479 = vrot.slane %v2478, 4
        %v2480 = vrot.slane %v1721, 5
        %v2481 = vsel %vm1068, %v2479, %v2480
        %v2482 = vrot.slane %v2480, 4
        %v2483 = vrot.slane %v1722, 5
        %v2484 = vsel %vm1068, %v2482, %v2483
        %v2485 = vrot.slane %v2355, 5
        %v2486 = vrot.slane %v2485, 4
        %v2487 = vrot.slane %v1724, 5
        %v2488 = vsel %vm1068, %v2486, %v2487
        %v2489 = vrot.slane %v2487, 4
        %v2490 = vrot.slane %v1725, 5
        %v2491 = vsel %vm1068, %v2489, %v2490
        %v2492 = vrot.slane %v2356, 5
        %v2493 = vrot.slane %v2492, 4
        %v2494 = vrot.slane %v1727, 5
        %v2495 = vsel %vm1068, %v2493, %v2494
        %v2496 = vrot.slane %v2494, 4
        %v2497 = vrot.slane %v1728, 5
        %v2498 = vsel %vm1068, %v2496, %v2497
        %v2499 = vrot.slane %v2357, 5
        %v2500 = vrot.slane %v2499, 4
        %v2501 = vrot.slane %v1730, 5
        %v2502 = vsel %vm1068, %v2500, %v2501
        %v2503 = vrot.slane %v2501, 4
        %v2504 = vrot.slane %v1731, 5
        %v2505 = vsel %vm1068, %v2503, %v2504
        %v2506 = vrot.slane %v2358, 5
        %v2507 = vrot.slane %v2506, 4
        %v2508 = vrot.slane %v1733, 5
        %v2509 = vsel %vm1068, %v2507, %v2508
        %v2510 = vrot.slane %v2508, 4
        %v2511 = vrot.slane %v1734, 5
        %v2512 = vsel %vm1068, %v2510, %v2511
        %v2513 = vrot.slane %v2359, 5
        %v2514 = vrot.slane %v2513, 4
        %v2515 = vrot.slane %v1736, 5
        %v2516 = vsel %vm1068, %v2514, %v2515
        %v2517 = vrot.slane %v2515, 4
        %v2518 = vrot.slane %v1737, 5
        %v2519 = vsel %vm1068, %v2517, %v2518
        %s2520 = scalar_lea.vmem %s1, 10
        %v2521 = vld [vmem:[%s2520] sm:$0x3]
        %v2522 = vunpack.c.l.b16 %v2411
        %v2523 = vunpack.c.l.b16 %v2414
        %v2524 = vunpack.c.l.b16 %v2418
        %v2525 = vunpack.c.l.b16 %v2421
        %v2526 = vunpack.c.l.b16 %v2425
        %v2527 = vunpack.c.l.b16 %v2428
        %v2528 = vunpack.c.l.b16 %v2432
        %v2529 = vunpack.c.l.b16 %v2435
        %v2530 = vunpack.c.l.b16 %v2439
        %v2531 = vunpack.c.l.b16 %v2442
        %v2532 = vunpack.c.l.b16 %v2446
        %v2533 = vunpack.c.l.b16 %v2449
        %v2534 = vunpack.c.l.b16 %v2453
        %v2535 = vunpack.c.l.b16 %v2456
        %v2536 = vunpack.c.l.b16 %v2460
        %v2537 = vunpack.c.l.b16 %v2463
        %v2538 = vunpack.c.l.b16 %v2467
        %v2539 = vunpack.c.l.b16 %v2470
        %v2540 = vunpack.c.l.b16 %v2474
        %v2541 = vunpack.c.l.b16 %v2477
        %v2542 = vunpack.c.l.b16 %v2481
        %v2543 = vunpack.c.l.b16 %v2484
        %v2544 = vunpack.c.l.b16 %v2488
        %v2545 = vunpack.c.l.b16 %v2491
        %v2546 = vunpack.c.l.b16 %v2495
        %v2547 = vunpack.c.l.b16 %v2498
        %v2548 = vunpack.c.l.b16 %v2502
        %v2549 = vunpack.c.l.b16 %v2505
        %v2550 = vunpack.c.l.b16 %v2509
        %v2551 = vunpack.c.l.b16 %v2512
        %v2552 = vunpack.c.l.b16 %v2516
        %v2553 = vunpack.c.l.b16 %v2519
        %v2554 = vpack.c.b16 %v2523, %v2522
        %v2555 = vpack.c.b16 %v2525, %v2524
        %v2556 = vpack.c.b16 %v2527, %v2526
        %v2557 = vpack.c.b16 %v2529, %v2528
        %v2558 = vpack.c.b16 %v2531, %v2530
        %v2559 = vpack.c.b16 %v2533, %v2532
        %v2560 = vpack.c.b16 %v2535, %v2534
        %v2561 = vpack.c.b16 %v2537, %v2536
        %v2562 = vpack.c.b16 %v2539, %v2538
        %v2563 = vpack.c.b16 %v2541, %v2540
        %v2564 = vpack.c.b16 %v2543, %v2542
        %v2565 = vpack.c.b16 %v2545, %v2544
        %v2566 = vpack.c.b16 %v2547, %v2546
        %v2567 = vpack.c.b16 %v2549, %v2548
        %v2568 = vpack.c.b16 %v2551, %v2550
        %v2569 = vpack.c.b16 %v2553, %v2552
        %v2571 = vsel %vm656, %v2554, 0
        %v2574 = vsel %vm656, %v2555, 0
        %v2577 = vsel %vm656, %v2556, 0
        %v2580 = vsel %vm656, %v2557, 0
        %v2583 = vsel %vm656, %v2558, 0
        %v2586 = vsel %vm656, %v2559, 0
        %v2589 = vsel %vm656, %v2560, 0
        %v2592 = vsel %vm656, %v2561, 0
        %v2595 = vsel %vm656, %v2562, 0
        %v2598 = vsel %vm656, %v2563, 0
        %v2601 = vsel %vm656, %v2564, 0
        %v2604 = vsel %vm656, %v2565, 0
        %v2607 = vsel %vm656, %v2566, 0
        %v2610 = vsel %vm656, %v2567, 0
        %v2613 = vsel %vm656, %v2568, 0
        %v2616 = vsel %vm656, %v2569, 0
        %v2619 = vsel %vm705, %v2521, 0
        %2621 = vmatpush.bf16.msra.mxu0 0
        %2622 = vmatpush.bf16.msra.mxu0 0
        %2623 = vmatpush.bf16.msra.mxu0 0
        %2624 = vmatpush.bf16.msra.mxu0 0
        %2625 = vmatpush.bf16.msra.mxu0 0
        %2626 = vmatpush.bf16.msra.mxu0 0
        %2627 = vmatpush.bf16.msra.mxu0 0
        %2628 = vmatpush.bf16.msra.mxu0 %v2619
        %2629 = vmatmul.bf16.gmra.mxu0 %v2571
        %v2630 = vpop.f32.mrf.mxu0
        %v2631 = vadd.f32 0.0, %v2630
        %v2632 = vpop.f32.mrf.mxu0
        %v2633 = vadd.f32 0.0, %v2632
        %2634 = vmatmul.bf16.gmra.mxu0 %v2574
        %v2635 = vpop.f32.mrf.mxu0
        %v2636 = vadd.f32 0.0, %v2635
        %v2637 = vpop.f32.mrf.mxu0
        %v2638 = vadd.f32 0.0, %v2637
        %2639 = vmatmul.bf16.gmra.mxu0 %v2577
        %v2640 = vpop.f32.mrf.mxu0
        %v2641 = vadd.f32 0.0, %v2640
        %v2642 = vpop.f32.mrf.mxu0
        %v2643 = vadd.f32 0.0, %v2642
        %2644 = vmatmul.bf16.gmra.mxu0 %v2580
        %v2645 = vpop.f32.mrf.mxu0
        %v2646 = vadd.f32 0.0, %v2645
        %v2647 = vpop.f32.mrf.mxu0
        %v2648 = vadd.f32 0.0, %v2647
        %2649 = vmatmul.bf16.gmra.mxu0 %v2583
        %v2650 = vpop.f32.mrf.mxu0
        %v2651 = vadd.f32 0.0, %v2650
        %v2652 = vpop.f32.mrf.mxu0
        %v2653 = vadd.f32 0.0, %v2652
        %2654 = vmatmul.bf16.gmra.mxu0 %v2586
        %v2655 = vpop.f32.mrf.mxu0
        %v2656 = vadd.f32 0.0, %v2655
        %v2657 = vpop.f32.mrf.mxu0
        %v2658 = vadd.f32 0.0, %v2657
        %2659 = vmatmul.bf16.gmra.mxu0 %v2589
        %v2660 = vpop.f32.mrf.mxu0
        %v2661 = vadd.f32 0.0, %v2660
        %v2662 = vpop.f32.mrf.mxu0
        %v2663 = vadd.f32 0.0, %v2662
        %2664 = vmatmul.bf16.gmra.mxu0 %v2592
        %v2665 = vpop.f32.mrf.mxu0
        %v2666 = vadd.f32 0.0, %v2665
        %v2667 = vpop.f32.mrf.mxu0
        %v2668 = vadd.f32 0.0, %v2667
        %2669 = vmatmul.bf16.gmra.mxu0 %v2595
        %v2670 = vpop.f32.mrf.mxu0
        %v2671 = vadd.f32 0.0, %v2670
        %v2672 = vpop.f32.mrf.mxu0
        %v2673 = vadd.f32 0.0, %v2672
        %2674 = vmatmul.bf16.gmra.mxu0 %v2598
        %v2675 = vpop.f32.mrf.mxu0
        %v2676 = vadd.f32 0.0, %v2675
        %v2677 = vpop.f32.mrf.mxu0
        %v2678 = vadd.f32 0.0, %v2677
        %2679 = vmatmul.bf16.gmra.mxu0 %v2601
        %v2680 = vpop.f32.mrf.mxu0
        %v2681 = vadd.f32 0.0, %v2680
        %v2682 = vpop.f32.mrf.mxu0
        %v2683 = vadd.f32 0.0, %v2682
        %2684 = vmatmul.bf16.gmra.mxu0 %v2604
        %v2685 = vpop.f32.mrf.mxu0
        %v2686 = vadd.f32 0.0, %v2685
        %v2687 = vpop.f32.mrf.mxu0
        %v2688 = vadd.f32 0.0, %v2687
        %2689 = vmatmul.bf16.gmra.mxu0 %v2607
        %v2690 = vpop.f32.mrf.mxu0
        %v2691 = vadd.f32 0.0, %v2690
        %v2692 = vpop.f32.mrf.mxu0
        %v2693 = vadd.f32 0.0, %v2692
        %2694 = vmatmul.bf16.gmra.mxu0 %v2610
        %v2695 = vpop.f32.mrf.mxu0
        %v2696 = vadd.f32 0.0, %v2695
        %v2697 = vpop.f32.mrf.mxu0
        %v2698 = vadd.f32 0.0, %v2697
        %2699 = vmatmul.bf16.gmra.mxu0 %v2613
        %v2700 = vpop.f32.mrf.mxu0
        %v2701 = vadd.f32 0.0, %v2700
        %v2702 = vpop.f32.mrf.mxu0
        %v2703 = vadd.f32 0.0, %v2702
        %2704 = vmatmul.bf16.gmra.mxu0 %v2616
        %v2705 = vpop.f32.mrf.mxu0
        %v2706 = vadd.f32 0.0, %v2705
        %v2707 = vpop.f32.mrf.mxu0
        %v2708 = vadd.f32 0.0, %v2707
        %2709 = vdwg.mxu0
        %v2710 = vadd.f32 %v2312, %v2631
        %v2711 = vadd.f32 %v2313, %v2633
        %v2712 = vadd.f32 %v2314, %v2636
        %v2713 = vadd.f32 %v2315, %v2638
        %v2714 = vadd.f32 %v2316, %v2641
        %v2715 = vadd.f32 %v2317, %v2643
        %v2716 = vadd.f32 %v2318, %v2646
        %v2717 = vadd.f32 %v2319, %v2648
        %v2718 = vadd.f32 %v2320, %v2651
        %v2719 = vadd.f32 %v2321, %v2653
        %v2720 = vadd.f32 %v2322, %v2656
        %v2721 = vadd.f32 %v2323, %v2658
        %v2722 = vadd.f32 %v2324, %v2661
        %v2723 = vadd.f32 %v2325, %v2663
        %v2724 = vadd.f32 %v2326, %v2666
        %v2725 = vadd.f32 %v2327, %v2668
        %v2726 = vadd.f32 %v2328, %v2671
        %v2727 = vadd.f32 %v2329, %v2673
        %v2728 = vadd.f32 %v2330, %v2676
        %v2729 = vadd.f32 %v2331, %v2678
        %v2730 = vadd.f32 %v2332, %v2681
        %v2731 = vadd.f32 %v2333, %v2683
        %v2732 = vadd.f32 %v2334, %v2686
        %v2733 = vadd.f32 %v2335, %v2688
        %v2734 = vadd.f32 %v2336, %v2691
        %v2735 = vadd.f32 %v2337, %v2693
        %v2736 = vadd.f32 %v2338, %v2696
        %v2737 = vadd.f32 %v2339, %v2698
        %v2738 = vadd.f32 %v2340, %v2701
        %v2739 = vadd.f32 %v2341, %v2703
        %v2740 = vadd.f32 %v2342, %v2706
        %v2741 = vadd.f32 %v2343, %v2708
        %s2742 = scalar_lea.vmem %s168, 24
        %v2743 = vld [vmem:[%s2742] sm:$0xf]
        %v2744 = vld [vmem:[%s2742 + $0x4] sm:$0xf]
        %v2745 = vld [vmem:[%s2742 + $0xc] sm:$0xf]
        %v2746 = vld [vmem:[%s2742 + $0x10] sm:$0xf]
        %v2747 = vld [vmem:[%s2742 + $0x18] sm:$0xf]
        %v2748 = vld [vmem:[%s2742 + $0x1c] sm:$0xf]
        %v2749 = vld [vmem:[%s2742 + $0x24] sm:$0xf]
        %v2750 = vld [vmem:[%s2742 + $0x28] sm:$0xf]
        %v2751 = vld [vmem:[%s2742 + $0x30] sm:$0xf]
        %v2752 = vld [vmem:[%s2742 + $0x34] sm:$0xf]
        %v2753 = vld [vmem:[%s2742 + $0x3c] sm:$0xf]
        %v2754 = vld [vmem:[%s2742 + $0x40] sm:$0xf]
        %v2755 = vld [vmem:[%s2742 + $0x48] sm:$0xf]
        %v2756 = vld [vmem:[%s2742 + $0x4c] sm:$0xf]
        %v2757 = vld [vmem:[%s2742 + $0x54] sm:$0xf]
        %v2758 = vld [vmem:[%s2742 + $0x58] sm:$0xf]
        %v2759 = vld [vmem:[%s2742 + $0x60] sm:$0xf]
        %v2760 = vld [vmem:[%s2742 + $0x64] sm:$0xf]
        %v2761 = vld [vmem:[%s2742 + $0x6c] sm:$0xf]
        %v2762 = vld [vmem:[%s2742 + $0x70] sm:$0xf]
        %v2763 = vld [vmem:[%s2742 + $0x78] sm:$0xf]
        %v2764 = vld [vmem:[%s2742 + $0x7c] sm:$0xf]
        %v2765 = vld [vmem:[%s2742 + $0x84] sm:$0xf]
        %v2766 = vld [vmem:[%s2742 + $0x88] sm:$0xf]
        %v2767 = vld [vmem:[%s2742 + $0x90] sm:$0xf]
        %v2768 = vld [vmem:[%s2742 + $0x94] sm:$0xf]
        %v2769 = vld [vmem:[%s2742 + $0x9c] sm:$0xf]
        %v2770 = vld [vmem:[%s2742 + $0xa0] sm:$0xf]
        %v2771 = vld [vmem:[%s2742 + $0xa8] sm:$0xf]
        %v2772 = vld [vmem:[%s2742 + $0xac] sm:$0xf]
        %v2773 = vld [vmem:[%s2742 + $0xb4] sm:$0xf]
        %v2774 = vld [vmem:[%s2742 + $0xb8] sm:$0xf]
        %s2775 = scalar_lea.vmem %s1, 12
        %v2776 = vld [vmem:[%s2775] sm:$0x3]
        %v2809 = vunpack.c.l.b16 %v2743
        %v2810 = vunpack.c.l.b16 %v2744
        %v2811 = vunpack.c.l.b16 %v2745
        %v2812 = vunpack.c.l.b16 %v2746
        %v2813 = vunpack.c.l.b16 %v2747
        %v2814 = vunpack.c.l.b16 %v2748
        %v2815 = vunpack.c.l.b16 %v2749
        %v2816 = vunpack.c.l.b16 %v2750
        %v2817 = vunpack.c.l.b16 %v2751
        %v2818 = vunpack.c.l.b16 %v2752
        %v2819 = vunpack.c.l.b16 %v2753
        %v2820 = vunpack.c.l.b16 %v2754
        %v2821 = vunpack.c.l.b16 %v2755
        %v2822 = vunpack.c.l.b16 %v2756
        %v2823 = vunpack.c.l.b16 %v2757
        %v2824 = vunpack.c.l.b16 %v2758
        %v2825 = vunpack.c.l.b16 %v2759
        %v2826 = vunpack.c.l.b16 %v2760
        %v2827 = vunpack.c.l.b16 %v2761
        %v2828 = vunpack.c.l.b16 %v2762
        %v2829 = vunpack.c.l.b16 %v2763
        %v2830 = vunpack.c.l.b16 %v2764
        %v2831 = vunpack.c.l.b16 %v2765
        %v2832 = vunpack.c.l.b16 %v2766
        %v2833 = vunpack.c.l.b16 %v2767
        %v2834 = vunpack.c.l.b16 %v2768
        %v2835 = vunpack.c.l.b16 %v2769
        %v2836 = vunpack.c.l.b16 %v2770
        %v2837 = vunpack.c.l.b16 %v2771
        %v2838 = vunpack.c.l.b16 %v2772
        %v2839 = vunpack.c.l.b16 %v2773
        %v2840 = vunpack.c.l.b16 %v2774
        %v2841 = vpack.c.b16 %v2810, %v2809
        %v2842 = vpack.c.b16 %v2812, %v2811
        %v2843 = vpack.c.b16 %v2814, %v2813
        %v2844 = vpack.c.b16 %v2816, %v2815
        %v2845 = vpack.c.b16 %v2818, %v2817
        %v2846 = vpack.c.b16 %v2820, %v2819
        %v2847 = vpack.c.b16 %v2822, %v2821
        %v2848 = vpack.c.b16 %v2824, %v2823
        %v2849 = vpack.c.b16 %v2826, %v2825
        %v2850 = vpack.c.b16 %v2828, %v2827
        %v2851 = vpack.c.b16 %v2830, %v2829
        %v2852 = vpack.c.b16 %v2832, %v2831
        %v2853 = vpack.c.b16 %v2834, %v2833
        %v2854 = vpack.c.b16 %v2836, %v2835
        %v2855 = vpack.c.b16 %v2838, %v2837
        %v2856 = vpack.c.b16 %v2840, %v2839
        %v2858 = vsel %vm656, %v2841, 0
        %v2861 = vsel %vm656, %v2842, 0
        %v2864 = vsel %vm656, %v2843, 0
        %v2867 = vsel %vm656, %v2844, 0
        %v2870 = vsel %vm656, %v2845, 0
        %v2873 = vsel %vm656, %v2846, 0
        %v2876 = vsel %vm656, %v2847, 0
        %v2879 = vsel %vm656, %v2848, 0
        %v2882 = vsel %vm656, %v2849, 0
        %v2885 = vsel %vm656, %v2850, 0
        %v2888 = vsel %vm656, %v2851, 0
        %v2891 = vsel %vm656, %v2852, 0
        %v2894 = vsel %vm656, %v2853, 0
        %v2897 = vsel %vm656, %v2854, 0
        %v2900 = vsel %vm656, %v2855, 0
        %v2903 = vsel %vm656, %v2856, 0
        %v2906 = vsel %vm705, %v2776, 0
        %2908 = vmatpush.bf16.msra.mxu0 0
        %2909 = vmatpush.bf16.msra.mxu0 0
        %2910 = vmatpush.bf16.msra.mxu0 0
        %2911 = vmatpush.bf16.msra.mxu0 0
        %2912 = vmatpush.bf16.msra.mxu0 0
        %2913 = vmatpush.bf16.msra.mxu0 0
        %2914 = vmatpush.bf16.msra.mxu0 0
        %2915 = vmatpush.bf16.msra.mxu0 %v2906
        %2916 = vmatmul.bf16.gmra.mxu0 %v2858
        %v2917 = vpop.f32.mrf.mxu0
        %v2918 = vadd.f32 0.0, %v2917
        %v2919 = vpop.f32.mrf.mxu0
        %v2920 = vadd.f32 0.0, %v2919
        %2921 = vmatmul.bf16.gmra.mxu0 %v2861
        %v2922 = vpop.f32.mrf.mxu0
        %v2923 = vadd.f32 0.0, %v2922
        %v2924 = vpop.f32.mrf.mxu0
        %v2925 = vadd.f32 0.0, %v2924
        %2926 = vmatmul.bf16.gmra.mxu0 %v2864
        %v2927 = vpop.f32.mrf.mxu0
        %v2928 = vadd.f32 0.0, %v2927
        %v2929 = vpop.f32.mrf.mxu0
        %v2930 = vadd.f32 0.0, %v2929
        %2931 = vmatmul.bf16.gmra.mxu0 %v2867
        %v2932 = vpop.f32.mrf.mxu0
        %v2933 = vadd.f32 0.0, %v2932
        %v2934 = vpop.f32.mrf.mxu0
        %v2935 = vadd.f32 0.0, %v2934
        %2936 = vmatmul.bf16.gmra.mxu0 %v2870
        %v2937 = vpop.f32.mrf.mxu0
        %v2938 = vadd.f32 0.0, %v2937
        %v2939 = vpop.f32.mrf.mxu0
        %v2940 = vadd.f32 0.0, %v2939
        %2941 = vmatmul.bf16.gmra.mxu0 %v2873
        %v2942 = vpop.f32.mrf.mxu0
        %v2943 = vadd.f32 0.0, %v2942
        %v2944 = vpop.f32.mrf.mxu0
        %v2945 = vadd.f32 0.0, %v2944
        %2946 = vmatmul.bf16.gmra.mxu0 %v2876
        %v2947 = vpop.f32.mrf.mxu0
        %v2948 = vadd.f32 0.0, %v2947
        %v2949 = vpop.f32.mrf.mxu0
        %v2950 = vadd.f32 0.0, %v2949
        %2951 = vmatmul.bf16.gmra.mxu0 %v2879
        %v2952 = vpop.f32.mrf.mxu0
        %v2953 = vadd.f32 0.0, %v2952
        %v2954 = vpop.f32.mrf.mxu0
        %v2955 = vadd.f32 0.0, %v2954
        %2956 = vmatmul.bf16.gmra.mxu0 %v2882
        %v2957 = vpop.f32.mrf.mxu0
        %v2958 = vadd.f32 0.0, %v2957
        %v2959 = vpop.f32.mrf.mxu0
        %v2960 = vadd.f32 0.0, %v2959
        %2961 = vmatmul.bf16.gmra.mxu0 %v2885
        %v2962 = vpop.f32.mrf.mxu0
        %v2963 = vadd.f32 0.0, %v2962
        %v2964 = vpop.f32.mrf.mxu0
        %v2965 = vadd.f32 0.0, %v2964
        %2966 = vmatmul.bf16.gmra.mxu0 %v2888
        %v2967 = vpop.f32.mrf.mxu0
        %v2968 = vadd.f32 0.0, %v2967
        %v2969 = vpop.f32.mrf.mxu0
        %v2970 = vadd.f32 0.0, %v2969
        %2971 = vmatmul.bf16.gmra.mxu0 %v2891
        %v2972 = vpop.f32.mrf.mxu0
        %v2973 = vadd.f32 0.0, %v2972
        %v2974 = vpop.f32.mrf.mxu0
        %v2975 = vadd.f32 0.0, %v2974
        %2976 = vmatmul.bf16.gmra.mxu0 %v2894
        %v2977 = vpop.f32.mrf.mxu0
        %v2978 = vadd.f32 0.0, %v2977
        %v2979 = vpop.f32.mrf.mxu0
        %v2980 = vadd.f32 0.0, %v2979
        %2981 = vmatmul.bf16.gmra.mxu0 %v2897
        %v2982 = vpop.f32.mrf.mxu0
        %v2983 = vadd.f32 0.0, %v2982
        %v2984 = vpop.f32.mrf.mxu0
        %v2985 = vadd.f32 0.0, %v2984
        %2986 = vmatmul.bf16.gmra.mxu0 %v2900
        %v2987 = vpop.f32.mrf.mxu0
        %v2988 = vadd.f32 0.0, %v2987
        %v2989 = vpop.f32.mrf.mxu0
        %v2990 = vadd.f32 0.0, %v2989
        %2991 = vmatmul.bf16.gmra.mxu0 %v2903
        %v2992 = vpop.f32.mrf.mxu0
        %v2993 = vadd.f32 0.0, %v2992
        %v2994 = vpop.f32.mrf.mxu0
        %v2995 = vadd.f32 0.0, %v2994
        %2996 = vdwg.mxu0
        %v2997 = vadd.f32 %v2710, %v2918
        %v2998 = vadd.f32 %v2711, %v2920
        %v2999 = vadd.f32 %v2712, %v2923
        %v3000 = vadd.f32 %v2713, %v2925
        %v3001 = vadd.f32 %v2714, %v2928
        %v3002 = vadd.f32 %v2715, %v2930
        %v3003 = vadd.f32 %v2716, %v2933
        %v3004 = vadd.f32 %v2717, %v2935
        %v3005 = vadd.f32 %v2718, %v2938
        %v3006 = vadd.f32 %v2719, %v2940
        %v3007 = vadd.f32 %v2720, %v2943
        %v3008 = vadd.f32 %v2721, %v2945
        %v3009 = vadd.f32 %v2722, %v2948
        %v3010 = vadd.f32 %v2723, %v2950
        %v3011 = vadd.f32 %v2724, %v2953
        %v3012 = vadd.f32 %v2725, %v2955
        %v3013 = vadd.f32 %v2726, %v2958
        %v3014 = vadd.f32 %v2727, %v2960
        %v3015 = vadd.f32 %v2728, %v2963
        %v3016 = vadd.f32 %v2729, %v2965
        %v3017 = vadd.f32 %v2730, %v2968
        %v3018 = vadd.f32 %v2731, %v2970
        %v3019 = vadd.f32 %v2732, %v2973
        %v3020 = vadd.f32 %v2733, %v2975
        %v3021 = vadd.f32 %v2734, %v2978
        %v3022 = vadd.f32 %v2735, %v2980
        %v3023 = vadd.f32 %v2736, %v2983
        %v3024 = vadd.f32 %v2737, %v2985
        %v3025 = vadd.f32 %v2738, %v2988
        %v3026 = vadd.f32 %v2739, %v2990
        %v3027 = vadd.f32 %v2740, %v2993
        %v3028 = vadd.f32 %v2741, %v2995
        %v3029 = vld [vmem:[%s2742] sm:$0xf]
        %v3030 = vld [vmem:[%s2742 + $0x4] sm:$0xf]
        %v3031 = vld [vmem:[%s2742 + $0x8] sm:$0x1]
        %v3032 = vld [vmem:[%s2742 + $0xc] sm:$0xf]
        %v3033 = vld [vmem:[%s2742 + $0x10] sm:$0xf]
        %v3034 = vld [vmem:[%s2742 + $0x14] sm:$0x1]
        %v3035 = vld [vmem:[%s2742 + $0x18] sm:$0xf]
        %v3036 = vld [vmem:[%s2742 + $0x1c] sm:$0xf]
        %v3037 = vld [vmem:[%s2742 + $0x20] sm:$0x1]
        %v3038 = vld [vmem:[%s2742 + $0x24] sm:$0xf]
        %v3039 = vld [vmem:[%s2742 + $0x28] sm:$0xf]
        %v3040 = vld [vmem:[%s2742 + $0x2c] sm:$0x1]
        %v3041 = vld [vmem:[%s2742 + $0x30] sm:$0xf]
        %v3042 = vld [vmem:[%s2742 + $0x34] sm:$0xf]
        %v3043 = vld [vmem:[%s2742 + $0x38] sm:$0x1]
        %v3044 = vld [vmem:[%s2742 + $0x3c] sm:$0xf]
        %v3045 = vld [vmem:[%s2742 + $0x40] sm:$0xf]
        %v3046 = vld [vmem:[%s2742 + $0x44] sm:$0x1]
        %v3047 = vld [vmem:[%s2742 + $0x48] sm:$0xf]
        %v3048 = vld [vmem:[%s2742 + $0x4c] sm:$0xf]
        %v3049 = vld [vmem:[%s2742 + $0x50] sm:$0x1]
        %v3050 = vld [vmem:[%s2742 + $0x54] sm:$0xf]
        %v3051 = vld [vmem:[%s2742 + $0x58] sm:$0xf]
        %v3052 = vld [vmem:[%s2742 + $0x5c] sm:$0x1]
        %v3053 = vld [vmem:[%s2742 + $0x60] sm:$0xf]
        %v3054 = vld [vmem:[%s2742 + $0x64] sm:$0xf]
        %v3055 = vld [vmem:[%s2742 + $0x68] sm:$0x1]
        %v3056 = vld [vmem:[%s2742 + $0x6c] sm:$0xf]
        %v3057 = vld [vmem:[%s2742 + $0x70] sm:$0xf]
        %v3058 = vld [vmem:[%s2742 + $0x74] sm:$0x1]
        %v3059 = vld [vmem:[%s2742 + $0x78] sm:$0xf]
        %v3060 = vld [vmem:[%s2742 + $0x7c] sm:$0xf]
        %v3061 = vld [vmem:[%s2742 + $0x80] sm:$0x1]
        %v3062 = vld [vmem:[%s2742 + $0x84] sm:$0xf]
        %v3063 = vld [vmem:[%s2742 + $0x88] sm:$0xf]
        %v3064 = vld [vmem:[%s2742 + $0x8c] sm:$0x1]
        %v3065 = vld [vmem:[%s2742 + $0x90] sm:$0xf]
        %v3066 = vld [vmem:[%s2742 + $0x94] sm:$0xf]
        %v3067 = vld [vmem:[%s2742 + $0x98] sm:$0x1]
        %v3068 = vld [vmem:[%s2742 + $0x9c] sm:$0xf]
        %v3069 = vld [vmem:[%s2742 + $0xa0] sm:$0xf]
        %v3070 = vld [vmem:[%s2742 + $0xa4] sm:$0x1]
        %v3071 = vld [vmem:[%s2742 + $0xa8] sm:$0xf]
        %v3072 = vld [vmem:[%s2742 + $0xac] sm:$0xf]
        %v3073 = vld [vmem:[%s2742 + $0xb0] sm:$0x1]
        %v3074 = vld [vmem:[%s2742 + $0xb4] sm:$0xf]
        %v3075 = vld [vmem:[%s2742 + $0xb8] sm:$0xf]
        %v3076 = vld [vmem:[%s2742 + $0xbc] sm:$0x1]
        %v3078 = vshrl.u32 %v3029, 16
        %v3080 = vrot.slane %v3078, 4
        %v3081 = vshll.u32 %v3029, 16
        %v3083 = vrot.slane %v3081, 5
        %v3084 = vor.u32 %v3080, %v3083
        %v3085 = vrot.slane %v3084, 4
        %v3087 = vshll.u32 %v3030, 16
        %v3089 = vrot.slane %v3087, 5
        %v3090 = vsel %vm221, %v3085, %v3089
        %v3091 = vshrl.u32 %v3030, 16
        %v3093 = vrot.slane %v3091, 4
        %v3094 = vor.u32 %v3093, %v3089
        %v3095 = vrot.slane %v3094, 4
        %v3097 = vshll.u32 %v3031, 16
        %v3099 = vrot.slane %v3097, 5
        %v3100 = vsel %vm221, %v3095, %v3099
        %v3102 = vshrl.u32 %v3032, 16
        %v3104 = vrot.slane %v3102, 4
        %v3105 = vshll.u32 %v3032, 16
        %v3107 = vrot.slane %v3105, 5
        %v3108 = vor.u32 %v3104, %v3107
        %v3109 = vrot.slane %v3108, 4
        %v3111 = vshll.u32 %v3033, 16
        %v3113 = vrot.slane %v3111, 5
        %v3114 = vsel %vm221, %v3109, %v3113
        %v3115 = vshrl.u32 %v3033, 16
        %v3117 = vrot.slane %v3115, 4
        %v3118 = vor.u32 %v3117, %v3113
        %v3119 = vrot.slane %v3118, 4
        %v3121 = vshll.u32 %v3034, 16
        %v3123 = vrot.slane %v3121, 5
        %v3124 = vsel %vm221, %v3119, %v3123
        %v3126 = vshrl.u32 %v3035, 16
        %v3128 = vrot.slane %v3126, 4
        %v3129 = vshll.u32 %v3035, 16
        %v3131 = vrot.slane %v3129, 5
        %v3132 = vor.u32 %v3128, %v3131
        %v3133 = vrot.slane %v3132, 4
        %v3135 = vshll.u32 %v3036, 16
        %v3137 = vrot.slane %v3135, 5
        %v3138 = vsel %vm221, %v3133, %v3137
        %v3139 = vshrl.u32 %v3036, 16
        %v3141 = vrot.slane %v3139, 4
        %v3142 = vor.u32 %v3141, %v3137
        %v3143 = vrot.slane %v3142, 4
        %v3145 = vshll.u32 %v3037, 16
        %v3147 = vrot.slane %v3145, 5
        %v3148 = vsel %vm221, %v3143, %v3147
        %v3150 = vshrl.u32 %v3038, 16
        %v3152 = vrot.slane %v3150, 4
        %v3153 = vshll.u32 %v3038, 16
        %v3155 = vrot.slane %v3153, 5
        %v3156 = vor.u32 %v3152, %v3155
        %v3157 = vrot.slane %v3156, 4
        %v3159 = vshll.u32 %v3039, 16
        %v3161 = vrot.slane %v3159, 5
        %v3162 = vsel %vm221, %v3157, %v3161
        %v3163 = vshrl.u32 %v3039, 16
        %v3165 = vrot.slane %v3163, 4
        %v3166 = vor.u32 %v3165, %v3161
        %v3167 = vrot.slane %v3166, 4
        %v3169 = vshll.u32 %v3040, 16
        %v3171 = vrot.slane %v3169, 5
        %v3172 = vsel %vm221, %v3167, %v3171
        %v3174 = vshrl.u32 %v3041, 16
        %v3176 = vrot.slane %v3174, 4
        %v3177 = vshll.u32 %v3041, 16
        %v3179 = vrot.slane %v3177, 5
        %v3180 = vor.u32 %v3176, %v3179
        %v3181 = vrot.slane %v3180, 4
        %v3183 = vshll.u32 %v3042, 16
        %v3185 = vrot.slane %v3183, 5
        %v3186 = vsel %vm221, %v3181, %v3185
        %v3187 = vshrl.u32 %v3042, 16
        %v3189 = vrot.slane %v3187, 4
        %v3190 = vor.u32 %v3189, %v3185
        %v3191 = vrot.slane %v3190, 4
        %v3193 = vshll.u32 %v3043, 16
        %v3195 = vrot.slane %v3193, 5
        %v3196 = vsel %vm221, %v3191, %v3195
        %v3198 = vshrl.u32 %v3044, 16
        %v3200 = vrot.slane %v3198, 4
        %v3201 = vshll.u32 %v3044, 16
        %v3203 = vrot.slane %v3201, 5
        %v3204 = vor.u32 %v3200, %v3203
        %v3205 = vrot.slane %v3204, 4
        %v3207 = vshll.u32 %v3045, 16
        %v3209 = vrot.slane %v3207, 5
        %v3210 = vsel %vm221, %v3205, %v3209
        %v3211 = vshrl.u32 %v3045, 16
        %v3213 = vrot.slane %v3211, 4
        %v3214 = vor.u32 %v3213, %v3209
        %v3215 = vrot.slane %v3214, 4
        %v3217 = vshll.u32 %v3046, 16
        %v3219 = vrot.slane %v3217, 5
        %v3220 = vsel %vm221, %v3215, %v3219
        %v3222 = vshrl.u32 %v3047, 16
        %v3224 = vrot.slane %v3222, 4
        %v3225 = vshll.u32 %v3047, 16
        %v3227 = vrot.slane %v3225, 5
        %v3228 = vor.u32 %v3224, %v3227
        %v3229 = vrot.slane %v3228, 4
        %v3231 = vshll.u32 %v3048, 16
        %v3233 = vrot.slane %v3231, 5
        %v3234 = vsel %vm221, %v3229, %v3233
        %v3235 = vshrl.u32 %v3048, 16
        %v3237 = vrot.slane %v3235, 4
        %v3238 = vor.u32 %v3237, %v3233
        %v3239 = vrot.slane %v3238, 4
        %v3241 = vshll.u32 %v3049, 16
        %v3243 = vrot.slane %v3241, 5
        %v3244 = vsel %vm221, %v3239, %v3243
        %v3246 = vshrl.u32 %v3050, 16
        %v3248 = vrot.slane %v3246, 4
        %v3249 = vshll.u32 %v3050, 16
        %v3251 = vrot.slane %v3249, 5
        %v3252 = vor.u32 %v3248, %v3251
        %v3253 = vrot.slane %v3252, 4
        %v3255 = vshll.u32 %v3051, 16
        %v3257 = vrot.slane %v3255, 5
        %v3258 = vsel %vm221, %v3253, %v3257
        %v3259 = vshrl.u32 %v3051, 16
        %v3261 = vrot.slane %v3259, 4
        %v3262 = vor.u32 %v3261, %v3257
        %v3263 = vrot.slane %v3262, 4
        %v3265 = vshll.u32 %v3052, 16
        %v3267 = vrot.slane %v3265, 5
        %v3268 = vsel %vm221, %v3263, %v3267
        %v3270 = vshrl.u32 %v3053, 16
        %v3272 = vrot.slane %v3270, 4
        %v3273 = vshll.u32 %v3053, 16
        %v3275 = vrot.slane %v3273, 5
        %v3276 = vor.u32 %v3272, %v3275
        %v3277 = vrot.slane %v3276, 4
        %v3279 = vshll.u32 %v3054, 16
        %v3281 = vrot.slane %v3279, 5
        %v3282 = vsel %vm221, %v3277, %v3281
        %v3283 = vshrl.u32 %v3054, 16
        %v3285 = vrot.slane %v3283, 4
        %v3286 = vor.u32 %v3285, %v3281
        %v3287 = vrot.slane %v3286, 4
        %v3289 = vshll.u32 %v3055, 16
        %v3291 = vrot.slane %v3289, 5
        %v3292 = vsel %vm221, %v3287, %v3291
        %v3294 = vshrl.u32 %v3056, 16
        %v3296 = vrot.slane %v3294, 4
        %v3297 = vshll.u32 %v3056, 16
        %v3299 = vrot.slane %v3297, 5
        %v3300 = vor.u32 %v3296, %v3299
        %v3301 = vrot.slane %v3300, 4
        %v3303 = vshll.u32 %v3057, 16
        %v3305 = vrot.slane %v3303, 5
        %v3306 = vsel %vm221, %v3301, %v3305
        %v3307 = vshrl.u32 %v3057, 16
        %v3309 = vrot.slane %v3307, 4
        %v3310 = vor.u32 %v3309, %v3305
        %v3311 = vrot.slane %v3310, 4
        %v3313 = vshll.u32 %v3058, 16
        %v3315 = vrot.slane %v3313, 5
        %v3316 = vsel %vm221, %v3311, %v3315
        %v3318 = vshrl.u32 %v3059, 16
        %v3320 = vrot.slane %v3318, 4
        %v3321 = vshll.u32 %v3059, 16
        %v3323 = vrot.slane %v3321, 5
        %v3324 = vor.u32 %v3320, %v3323
        %v3325 = vrot.slane %v3324, 4
        %v3327 = vshll.u32 %v3060, 16
        %v3329 = vrot.slane %v3327, 5
        %v3330 = vsel %vm221, %v3325, %v3329
        %v3331 = vshrl.u32 %v3060, 16
        %v3333 = vrot.slane %v3331, 4
        %v3334 = vor.u32 %v3333, %v3329
        %v3335 = vrot.slane %v3334, 4
        %v3337 = vshll.u32 %v3061, 16
        %v3339 = vrot.slane %v3337, 5
        %v3340 = vsel %vm221, %v3335, %v3339
        %v3342 = vshrl.u32 %v3062, 16
        %v3344 = vrot.slane %v3342, 4
        %v3345 = vshll.u32 %v3062, 16
        %v3347 = vrot.slane %v3345, 5
        %v3348 = vor.u32 %v3344, %v3347
        %v3349 = vrot.slane %v3348, 4
        %v3351 = vshll.u32 %v3063, 16
        %v3353 = vrot.slane %v3351, 5
        %v3354 = vsel %vm221, %v3349, %v3353
        %v3355 = vshrl.u32 %v3063, 16
        %v3357 = vrot.slane %v3355, 4
        %v3358 = vor.u32 %v3357, %v3353
        %v3359 = vrot.slane %v3358, 4
        %v3361 = vshll.u32 %v3064, 16
        %v3363 = vrot.slane %v3361, 5
        %v3364 = vsel %vm221, %v3359, %v3363
        %v3366 = vshrl.u32 %v3065, 16
        %v3368 = vrot.slane %v3366, 4
        %v3369 = vshll.u32 %v3065, 16
        %v3371 = vrot.slane %v3369, 5
        %v3372 = vor.u32 %v3368, %v3371
        %v3373 = vrot.slane %v3372, 4
        %v3375 = vshll.u32 %v3066, 16
        %v3377 = vrot.slane %v3375, 5
        %v3378 = vsel %vm221, %v3373, %v3377
        %v3379 = vshrl.u32 %v3066, 16
        %v3381 = vrot.slane %v3379, 4
        %v3382 = vor.u32 %v3381, %v3377
        %v3383 = vrot.slane %v3382, 4
        %v3385 = vshll.u32 %v3067, 16
        %v3387 = vrot.slane %v3385, 5
        %v3388 = vsel %vm221, %v3383, %v3387
        %v3390 = vshrl.u32 %v3068, 16
        %v3392 = vrot.slane %v3390, 4
        %v3393 = vshll.u32 %v3068, 16
        %v3395 = vrot.slane %v3393, 5
        %v3396 = vor.u32 %v3392, %v3395
        %v3397 = vrot.slane %v3396, 4
        %v3399 = vshll.u32 %v3069, 16
        %v3401 = vrot.slane %v3399, 5
        %v3402 = vsel %vm221, %v3397, %v3401
        %v3403 = vshrl.u32 %v3069, 16
        %v3405 = vrot.slane %v3403, 4
        %v3406 = vor.u32 %v3405, %v3401
        %v3407 = vrot.slane %v3406, 4
        %v3409 = vshll.u32 %v3070, 16
        %v3411 = vrot.slane %v3409, 5
        %v3412 = vsel %vm221, %v3407, %v3411
        %v3414 = vshrl.u32 %v3071, 16
        %v3416 = vrot.slane %v3414, 4
        %v3417 = vshll.u32 %v3071, 16
        %v3419 = vrot.slane %v3417, 5
        %v3420 = vor.u32 %v3416, %v3419
        %v3421 = vrot.slane %v3420, 4
        %v3423 = vshll.u32 %v3072, 16
        %v3425 = vrot.slane %v3423, 5
        %v3426 = vsel %vm221, %v3421, %v3425
        %v3427 = vshrl.u32 %v3072, 16
        %v3429 = vrot.slane %v3427, 4
        %v3430 = vor.u32 %v3429, %v3425
        %v3431 = vrot.slane %v3430, 4
        %v3433 = vshll.u32 %v3073, 16
        %v3435 = vrot.slane %v3433, 5
        %v3436 = vsel %vm221, %v3431, %v3435
        %v3438 = vshrl.u32 %v3074, 16
        %v3440 = vrot.slane %v3438, 4
        %v3441 = vshll.u32 %v3074, 16
        %v3443 = vrot.slane %v3441, 5
        %v3444 = vor.u32 %v3440, %v3443
        %v3445 = vrot.slane %v3444, 4
        %v3447 = vshll.u32 %v3075, 16
        %v3449 = vrot.slane %v3447, 5
        %v3450 = vsel %vm221, %v3445, %v3449
        %v3451 = vshrl.u32 %v3075, 16
        %v3453 = vrot.slane %v3451, 4
        %v3454 = vor.u32 %v3453, %v3449
        %v3455 = vrot.slane %v3454, 4
        %v3457 = vshll.u32 %v3076, 16
        %v3459 = vrot.slane %v3457, 5
        %v3460 = vsel %vm221, %v3455, %v3459
        %s3461 = scalar_lea.vmem %s1, 14
        %v3462 = vld [vmem:[%s3461] sm:$0x3]
        %v3463 = vunpack.c.l.b16 %v3090
        %v3464 = vunpack.c.l.b16 %v3100
        %v3465 = vunpack.c.l.b16 %v3114
        %v3466 = vunpack.c.l.b16 %v3124
        %v3467 = vunpack.c.l.b16 %v3138
        %v3468 = vunpack.c.l.b16 %v3148
        %v3469 = vunpack.c.l.b16 %v3162
        %v3470 = vunpack.c.l.b16 %v3172
        %v3471 = vunpack.c.l.b16 %v3186
        %v3472 = vunpack.c.l.b16 %v3196
        %v3473 = vunpack.c.l.b16 %v3210
        %v3474 = vunpack.c.l.b16 %v3220
        %v3475 = vunpack.c.l.b16 %v3234
        %v3476 = vunpack.c.l.b16 %v3244
        %v3477 = vunpack.c.l.b16 %v3258
        %v3478 = vunpack.c.l.b16 %v3268
        %v3479 = vunpack.c.l.b16 %v3282
        %v3480 = vunpack.c.l.b16 %v3292
        %v3481 = vunpack.c.l.b16 %v3306
        %v3482 = vunpack.c.l.b16 %v3316
        %v3483 = vunpack.c.l.b16 %v3330
        %v3484 = vunpack.c.l.b16 %v3340
        %v3485 = vunpack.c.l.b16 %v3354
        %v3486 = vunpack.c.l.b16 %v3364
        %v3487 = vunpack.c.l.b16 %v3378
        %v3488 = vunpack.c.l.b16 %v3388
        %v3489 = vunpack.c.l.b16 %v3402
        %v3490 = vunpack.c.l.b16 %v3412
        %v3491 = vunpack.c.l.b16 %v3426
        %v3492 = vunpack.c.l.b16 %v3436
        %v3493 = vunpack.c.l.b16 %v3450
        %v3494 = vunpack.c.l.b16 %v3460
        %v3495 = vpack.c.b16 %v3464, %v3463
        %v3496 = vpack.c.b16 %v3466, %v3465
        %v3497 = vpack.c.b16 %v3468, %v3467
        %v3498 = vpack.c.b16 %v3470, %v3469
        %v3499 = vpack.c.b16 %v3472, %v3471
        %v3500 = vpack.c.b16 %v3474, %v3473
        %v3501 = vpack.c.b16 %v3476, %v3475
        %v3502 = vpack.c.b16 %v3478, %v3477
        %v3503 = vpack.c.b16 %v3480, %v3479
        %v3504 = vpack.c.b16 %v3482, %v3481
        %v3505 = vpack.c.b16 %v3484, %v3483
        %v3506 = vpack.c.b16 %v3486, %v3485
        %v3507 = vpack.c.b16 %v3488, %v3487
        %v3508 = vpack.c.b16 %v3490, %v3489
        %v3509 = vpack.c.b16 %v3492, %v3491
        %v3510 = vpack.c.b16 %v3494, %v3493
        %v3512 = vsel %vm656, %v3495, 0
        %v3515 = vsel %vm656, %v3496, 0
        %v3518 = vsel %vm656, %v3497, 0
        %v3521 = vsel %vm656, %v3498, 0
        %v3524 = vsel %vm656, %v3499, 0
        %v3527 = vsel %vm656, %v3500, 0
        %v3530 = vsel %vm656, %v3501, 0
        %v3533 = vsel %vm656, %v3502, 0
        %v3536 = vsel %vm656, %v3503, 0
        %v3539 = vsel %vm656, %v3504, 0
        %v3542 = vsel %vm656, %v3505, 0
        %v3545 = vsel %vm656, %v3506, 0
        %v3548 = vsel %vm656, %v3507, 0
        %v3551 = vsel %vm656, %v3508, 0
        %v3554 = vsel %vm656, %v3509, 0
        %v3557 = vsel %vm656, %v3510, 0
        %v3560 = vsel %vm705, %v3462, 0
        %3562 = vmatpush.bf16.msra.mxu0 0
        %3563 = vmatpush.bf16.msra.mxu0 0
        %3564 = vmatpush.bf16.msra.mxu0 0
        %3565 = vmatpush.bf16.msra.mxu0 0
        %3566 = vmatpush.bf16.msra.mxu0 0
        %3567 = vmatpush.bf16.msra.mxu0 0
        %3568 = vmatpush.bf16.msra.mxu0 0
        %3569 = vmatpush.bf16.msra.mxu0 %v3560
        %3570 = vmatmul.bf16.gmra.mxu0 %v3512
        %v3571 = vpop.f32.mrf.mxu0
        %v3572 = vadd.f32 0.0, %v3571
        %v3573 = vpop.f32.mrf.mxu0
        %v3574 = vadd.f32 0.0, %v3573
        %3575 = vmatmul.bf16.gmra.mxu0 %v3515
        %v3576 = vpop.f32.mrf.mxu0
        %v3577 = vadd.f32 0.0, %v3576
        %v3578 = vpop.f32.mrf.mxu0
        %v3579 = vadd.f32 0.0, %v3578
        %3580 = vmatmul.bf16.gmra.mxu0 %v3518
        %v3581 = vpop.f32.mrf.mxu0
        %v3582 = vadd.f32 0.0, %v3581
        %v3583 = vpop.f32.mrf.mxu0
        %v3584 = vadd.f32 0.0, %v3583
        %3585 = vmatmul.bf16.gmra.mxu0 %v3521
        %v3586 = vpop.f32.mrf.mxu0
        %v3587 = vadd.f32 0.0, %v3586
        %v3588 = vpop.f32.mrf.mxu0
        %v3589 = vadd.f32 0.0, %v3588
        %3590 = vmatmul.bf16.gmra.mxu0 %v3524
        %v3591 = vpop.f32.mrf.mxu0
        %v3592 = vadd.f32 0.0, %v3591
        %v3593 = vpop.f32.mrf.mxu0
        %v3594 = vadd.f32 0.0, %v3593
        %3595 = vmatmul.bf16.gmra.mxu0 %v3527
        %v3596 = vpop.f32.mrf.mxu0
        %v3597 = vadd.f32 0.0, %v3596
        %v3598 = vpop.f32.mrf.mxu0
        %v3599 = vadd.f32 0.0, %v3598
        %3600 = vmatmul.bf16.gmra.mxu0 %v3530
        %v3601 = vpop.f32.mrf.mxu0
        %v3602 = vadd.f32 0.0, %v3601
        %v3603 = vpop.f32.mrf.mxu0
        %v3604 = vadd.f32 0.0, %v3603
        %3605 = vmatmul.bf16.gmra.mxu0 %v3533
        %v3606 = vpop.f32.mrf.mxu0
        %v3607 = vadd.f32 0.0, %v3606
        %v3608 = vpop.f32.mrf.mxu0
        %v3609 = vadd.f32 0.0, %v3608
        %3610 = vmatmul.bf16.gmra.mxu0 %v3536
        %v3611 = vpop.f32.mrf.mxu0
        %v3612 = vadd.f32 0.0, %v3611
        %v3613 = vpop.f32.mrf.mxu0
        %v3614 = vadd.f32 0.0, %v3613
        %3615 = vmatmul.bf16.gmra.mxu0 %v3539
        %v3616 = vpop.f32.mrf.mxu0
        %v3617 = vadd.f32 0.0, %v3616
        %v3618 = vpop.f32.mrf.mxu0
        %v3619 = vadd.f32 0.0, %v3618
        %3620 = vmatmul.bf16.gmra.mxu0 %v3542
        %v3621 = vpop.f32.mrf.mxu0
        %v3622 = vadd.f32 0.0, %v3621
        %v3623 = vpop.f32.mrf.mxu0
        %v3624 = vadd.f32 0.0, %v3623
        %3625 = vmatmul.bf16.gmra.mxu0 %v3545
        %v3626 = vpop.f32.mrf.mxu0
        %v3627 = vadd.f32 0.0, %v3626
        %v3628 = vpop.f32.mrf.mxu0
        %v3629 = vadd.f32 0.0, %v3628
        %3630 = vmatmul.bf16.gmra.mxu0 %v3548
        %v3631 = vpop.f32.mrf.mxu0
        %v3632 = vadd.f32 0.0, %v3631
        %v3633 = vpop.f32.mrf.mxu0
        %v3634 = vadd.f32 0.0, %v3633
        %3635 = vmatmul.bf16.gmra.mxu0 %v3551
        %v3636 = vpop.f32.mrf.mxu0
        %v3637 = vadd.f32 0.0, %v3636
        %v3638 = vpop.f32.mrf.mxu0
        %v3639 = vadd.f32 0.0, %v3638
        %3640 = vmatmul.bf16.gmra.mxu0 %v3554
        %v3641 = vpop.f32.mrf.mxu0
        %v3642 = vadd.f32 0.0, %v3641
        %v3643 = vpop.f32.mrf.mxu0
        %v3644 = vadd.f32 0.0, %v3643
        %3645 = vmatmul.bf16.gmra.mxu0 %v3557
        %v3646 = vpop.f32.mrf.mxu0
        %v3647 = vadd.f32 0.0, %v3646
        %v3648 = vpop.f32.mrf.mxu0
        %v3649 = vadd.f32 0.0, %v3648
        %3650 = vdwg.mxu0
        %v3651 = vadd.f32 %v2997, %v3572
        %v3652 = vadd.f32 %v2998, %v3574
        %v3653 = vadd.f32 %v2999, %v3577
        %v3654 = vadd.f32 %v3000, %v3579
        %v3655 = vadd.f32 %v3001, %v3582
        %v3656 = vadd.f32 %v3002, %v3584
        %v3657 = vadd.f32 %v3003, %v3587
        %v3658 = vadd.f32 %v3004, %v3589
        %v3659 = vadd.f32 %v3005, %v3592
        %v3660 = vadd.f32 %v3006, %v3594
        %v3661 = vadd.f32 %v3007, %v3597
        %v3662 = vadd.f32 %v3008, %v3599
        %v3663 = vadd.f32 %v3009, %v3602
        %v3664 = vadd.f32 %v3010, %v3604
        %v3665 = vadd.f32 %v3011, %v3607
        %v3666 = vadd.f32 %v3012, %v3609
        %v3667 = vadd.f32 %v3013, %v3612
        %v3668 = vadd.f32 %v3014, %v3614
        %v3669 = vadd.f32 %v3015, %v3617
        %v3670 = vadd.f32 %v3016, %v3619
        %v3671 = vadd.f32 %v3017, %v3622
        %v3672 = vadd.f32 %v3018, %v3624
        %v3673 = vadd.f32 %v3019, %v3627
        %v3674 = vadd.f32 %v3020, %v3629
        %v3675 = vadd.f32 %v3021, %v3632
        %v3676 = vadd.f32 %v3022, %v3634
        %v3677 = vadd.f32 %v3023, %v3637
        %v3678 = vadd.f32 %v3024, %v3639
        %v3679 = vadd.f32 %v3025, %v3642
        %v3680 = vadd.f32 %v3026, %v3644
        %v3681 = vadd.f32 %v3027, %v3647
        %v3682 = vadd.f32 %v3028, %v3649
        %v3683 = vld [vmem:[%s2742] sm:$0xe]
        %v3684 = vld [vmem:[%s2742 + $0xc] sm:$0xe]
        %v3685 = vld [vmem:[%s2742 + $0x18] sm:$0xe]
        %v3686 = vld [vmem:[%s2742 + $0x24] sm:$0xe]
        %v3687 = vld [vmem:[%s2742 + $0x30] sm:$0xe]
        %v3688 = vld [vmem:[%s2742 + $0x3c] sm:$0xe]
        %v3689 = vld [vmem:[%s2742 + $0x48] sm:$0xe]
        %v3690 = vld [vmem:[%s2742 + $0x54] sm:$0xe]
        %v3691 = vld [vmem:[%s2742 + $0x60] sm:$0xe]
        %v3692 = vld [vmem:[%s2742 + $0x6c] sm:$0xe]
        %v3693 = vld [vmem:[%s2742 + $0x78] sm:$0xe]
        %v3694 = vld [vmem:[%s2742 + $0x84] sm:$0xe]
        %v3695 = vld [vmem:[%s2742 + $0x90] sm:$0xe]
        %v3696 = vld [vmem:[%s2742 + $0x9c] sm:$0xe]
        %v3697 = vld [vmem:[%s2742 + $0xa8] sm:$0xe]
        %v3698 = vld [vmem:[%s2742 + $0xb4] sm:$0xe]
        %v3747 = vrot.slane %v3683, 5
        %v3748 = vrot.slane %v3747, 4
        %v3749 = vrot.slane %v3030, 5
        %v3750 = vsel %vm1068, %v3748, %v3749
        %v3751 = vrot.slane %v3749, 4
        %v3752 = vrot.slane %v3031, 5
        %v3753 = vsel %vm1068, %v3751, %v3752
        %v3754 = vrot.slane %v3684, 5
        %v3755 = vrot.slane %v3754, 4
        %v3756 = vrot.slane %v3033, 5
        %v3757 = vsel %vm1068, %v3755, %v3756
        %v3758 = vrot.slane %v3756, 4
        %v3759 = vrot.slane %v3034, 5
        %v3760 = vsel %vm1068, %v3758, %v3759
        %v3761 = vrot.slane %v3685, 5
        %v3762 = vrot.slane %v3761, 4
        %v3763 = vrot.slane %v3036, 5
        %v3764 = vsel %vm1068, %v3762, %v3763
        %v3765 = vrot.slane %v3763, 4
        %v3766 = vrot.slane %v3037, 5
        %v3767 = vsel %vm1068, %v3765, %v3766
        %v3768 = vrot.slane %v3686, 5
        %v3769 = vrot.slane %v3768, 4
        %v3770 = vrot.slane %v3039, 5
        %v3771 = vsel %vm1068, %v3769, %v3770
        %v3772 = vrot.slane %v3770, 4
        %v3773 = vrot.slane %v3040, 5
        %v3774 = vsel %vm1068, %v3772, %v3773
        %v3775 = vrot.slane %v3687, 5
        %v3776 = vrot.slane %v3775, 4
        %v3777 = vrot.slane %v3042, 5
        %v3778 = vsel %vm1068, %v3776, %v3777
        %v3779 = vrot.slane %v3777, 4
        %v3780 = vrot.slane %v3043, 5
        %v3781 = vsel %vm1068, %v3779, %v3780
        %v3782 = vrot.slane %v3688, 5
        %v3783 = vrot.slane %v3782, 4
        %v3784 = vrot.slane %v3045, 5
        %v3785 = vsel %vm1068, %v3783, %v3784
        %v3786 = vrot.slane %v3784, 4
        %v3787 = vrot.slane %v3046, 5
        %v3788 = vsel %vm1068, %v3786, %v3787
        %v3789 = vrot.slane %v3689, 5
        %v3790 = vrot.slane %v3789, 4
        %v3791 = vrot.slane %v3048, 5
        %v3792 = vsel %vm1068, %v3790, %v3791
        %v3793 = vrot.slane %v3791, 4
        %v3794 = vrot.slane %v3049, 5
        %v3795 = vsel %vm1068, %v3793, %v3794
        %v3796 = vrot.slane %v3690, 5
        %v3797 = vrot.slane %v3796, 4
        %v3798 = vrot.slane %v3051, 5
        %v3799 = vsel %vm1068, %v3797, %v3798
        %v3800 = vrot.slane %v3798, 4
        %v3801 = vrot.slane %v3052, 5
        %v3802 = vsel %vm1068, %v3800, %v3801
        %v3803 = vrot.slane %v3691, 5
        %v3804 = vrot.slane %v3803, 4
        %v3805 = vrot.slane %v3054, 5
        %v3806 = vsel %vm1068, %v3804, %v3805
        %v3807 = vrot.slane %v3805, 4
        %v3808 = vrot.slane %v3055, 5
        %v3809 = vsel %vm1068, %v3807, %v3808
        %v3810 = vrot.slane %v3692, 5
        %v3811 = vrot.slane %v3810, 4
        %v3812 = vrot.slane %v3057, 5
        %v3813 = vsel %vm1068, %v3811, %v3812
        %v3814 = vrot.slane %v3812, 4
        %v3815 = vrot.slane %v3058, 5
        %v3816 = vsel %vm1068, %v3814, %v3815
        %v3817 = vrot.slane %v3693, 5
        %v3818 = vrot.slane %v3817, 4
        %v3819 = vrot.slane %v3060, 5
        %v3820 = vsel %vm1068, %v3818, %v3819
        %v3821 = vrot.slane %v3819, 4
        %v3822 = vrot.slane %v3061, 5
        %v3823 = vsel %vm1068, %v3821, %v3822
        %v3824 = vrot.slane %v3694, 5
        %v3825 = vrot.slane %v3824, 4
        %v3826 = vrot.slane %v3063, 5
        %v3827 = vsel %vm1068, %v3825, %v3826
        %v3828 = vrot.slane %v3826, 4
        %v3829 = vrot.slane %v3064, 5
        %v3830 = vsel %vm1068, %v3828, %v3829
        %v3831 = vrot.slane %v3695, 5
        %v3832 = vrot.slane %v3831, 4
        %v3833 = vrot.slane %v3066, 5
        %v3834 = vsel %vm1068, %v3832, %v3833
        %v3835 = vrot.slane %v3833, 4
        %v3836 = vrot.slane %v3067, 5
        %v3837 = vsel %vm1068, %v3835, %v3836
        %v3838 = vrot.slane %v3696, 5
        %v3839 = vrot.slane %v3838, 4
        %v3840 = vrot.slane %v3069, 5
        %v3841 = vsel %vm1068, %v3839, %v3840
        %v3842 = vrot.slane %v3840, 4
        %v3843 = vrot.slane %v3070, 5
        %v3844 = vsel %vm1068, %v3842, %v3843
        %v3845 = vrot.slane %v3697, 5
        %v3846 = vrot.slane %v3845, 4
        %v3847 = vrot.slane %v3072, 5
        %v3848 = vsel %vm1068, %v3846, %v3847
        %v3849 = vrot.slane %v3847, 4
        %v3850 = vrot.slane %v3073, 5
        %v3851 = vsel %vm1068, %v3849, %v3850
        %v3852 = vrot.slane %v3698, 5
        %v3853 = vrot.slane %v3852, 4
        %v3854 = vrot.slane %v3075, 5
        %v3855 = vsel %vm1068, %v3853, %v3854
        %v3856 = vrot.slane %v3854, 4
        %v3857 = vrot.slane %v3076, 5
        %v3858 = vsel %vm1068, %v3856, %v3857
        %s3859 = scalar_lea.vmem %s1, 16
        %v3860 = vld [vmem:[%s3859] sm:$0x3]
        %v3861 = vunpack.c.l.b16 %v3750
        %v3862 = vunpack.c.l.b16 %v3753
        %v3863 = vunpack.c.l.b16 %v3757
        %v3864 = vunpack.c.l.b16 %v3760
        %v3865 = vunpack.c.l.b16 %v3764
        %v3866 = vunpack.c.l.b16 %v3767
        %v3867 = vunpack.c.l.b16 %v3771
        %v3868 = vunpack.c.l.b16 %v3774
        %v3869 = vunpack.c.l.b16 %v3778
        %v3870 = vunpack.c.l.b16 %v3781
        %v3871 = vunpack.c.l.b16 %v3785
        %v3872 = vunpack.c.l.b16 %v3788
        %v3873 = vunpack.c.l.b16 %v3792
        %v3874 = vunpack.c.l.b16 %v3795
        %v3875 = vunpack.c.l.b16 %v3799
        %v3876 = vunpack.c.l.b16 %v3802
        %v3877 = vunpack.c.l.b16 %v3806
        %v3878 = vunpack.c.l.b16 %v3809
        %v3879 = vunpack.c.l.b16 %v3813
        %v3880 = vunpack.c.l.b16 %v3816
        %v3881 = vunpack.c.l.b16 %v3820
        %v3882 = vunpack.c.l.b16 %v3823
        %v3883 = vunpack.c.l.b16 %v3827
        %v3884 = vunpack.c.l.b16 %v3830
        %v3885 = vunpack.c.l.b16 %v3834
        %v3886 = vunpack.c.l.b16 %v3837
        %v3887 = vunpack.c.l.b16 %v3841
        %v3888 = vunpack.c.l.b16 %v3844
        %v3889 = vunpack.c.l.b16 %v3848
        %v3890 = vunpack.c.l.b16 %v3851
        %v3891 = vunpack.c.l.b16 %v3855
        %v3892 = vunpack.c.l.b16 %v3858
        %v3893 = vpack.c.b16 %v3862, %v3861
        %v3894 = vpack.c.b16 %v3864, %v3863
        %v3895 = vpack.c.b16 %v3866, %v3865
        %v3896 = vpack.c.b16 %v3868, %v3867
        %v3897 = vpack.c.b16 %v3870, %v3869
        %v3898 = vpack.c.b16 %v3872, %v3871
        %v3899 = vpack.c.b16 %v3874, %v3873
        %v3900 = vpack.c.b16 %v3876, %v3875
        %v3901 = vpack.c.b16 %v3878, %v3877
        %v3902 = vpack.c.b16 %v3880, %v3879
        %v3903 = vpack.c.b16 %v3882, %v3881
        %v3904 = vpack.c.b16 %v3884, %v3883
        %v3905 = vpack.c.b16 %v3886, %v3885
        %v3906 = vpack.c.b16 %v3888, %v3887
        %v3907 = vpack.c.b16 %v3890, %v3889
        %v3908 = vpack.c.b16 %v3892, %v3891
        %v3910 = vsel %vm656, %v3893, 0
        %v3913 = vsel %vm656, %v3894, 0
        %v3916 = vsel %vm656, %v3895, 0
        %v3919 = vsel %vm656, %v3896, 0
        %v3922 = vsel %vm656, %v3897, 0
        %v3925 = vsel %vm656, %v3898, 0
        %v3928 = vsel %vm656, %v3899, 0
        %v3931 = vsel %vm656, %v3900, 0
        %v3934 = vsel %vm656, %v3901, 0
        %v3937 = vsel %vm656, %v3902, 0
        %v3940 = vsel %vm656, %v3903, 0
        %v3943 = vsel %vm656, %v3904, 0
        %v3946 = vsel %vm656, %v3905, 0
        %v3949 = vsel %vm656, %v3906, 0
        %v3952 = vsel %vm656, %v3907, 0
        %v3955 = vsel %vm656, %v3908, 0
        %v3958 = vsel %vm705, %v3860, 0
        %3960 = vmatpush.bf16.msra.mxu0 0
        %3961 = vmatpush.bf16.msra.mxu0 0
        %3962 = vmatpush.bf16.msra.mxu0 0
        %3963 = vmatpush.bf16.msra.mxu0 0
        %3964 = vmatpush.bf16.msra.mxu0 0
        %3965 = vmatpush.bf16.msra.mxu0 0
        %3966 = vmatpush.bf16.msra.mxu0 0
        %3967 = vmatpush.bf16.msra.mxu0 %v3958
        %3968 = vmatmul.bf16.gmra.mxu0 %v3910
        %v3969 = vpop.f32.mrf.mxu0
        %v3970 = vadd.f32 0.0, %v3969
        %v3971 = vpop.f32.mrf.mxu0
        %v3972 = vadd.f32 0.0, %v3971
        %3973 = vmatmul.bf16.gmra.mxu0 %v3913
        %v3974 = vpop.f32.mrf.mxu0
        %v3975 = vadd.f32 0.0, %v3974
        %v3976 = vpop.f32.mrf.mxu0
        %v3977 = vadd.f32 0.0, %v3976
        %3978 = vmatmul.bf16.gmra.mxu0 %v3916
        %v3979 = vpop.f32.mrf.mxu0
        %v3980 = vadd.f32 0.0, %v3979
        %v3981 = vpop.f32.mrf.mxu0
        %v3982 = vadd.f32 0.0, %v3981
        %3983 = vmatmul.bf16.gmra.mxu0 %v3919
        %v3984 = vpop.f32.mrf.mxu0
        %v3985 = vadd.f32 0.0, %v3984
        %v3986 = vpop.f32.mrf.mxu0
        %v3987 = vadd.f32 0.0, %v3986
        %3988 = vmatmul.bf16.gmra.mxu0 %v3922
        %v3989 = vpop.f32.mrf.mxu0
        %v3990 = vadd.f32 0.0, %v3989
        %v3991 = vpop.f32.mrf.mxu0
        %v3992 = vadd.f32 0.0, %v3991
        %3993 = vmatmul.bf16.gmra.mxu0 %v3925
        %v3994 = vpop.f32.mrf.mxu0
        %v3995 = vadd.f32 0.0, %v3994
        %v3996 = vpop.f32.mrf.mxu0
        %v3997 = vadd.f32 0.0, %v3996
        %3998 = vmatmul.bf16.gmra.mxu0 %v3928
        %v3999 = vpop.f32.mrf.mxu0
        %v4000 = vadd.f32 0.0, %v3999
        %v4001 = vpop.f32.mrf.mxu0
        %v4002 = vadd.f32 0.0, %v4001
        %4003 = vmatmul.bf16.gmra.mxu0 %v3931
        %v4004 = vpop.f32.mrf.mxu0
        %v4005 = vadd.f32 0.0, %v4004
        %v4006 = vpop.f32.mrf.mxu0
        %v4007 = vadd.f32 0.0, %v4006
        %4008 = vmatmul.bf16.gmra.mxu0 %v3934
        %v4009 = vpop.f32.mrf.mxu0
        %v4010 = vadd.f32 0.0, %v4009
        %v4011 = vpop.f32.mrf.mxu0
        %v4012 = vadd.f32 0.0, %v4011
        %4013 = vmatmul.bf16.gmra.mxu0 %v3937
        %v4014 = vpop.f32.mrf.mxu0
        %v4015 = vadd.f32 0.0, %v4014
        %v4016 = vpop.f32.mrf.mxu0
        %v4017 = vadd.f32 0.0, %v4016
        %4018 = vmatmul.bf16.gmra.mxu0 %v3940
        %v4019 = vpop.f32.mrf.mxu0
        %v4020 = vadd.f32 0.0, %v4019
        %v4021 = vpop.f32.mrf.mxu0
        %v4022 = vadd.f32 0.0, %v4021
        %4023 = vmatmul.bf16.gmra.mxu0 %v3943
        %v4024 = vpop.f32.mrf.mxu0
        %v4025 = vadd.f32 0.0, %v4024
        %v4026 = vpop.f32.mrf.mxu0
        %v4027 = vadd.f32 0.0, %v4026
        %4028 = vmatmul.bf16.gmra.mxu0 %v3946
        %v4029 = vpop.f32.mrf.mxu0
        %v4030 = vadd.f32 0.0, %v4029
        %v4031 = vpop.f32.mrf.mxu0
        %v4032 = vadd.f32 0.0, %v4031
        %4033 = vmatmul.bf16.gmra.mxu0 %v3949
        %v4034 = vpop.f32.mrf.mxu0
        %v4035 = vadd.f32 0.0, %v4034
        %v4036 = vpop.f32.mrf.mxu0
        %v4037 = vadd.f32 0.0, %v4036
        %4038 = vmatmul.bf16.gmra.mxu0 %v3952
        %v4039 = vpop.f32.mrf.mxu0
        %v4040 = vadd.f32 0.0, %v4039
        %v4041 = vpop.f32.mrf.mxu0
        %v4042 = vadd.f32 0.0, %v4041
        %4043 = vmatmul.bf16.gmra.mxu0 %v3955
        %v4044 = vpop.f32.mrf.mxu0
        %v4045 = vadd.f32 0.0, %v4044
        %v4046 = vpop.f32.mrf.mxu0
        %v4047 = vadd.f32 0.0, %v4046
        %4048 = vdwg.mxu0
        %v4049 = vadd.f32 %v3651, %v3970
        %v4050 = vadd.f32 %v3652, %v3972
        %v4051 = vadd.f32 %v3653, %v3975
        %v4052 = vadd.f32 %v3654, %v3977
        %v4053 = vadd.f32 %v3655, %v3980
        %v4054 = vadd.f32 %v3656, %v3982
        %v4055 = vadd.f32 %v3657, %v3985
        %v4056 = vadd.f32 %v3658, %v3987
        %v4057 = vadd.f32 %v3659, %v3990
        %v4058 = vadd.f32 %v3660, %v3992
        %v4059 = vadd.f32 %v3661, %v3995
        %v4060 = vadd.f32 %v3662, %v3997
        %v4061 = vadd.f32 %v3663, %v4000
        %v4062 = vadd.f32 %v3664, %v4002
        %v4063 = vadd.f32 %v3665, %v4005
        %v4064 = vadd.f32 %v3666, %v4007
        %v4065 = vadd.f32 %v3667, %v4010
        %v4066 = vadd.f32 %v3668, %v4012
        %v4067 = vadd.f32 %v3669, %v4015
        %v4068 = vadd.f32 %v3670, %v4017
        %v4069 = vadd.f32 %v3671, %v4020
        %v4070 = vadd.f32 %v3672, %v4022
        %v4071 = vadd.f32 %v3673, %v4025
        %v4072 = vadd.f32 %v3674, %v4027
        %v4073 = vadd.f32 %v3675, %v4030
        %v4074 = vadd.f32 %v3676, %v4032
        %v4075 = vadd.f32 %v3677, %v4035
        %v4076 = vadd.f32 %v3678, %v4037
        %v4077 = vadd.f32 %v3679, %v4040
        %v4078 = vadd.f32 %v3680, %v4042
        %v4079 = vadd.f32 %v3681, %v4045
        %v4080 = vadd.f32 %v3682, %v4047
        %v4081 = vld [vmem:[%s2] sm:$0x1]
        %v4083 = vperm.slane %v4081, 0
        %v4085 = vadd.f32 %v4049, %v4083
        %v4086 = vadd.f32 %v4050, %v4083
        %v4087 = vadd.f32 %v4051, %v4083
        %v4088 = vadd.f32 %v4052, %v4083
        %v4089 = vadd.f32 %v4053, %v4083
        %v4090 = vadd.f32 %v4054, %v4083
        %v4091 = vadd.f32 %v4055, %v4083
        %v4092 = vadd.f32 %v4056, %v4083
        %v4093 = vadd.f32 %v4057, %v4083
        %v4094 = vadd.f32 %v4058, %v4083
        %v4095 = vadd.f32 %v4059, %v4083
        %v4096 = vadd.f32 %v4060, %v4083
        %v4097 = vadd.f32 %v4061, %v4083
        %v4098 = vadd.f32 %v4062, %v4083
        %v4099 = vadd.f32 %v4063, %v4083
        %v4100 = vadd.f32 %v4064, %v4083
        %v4101 = vadd.f32 %v4065, %v4083
        %v4102 = vadd.f32 %v4066, %v4083
        %v4103 = vadd.f32 %v4067, %v4083
        %v4104 = vadd.f32 %v4068, %v4083
        %v4105 = vadd.f32 %v4069, %v4083
        %v4106 = vadd.f32 %v4070, %v4083
        %v4107 = vadd.f32 %v4071, %v4083
        %v4108 = vadd.f32 %v4072, %v4083
        %v4109 = vadd.f32 %v4073, %v4083
        %v4110 = vadd.f32 %v4074, %v4083
        %v4111 = vadd.f32 %v4075, %v4083
        %v4112 = vadd.f32 %v4076, %v4083
        %v4113 = vadd.f32 %v4077, %v4083
        %v4114 = vadd.f32 %v4078, %v4083
        %v4115 = vadd.f32 %v4079, %v4083
        %v4116 = vadd.f32 %v4080, %v4083
        %v4117 = vmax.f32 %v4085, 0.0
        %v4118 = vmax.f32 %v4086, 0.0
        %v4119 = vmax.f32 %v4087, 0.0
        %v4120 = vmax.f32 %v4088, 0.0
        %v4121 = vmax.f32 %v4089, 0.0
        %v4122 = vmax.f32 %v4090, 0.0
        %v4123 = vmax.f32 %v4091, 0.0
        %v4124 = vmax.f32 %v4092, 0.0
        %v4125 = vmax.f32 %v4093, 0.0
        %v4126 = vmax.f32 %v4094, 0.0
        %v4127 = vmax.f32 %v4095, 0.0
        %v4128 = vmax.f32 %v4096, 0.0
        %v4129 = vmax.f32 %v4097, 0.0
        %v4130 = vmax.f32 %v4098, 0.0
        %v4131 = vmax.f32 %v4099, 0.0
        %v4132 = vmax.f32 %v4100, 0.0
        %v4133 = vmax.f32 %v4101, 0.0
        %v4134 = vmax.f32 %v4102, 0.0
        %v4135 = vmax.f32 %v4103, 0.0
        %v4136 = vmax.f32 %v4104, 0.0
        %v4137 = vmax.f32 %v4105, 0.0
        %v4138 = vmax.f32 %v4106, 0.0
        %v4139 = vmax.f32 %v4107, 0.0
        %v4140 = vmax.f32 %v4108, 0.0
        %v4141 = vmax.f32 %v4109, 0.0
        %v4142 = vmax.f32 %v4110, 0.0
        %v4143 = vmax.f32 %v4111, 0.0
        %v4144 = vmax.f32 %v4112, 0.0
        %v4145 = vmax.f32 %v4113, 0.0
        %v4146 = vmax.f32 %v4114, 0.0
        %v4147 = vmax.f32 %v4115, 0.0
        %v4148 = vmax.f32 %v4116, 0.0
        %4149 = vst [vmem:[%s163] sm:$0xff] %v4117
        %4150 = vst [vmem:[%s163 + $0x8] sm:$0xff] %v4118
        %4151 = vst [vmem:[%s163 + $0x10] sm:$0xff] %v4119
        %4152 = vst [vmem:[%s163 + $0x18] sm:$0xff] %v4120
        %4153 = vst [vmem:[%s163 + $0x20] sm:$0xff] %v4121
        %4154 = vst [vmem:[%s163 + $0x28] sm:$0xff] %v4122
        %4155 = vst [vmem:[%s163 + $0x30] sm:$0xff] %v4123
        %4156 = vst [vmem:[%s163 + $0x38] sm:$0xff] %v4124
        %4157 = vst [vmem:[%s163 + $0x40] sm:$0xff] %v4125
        %4158 = vst [vmem:[%s163 + $0x48] sm:$0xff] %v4126
        %4159 = vst [vmem:[%s163 + $0x50] sm:$0xff] %v4127
        %4160 = vst [vmem:[%s163 + $0x58] sm:$0xff] %v4128
        %4161 = vst [vmem:[%s163 + $0x60] sm:$0xff] %v4129
        %4162 = vst [vmem:[%s163 + $0x68] sm:$0xff] %v4130
        %4163 = vst [vmem:[%s163 + $0x70] sm:$0xff] %v4131
        %4164 = vst [vmem:[%s163 + $0x78] sm:$0xff] %v4132
        %4165 = vst [vmem:[%s163 + $0x80] sm:$0xff] %v4133
        %4166 = vst [vmem:[%s163 + $0x88] sm:$0xff] %v4134
        %4167 = vst [vmem:[%s163 + $0x90] sm:$0xff] %v4135
        %4168 = vst [vmem:[%s163 + $0x98] sm:$0xff] %v4136
        %4169 = vst [vmem:[%s163 + $0xa0] sm:$0xff] %v4137
        %4170 = vst [vmem:[%s163 + $0xa8] sm:$0xff] %v4138
        %4171 = vst [vmem:[%s163 + $0xb0] sm:$0xff] %v4139
        %4172 = vst [vmem:[%s163 + $0xb8] sm:$0xff] %v4140
        %4173 = vst [vmem:[%s163 + $0xc0] sm:$0xff] %v4141
        %4174 = vst [vmem:[%s163 + $0xc8] sm:$0xff] %v4142
        %4175 = vst [vmem:[%s163 + $0xd0] sm:$0xff] %v4143
        %4176 = vst [vmem:[%s163 + $0xd8] sm:$0xff] %v4144
        %4177 = vst [vmem:[%s163 + $0xe0] sm:$0xff] %v4145
        %4178 = vst [vmem:[%s163 + $0xe8] sm:$0xff] %v4146
        %4179 = vst [vmem:[%s163 + $0xf0] sm:$0xff] %v4147
        %4180 = vst [vmem:[%s163 + $0xf8] sm:$0xff] %v4148
        %s4181 = sand.u32 %s93, 1
        %s4182 = scalar_lea.sflag [#allocation3], %s4181
        %s4183 = sand.u32 %s93, 1
        %s4184 = smul.addr %s4183, 256
        %s4185 = scalar_lea.vmem [#allocation2], %s4184
        // Predicated region
        $region33: #{tpu_custom_call.1} parent=31 // pred_check
          %p4186 = pneg %p103
        $region34: #{tpu_custom_call.1} parent=31 // pred_check_branch
          %4188 = sbr.rel (%p4186) target = $region36
        $region35: #{tpu_custom_call.1} parent=31 // pred_region
          %4190 = vsyncadd %s4182, 0
          %s4191 = smul.addr %s17, 32
          %s4192 = smul.addr %s4191, 8
          %s4193 = scalar_lea.hbm %s3, %s4192
          %s4194 = sshll.u32 %s4185, 4
          %s4195 = int_to_ptr.vmem [resolvable:$true] %s4194
          %s4196 = sshll.u32 %s4193, 4
          %s4197 = int_to_ptr.hbm [resolvable:$true] %s4196
          %4202 = dma.vmem_to_hbm [thread:$0]  %s4195, 4096, %s4197, %s4182, 128, 128, 8
        $region36: #{tpu_custom_call.1} parent=31 // pred_fallthru
          _
      $region32: #{tpu_custom_call.1} parent=5 // pred_fallthru
        _
      %p4203 = scmp.le.s32.totalorder 2, %s12
      // Predicated region
      $region37: #{tpu_custom_call.1} parent=5 // pred_check
        %p4204 = pneg %p4203
      $region38: #{tpu_custom_call.1} parent=5 // pred_check_branch
        %4206 = sbr.rel (%p4204) target = $region40
      $region39: #{tpu_custom_call.1} parent=5 // pred_region
        %s4207 = ssub.s32 %s12, 2
        // Predicated region
        $region41: #{tpu_custom_call.1} parent=39 // pred_check
          %p4208 = pneg %p109
        $region42: #{tpu_custom_call.1} parent=39 // pred_check_branch
          %4210 = sbr.rel (%p4208) target = $region44
        $region43: #{tpu_custom_call.1} parent=39 // pred_region
          %s4211 = sand.u32 %s94, 1
          %s4212 = scalar_lea.sflag [#allocation3], %s4211
          %s4213 = sand.u32 %s94, 1
          %s4214 = smul.addr %s4213, 256
          %s4215 = scalar_lea.vmem [#allocation2], %s4214
          %4217 = dma.done %s4212, 4096
        $region44: #{tpu_custom_call.1} parent=39 // pred_fallthru
          _
      $region40: #{tpu_custom_call.1} parent=5 // pred_fallthru
        _
    $region6: #{tpu_custom_call.1} parent=1 // loop_footer
      %s16 = sadd.s32 1, %s12
    $region7: #{tpu_custom_call.1} parent=1 // loop_footer_branch
      %11 = sbr.rel target = $region3
    $region8: #{tpu_custom_call.1} parent=1 // loop_exit
      _
    %4218 = vsyncpa [#allocation3], 1
    %s4219 = scalar_lea.sflag [#allocation3], 1
    %4220 = vsyncpa %s4219, 1

</llo_original>
